<compile_context>
chip_gen: v7x
topology: tpu7x:2x2x1
jax: 0.10.0
libtpu: 0.0.40
codegen_flags: <defaults>
</compile_context>

<pallas_src>
import functools
import math

import jax
import jax.numpy as jnp
from jax.experimental import pallas as pl
from jax.experimental.pallas import tpu as pltpu


def encoder_layer_kernel(x_ref, wqkv_ref, bqkv_ref, wo_ref, bo_ref, o_ref,
                         q_sc, k_sc, v_sc, acc_sc, m_sc, l_sc, *,
                         num_heads, head_dim, kv_tile, eps, exp_dtype):
    """One (batch, kv_tile) grid step.

    x_ref:    (L, D)   per-batch input block (resident across the kv axis).
    wqkv_ref: (D, 3D)  fused, pre-transposed, scale-folded [Wq.T*s | Wk.T | Wv.T].
    bqkv_ref: (1, 3D)  fused bias (f32, scale folded into the q slice).
    wo_ref:   (D, D)   pre-transposed out-projection weight.
    bo_ref:   (1, D)   out-projection bias (f32).
    o_ref:    (L, D)   per-batch output block (written at the last kv step).
    scratch:  q_sc (H,L,dh) cdt, k_sc/v_sc (num_kv,H,tk,dh) cdt,
              acc_sc (H,L,dh) f32, m_sc/l_sc (H,L,1) f32.
    """
    H, dh, tk = num_heads, head_dim, kv_tile
    L, D = x_ref.shape
    cdt = wqkv_ref.dtype                     # MXU operand dtype (bf16 or f32)
    kv = pl.program_id(1)

    # ---- once per batch: fused QKV projection + head split into VMEM scratch ----
    @pl.when(kv == 0)
    def _project_and_init():
        x = x_ref[...]                                                    # (L, D) f32
        qkv = jnp.dot(x.astype(cdt), wqkv_ref[...],
                      preferred_element_type=jnp.float32) + bqkv_ref[...]  # (L, 3D) f32
        q = qkv[:, :D]
        k = qkv[:, D:2 * D]
        v = qkv[:, 2 * D:]
        # head-batched layouts; this relayout happens once per batch, not per kv step
        q_sc[...] = q.reshape(L, H, dh).transpose(1, 0, 2).astype(cdt)          # (H, L, dh)
        k_sc[...] = k.reshape(L // tk, tk, H, dh).transpose(0, 2, 1, 3).astype(cdt)
        v_sc[...] = v.reshape(L // tk, tk, H, dh).transpose(0, 2, 1, 3).astype(cdt)
        m_sc[...] = jnp.full_like(m_sc, -jnp.inf)
        l_sc[...] = jnp.zeros_like(l_sc)
        acc_sc[...] = jnp.zeros_like(acc_sc)

    # ---- flash step over the current KV tile: scores are (H, L, tk), never (H, L, L) ----
    qh = q_sc[...]                           # (H, L, dh)  cdt
    kt = k_sc[kv]                            # (H, tk, dh) cdt
    vt = v_sc[kv]                            # (H, tk, dh) cdt

    s = jnp.einsum('hqd,hkd->hqk', qh, kt,
                   preferred_element_type=jnp.float32)                    # (H, L, tk) f32
    m_prev = m_sc[...]                                                    # (H, L, 1)
    m_new = jnp.maximum(m_prev, jnp.max(s, axis=-1, keepdims=True))
    alpha = jnp.exp(m_prev - m_new)                                       # f32
    p = jnp.exp((s - m_new).astype(exp_dtype))     # bf16 exp on v6e/v7x, f32 on v5e
    l_sc[...] = alpha * l_sc[...] + jnp.sum(p.astype(jnp.float32), axis=-1, keepdims=True)
    acc_sc[...] = alpha * acc_sc[...] + jnp.einsum(
        'hqk,hkd->hqd', p.astype(cdt), vt, preferred_element_type=jnp.float32)
    m_sc[...] = m_new

    # ---- once per batch: softmax normalize, out-proj, residual, InstanceNorm, ReLU ----
    @pl.when(kv == pl.num_programs(1) - 1)
    def _finalize():
        ctx = acc_sc[...] / l_sc[...]                      # exact divide, off the hot loop
        attn = ctx.transpose(1, 0, 2).reshape(L, D)        # heads -> feature lanes
        attn = jnp.dot(attn.astype(cdt), wo_ref[...],
                       preferred_element_type=jnp.float32) + bo_ref[...]
        y = x_ref[...] + attn                              # residual
        mean = jnp.mean(y, axis=0, keepdims=True)          # InstanceNorm over seq, per channel
        var = jnp.mean((y - mean) ** 2, axis=0, keepdims=True)   # biased variance
        y = (y - mean) * jax.lax.rsqrt(var + eps)
        o_ref[...] = jnp.maximum(y, 0.0)


def prepare_params(params, *, num_heads, compute_dtype=jnp.bfloat16):
    """Build fused / pre-transposed / scale-folded weights ONCE (cache and reuse)."""
    wq, bq, wk, bk, wv, bv, wo, bo = params
    D = wq.shape[0]
    assert D % num_heads == 0
    scale = 1.0 / math.sqrt(D // num_heads)
    wqkv_t = jnp.concatenate([wq * scale, wk, wv], axis=0).T.astype(compute_dtype)  # (D, 3D)
    bqkv = jnp.concatenate([bq * scale, bk, bv]).reshape(1, 3 * D).astype(jnp.float32)
    wo_t = wo.T.astype(compute_dtype)                                                # (D, D)
    bo2 = bo.reshape(1, D).astype(jnp.float32)
    return wqkv_t, bqkv, wo_t, bo2


def transformer_encoder_layer(src, prepared, *, num_heads, eps=1e-5, kv_block=256,
                              exp_dtype=jnp.float32, single_buffer_weights=True):
    """src: (L, B, D) float32 (PyTorch seq-first layout). Returns (L, B, D).

    prepared: output of prepare_params (fused weights; dtype = MXU operand dtype).
    exp_dtype: dtype of the softmax exp (jnp.bfloat16 recommended on v6e/v7x, f32 on v5e).
    """
    L, B, D = src.shape
    H = num_heads
    assert D % H == 0
    dh = D // H
    wqkv_t, bqkv, wo_t, bo2 = prepared
    cdt = wqkv_t.dtype
    itemsize_w = jnp.dtype(cdt).itemsize

    # KV tile size (flash reduction axis); must divide L.
    tk = min(kv_block, L)
    if L % tk:
        tk = math.gcd(L, tk)
    num_kv = L // tk

    # One wrapper-side HBM transpose to a batch-leading layout (lane-dense per-batch blocks).
    xb = jnp.transpose(src, (1, 0, 2))                     # (B, L, D)

    kernel = functools.partial(encoder_layer_kernel, num_heads=H, head_dim=dh,
                               kv_tile=tk, eps=eps, exp_dtype=exp_dtype)

    flops = B * (2 * L * D * 3 * D          # fused QKV projection
                 + 4 * H * L * L * dh       # QK^T and PV
                 + 2 * L * D * D)           # out projection
    transcendentals = B * H * L * (L + num_kv) + B * D
    bytes_accessed = (2 * B * L * D * 4                       # x in + out (f32)
                      + itemsize_w * 4 * D * D + 4 * 4 * D)   # weights + biases

    # vmem_limit sized to the actual working set (with ~2x headroom), capped for v7x.
    vmem_bytes = (2 * 2 * L * D * 4                # x + out blocks (double-buffered)
                  + itemsize_w * 4 * D * D + 16 * D  # weights (single-buffered) + biases
                  + 3 * L * D * itemsize_w         # q/k/v scratch
                  + L * D * 4                      # acc scratch
                  + 2 * H * L * 128 * 4            # m, l scratch (lane-padded)
                  + L * 3 * D * 4                  # qkv projection temp
                  + 3 * H * L * tk * 4)            # score / prob temps
    vmem_limit = max(16 << 20, min(2 * vmem_bytes, 64 << 20))

    def run(single_buffer):
        if single_buffer:
            # Grid-invariant blocks gain nothing from double buffering: halve their VMEM.
            def wspec(shape):
                return pl.BlockSpec(shape, lambda b, k: (0, 0),
                                    pipeline_mode=pl.Buffered(1))
        else:
            def wspec(shape):
                return pl.BlockSpec(shape, lambda b, k: (0, 0))

        return pl.pallas_call(
            kernel,
            out_shape=jax.ShapeDtypeStruct((B, L, D), jnp.float32),
            grid_spec=pltpu.PrefetchScalarGridSpec(
                num_scalar_prefetch=0,
                grid=(B, num_kv),
                in_specs=[
                    pl.BlockSpec((None, L, D), lambda b, k: (b, 0, 0)),   # x (per batch)
                    wspec((D, 3 * D)),                                    # fused Wqkv^T
                    wspec((1, 3 * D)),                                    # fused bias
                    wspec((D, D)),                                        # Wo^T
                    wspec((1, D)),                                        # bo
                ],
                out_specs=pl.BlockSpec((None, L, D), lambda b, k: (b, 0, 0)),
                scratch_shapes=[
                    pltpu.VMEM((H, L, dh), cdt),                # q (head-batched)
                    pltpu.VMEM((num_kv, H, tk, dh), cdt),       # k tiles
                    pltpu.VMEM((num_kv, H, tk, dh), cdt),       # v tiles
                    pltpu.VMEM((H, L, dh), jnp.float32),        # PV accumulator
                    pltpu.VMEM((H, L, 1), jnp.float32),         # running max
                    pltpu.VMEM((H, L, 1), jnp.float32),         # running sum
                ],
            ),
            compiler_params=pltpu.CompilerParams(
                dimension_semantics=("parallel", "arbitrary"),   # batch across TCs on v7x
                vmem_limit_bytes=vmem_limit),
            cost_estimate=pl.CostEstimate(flops=flops,
                                          transcendentals=transcendentals,
                                          bytes_accessed=bytes_accessed),
        )(xb, wqkv_t, bqkv, wo_t, bo2)

    if single_buffer_weights:
        try:
            out = run(True)
        except Exception:
            # Fallback if pipeline_mode=pl.Buffered(1) is unsupported by this jax build.
            out = run(False)
    else:
        out = run(False)

    return jnp.transpose(out, (1, 0, 2))                   # back to PyTorch (L, B, D)


def reference(src, params, *, num_heads, eps=1e-5):
    """Pure-JAX reference mirroring the PyTorch forward (query_pos=None)."""
    L, B, D = src.shape
    dh = D // num_heads
    wq, bq, wk, bk, wv, bv, wo, bo = params
    x = jnp.transpose(src, (1, 0, 2))             # (B, L, D)
    q = x @ wq.T + bq
    k = x @ wk.T + bk
    v = x @ wv.T + bv
    qh = q.reshape(B, L, num_heads, dh).transpose(0, 2, 1, 3) / math.sqrt(dh)
    kh = k.reshape(B, L, num_heads, dh).transpose(0, 2, 1, 3)
    vh = v.reshape(B, L, num_heads, dh).transpose(0, 2, 1, 3)
    s = qh @ kh.transpose(0, 1, 3, 2)
    p = jax.nn.softmax(s, axis=-1)
    o = (p @ vh).transpose(0, 2, 1, 3).reshape(B, L, D)
    o = o @ wo.T + bo
    y = x + o
    mean = jnp.mean(y, axis=1, keepdims=True)
    var = jnp.mean((y - mean) ** 2, axis=1, keepdims=True)
    y = (y - mean) / jnp.sqrt(var + eps)
    y = jnp.maximum(y, 0.0)
    return jnp.transpose(y, (1, 0, 2))


if __name__ == "__main__":
    L, B, D, H = 8, 2, 32, 4   # seq, batch, d_model, heads (correctness-only toy shape)

    key = jax.random.PRNGKey(0)
    keys = jax.random.split(key, 10)
    scale = 1.0 / math.sqrt(D)
    params = (
        jax.random.normal(keys[0], (D, D), jnp.float32) * scale,   # Wq
        jax.random.normal(keys[1], (D,), jnp.float32) * 0.02,      # bq
        jax.random.normal(keys[2], (D, D), jnp.float32) * scale,   # Wk
        jax.random.normal(keys[3], (D,), jnp.float32) * 0.02,      # bk
        jax.random.normal(keys[4], (D, D), jnp.float32) * scale,   # Wv
        jax.random.normal(keys[5], (D,), jnp.float32) * 0.02,      # bv
        jax.random.normal(keys[6], (D, D), jnp.float32) * scale,   # Wo
        jax.random.normal(keys[7], (D,), jnp.float32) * 0.02,      # bo
    )
    src = jax.random.normal(keys[8], (L, B, D), jnp.float32)       # PyTorch (L, B, D)

    ref = reference(src, params, num_heads=H)

    # Exact-parity path: f32 MXU operands, f32 softmax exp, exact softmax denominator.
    prep_f32 = prepare_params(params, num_heads=H, compute_dtype=jnp.float32)
    out = transformer_encoder_layer(src, prep_f32, num_heads=H)
    out = jax.block_until_ready(out)
    assert out.shape == (L, B, D)
    assert jnp.allclose(out, ref, atol=1e-2, rtol=1e-2), "f32 kernel mismatch vs reference"

    # Fast path: bf16 MXU operands (all chips) + bf16 softmax exp (v6e/v7x recommendation);
    # accumulation, softmax stats and InstanceNorm math stay f32.
    prep_bf16 = prepare_params(params, num_heads=H)                # compute_dtype=bf16
    out_bf16 = transformer_encoder_layer(src, prep_bf16, num_heads=H,
                                         exp_dtype=jnp.bfloat16)
    out_bf16 = jax.block_until_ready(out_bf16)
    assert jnp.allclose(out_bf16, ref, atol=5e-2, rtol=5e-2), "bf16 kernel mismatch vs reference"

    print("KERNEL_OK")
</pallas_src>

<mosaic_0001>
module attributes {stable_mosaic.version = 11 : i64} {
  func.func @encoder_layer_kernel(%arg0: i32, %arg1: i32, %arg2: memref<1x8x32xf32, #tpu.memory_space<vmem>>, %arg3: memref<32x96xf32, #tpu.memory_space<vmem>>, %arg4: memref<1x96xf32, #tpu.memory_space<vmem>>, %arg5: memref<32x32xf32, #tpu.memory_space<vmem>>, %arg6: memref<1x32xf32, #tpu.memory_space<vmem>>, %arg7: memref<1x8x32xf32, #tpu.memory_space<vmem>>, %arg8: memref<4x8x8xf32, #tpu.memory_space<vmem>>, %arg9: memref<1x4x8x8xf32, #tpu.memory_space<vmem>>, %arg10: memref<1x4x8x8xf32, #tpu.memory_space<vmem>>, %arg11: memref<4x8x8xf32, #tpu.memory_space<vmem>>, %arg12: memref<4x8x1xf32, #tpu.memory_space<vmem>>, %arg13: memref<4x8x1xf32, #tpu.memory_space<vmem>>) attributes {dimension_semantics = [#tpu.dimension_semantics<parallel>, #tpu.dimension_semantics<arbitrary>], iteration_bounds = array<i64: 2, 1>, scalar_prefetch = 0 : i64, scratch_operands = 6 : i64, tpu.core_type = #tpu.core_type<tc>, window_params = [{transform_indices = @transform_0, window_bounds = array<i64: 1, 8, 32>}, {pipeline_mode = #tpu.pipeline_mode<synchronous>, transform_indices = @transform_1, window_bounds = array<i64: 32, 96>}, {pipeline_mode = #tpu.pipeline_mode<synchronous>, transform_indices = @transform_2, window_bounds = array<i64: 1, 96>}, {pipeline_mode = #tpu.pipeline_mode<synchronous>, transform_indices = @transform_3, window_bounds = array<i64: 32, 32>}, {pipeline_mode = #tpu.pipeline_mode<synchronous>, transform_indices = @transform_4, window_bounds = array<i64: 1, 32>}, {transform_indices = @transform_5, window_bounds = array<i64: 1, 8, 32>}]} {
    %c0_i32 = arith.constant 0 : i32
    %0 = arith.cmpi eq, %arg1, %c0_i32 : i32
    %1 = arith.extui %0 : i1 to i32
    %c0_i32_0 = arith.constant 0 : i32
    %2 = arith.cmpi ne, %1, %c0_i32_0 : i32
    scf.if %2 {
      %c0_32 = arith.constant 0 : index
      %c0_33 = arith.constant 0 : index
      %c0_34 = arith.constant 0 : index
      %36 = vector.load %arg2[%c0_32, %c0_33, %c0_34] : memref<1x8x32xf32, #tpu.memory_space<vmem>>, vector<1x8x32xf32>
      %37 = vector.shape_cast %36 : vector<1x8x32xf32> to vector<8x32xf32>
      %c0_35 = arith.constant 0 : index
      %c0_36 = arith.constant 0 : index
      %38 = vector.load %arg3[%c0_35, %c0_36] : memref<32x96xf32, #tpu.memory_space<vmem>>, vector<32x96xf32>
      %cst_37 = arith.constant dense<0.000000e+00> : vector<8x96xf32>
      %39 = tpu.matmul %37, %38, %cst_37 {dimension_numbers = #tpu.dot_dimension_numbers<[1], [0], [0], [1], [0, 0, 1, 1], [], []>} : vector<8x32xf32>, vector<32x96xf32>, vector<8x96xf32> -> vector<8x96xf32>
      %c0_38 = arith.constant 0 : index
      %c0_39 = arith.constant 0 : index
      %40 = vector.load %arg4[%c0_38, %c0_39] : memref<1x96xf32, #tpu.memory_space<vmem>>, vector<1x96xf32>
      %41 = vector.broadcast %40 : vector<1x96xf32> to vector<8x96xf32>
      %42 = arith.addf %39, %41 : vector<8x96xf32>
      %43 = vector.extract_strided_slice %42 {offsets = [0, 0], sizes = [8, 32], strides = [1, 1]} : vector<8x96xf32> to vector<8x32xf32>
      %44 = vector.extract_strided_slice %42 {offsets = [0, 32], sizes = [8, 32], strides = [1, 1]} : vector<8x96xf32> to vector<8x32xf32>
      %45 = vector.extract_strided_slice %42 {offsets = [0, 64], sizes = [8, 32], strides = [1, 1]} : vector<8x96xf32> to vector<8x32xf32>
      %46 = vector.shape_cast %43 : vector<8x32xf32> to vector<8x4x8xf32>
      %47 = tpu.transpose %46, [1, 0, 2] : vector<8x4x8xf32> -> vector<4x8x8xf32>
      %c0_40 = arith.constant 0 : index
      %c0_41 = arith.constant 0 : index
      %c0_42 = arith.constant 0 : index
      %48 = vector.load %arg8[%c0_40, %c0_41, %c0_42] : memref<4x8x8xf32, #tpu.memory_space<vmem>>, vector<4x8x8xf32>
      tpu.vector_store %arg8[%c0_40, %c0_41, %c0_42], %47 {strides = array<i32>} : memref<4x8x8xf32, #tpu.memory_space<vmem>>, vector<4x8x8xf32>,
      %49 = vector.shape_cast %44 : vector<8x32xf32> to vector<1x8x4x8xf32>
      %50 = tpu.transpose %49, [0, 2, 1, 3] : vector<1x8x4x8xf32> -> vector<1x4x8x8xf32>
      %c0_43 = arith.constant 0 : index
      %c0_44 = arith.constant 0 : index
      %c0_45 = arith.constant 0 : index
      %c0_46 = arith.constant 0 : index
      %51 = vector.load %arg9[%c0_43, %c0_44, %c0_45, %c0_46] : memref<1x4x8x8xf32, #tpu.memory_space<vmem>>, vector<1x4x8x8xf32>
      tpu.vector_store %arg9[%c0_43, %c0_44, %c0_45, %c0_46], %50 {strides = array<i32>} : memref<1x4x8x8xf32, #tpu.memory_space<vmem>>, vector<1x4x8x8xf32>,
      %52 = vector.shape_cast %45 : vector<8x32xf32> to vector<1x8x4x8xf32>
      %53 = tpu.transpose %52, [0, 2, 1, 3] : vector<1x8x4x8xf32> -> vector<1x4x8x8xf32>
      %c0_47 = arith.constant 0 : index
      %c0_48 = arith.constant 0 : index
      %c0_49 = arith.constant 0 : index
      %c0_50 = arith.constant 0 : index
      %54 = vector.load %arg10[%c0_47, %c0_48, %c0_49, %c0_50] : memref<1x4x8x8xf32, #tpu.memory_space<vmem>>, vector<1x4x8x8xf32>
      tpu.vector_store %arg10[%c0_47, %c0_48, %c0_49, %c0_50], %53 {strides = array<i32>} : memref<1x4x8x8xf32, #tpu.memory_space<vmem>>, vector<1x4x8x8xf32>,
      %cst_51 = arith.constant 0xFF800000 : f32
      %55 = vector.broadcast %cst_51 : f32 to vector<4x8x1xf32>
      %c0_52 = arith.constant 0 : index
      %c0_53 = arith.constant 0 : index
      %c0_54 = arith.constant 0 : index
      %56 = vector.load %arg12[%c0_52, %c0_53, %c0_54] : memref<4x8x1xf32, #tpu.memory_space<vmem>>, vector<4x8x1xf32>
      tpu.vector_store %arg12[%c0_52, %c0_53, %c0_54], %55 {strides = array<i32>} : memref<4x8x1xf32, #tpu.memory_space<vmem>>, vector<4x8x1xf32>,
      %cst_55 = arith.constant 0.000000e+00 : f32
      %57 = vector.broadcast %cst_55 : f32 to vector<4x8x1xf32>
      %c0_56 = arith.constant 0 : index
      %c0_57 = arith.constant 0 : index
      %c0_58 = arith.constant 0 : index
      %58 = vector.load %arg13[%c0_56, %c0_57, %c0_58] : memref<4x8x1xf32, #tpu.memory_space<vmem>>, vector<4x8x1xf32>
      tpu.vector_store %arg13[%c0_56, %c0_57, %c0_58], %57 {strides = array<i32>} : memref<4x8x1xf32, #tpu.memory_space<vmem>>, vector<4x8x1xf32>,
      %cst_59 = arith.constant 0.000000e+00 : f32
      %59 = vector.broadcast %cst_59 : f32 to vector<4x8x8xf32>
      %c0_60 = arith.constant 0 : index
      %c0_61 = arith.constant 0 : index
      %c0_62 = arith.constant 0 : index
      %60 = vector.load %arg11[%c0_60, %c0_61, %c0_62] : memref<4x8x8xf32, #tpu.memory_space<vmem>>, vector<4x8x8xf32>
      tpu.vector_store %arg11[%c0_60, %c0_61, %c0_62], %59 {strides = array<i32>} : memref<4x8x8xf32, #tpu.memory_space<vmem>>, vector<4x8x8xf32>,
    } else {
    }
    %c0 = arith.constant 0 : index
    %c0_1 = arith.constant 0 : index
    %c0_2 = arith.constant 0 : index
    %3 = vector.load %arg8[%c0, %c0_1, %c0_2] : memref<4x8x8xf32, #tpu.memory_space<vmem>>, vector<4x8x8xf32>
    %4 = arith.index_cast %arg1 : i32 to index
    %c0_3 = arith.constant 0 : index
    %c0_4 = arith.constant 0 : index
    %c0_5 = arith.constant 0 : index
    %5 = vector.load %arg9[%4, %c0_3, %c0_4, %c0_5] : memref<1x4x8x8xf32, #tpu.memory_space<vmem>>, vector<1x4x8x8xf32>
    %6 = vector.shape_cast %5 : vector<1x4x8x8xf32> to vector<4x8x8xf32>
    %7 = arith.index_cast %arg1 : i32 to index
    %c0_6 = arith.constant 0 : index
    %c0_7 = arith.constant 0 : index
    %c0_8 = arith.constant 0 : index
    %8 = vector.load %arg10[%7, %c0_6, %c0_7, %c0_8] : memref<1x4x8x8xf32, #tpu.memory_space<vmem>>, vector<1x4x8x8xf32>
    %9 = vector.shape_cast %8 : vector<1x4x8x8xf32> to vector<4x8x8xf32>
    "tpu.trace_start"() <{level = 10 : i32, message = "hqd,hkd->hqk"}> : () -> ()
    %cst = arith.constant dense<0.000000e+00> : vector<4x8x8xf32>
    %10 = tpu.matmul %3, %6, %cst {dimension_numbers = #tpu.dot_dimension_numbers<[2], [2], [1], [1], [0, 0, 0, 1, 1, 1], [0], [0]>} : vector<4x8x8xf32>, vector<4x8x8xf32>, vector<4x8x8xf32> -> vector<4x8x8xf32>
    "tpu.trace_stop"() : () -> ()
    %c0_9 = arith.constant 0 : index
    %c0_10 = arith.constant 0 : index
    %c0_11 = arith.constant 0 : index
    %11 = vector.load %arg12[%c0_9, %c0_10, %c0_11] : memref<4x8x1xf32, #tpu.memory_space<vmem>>, vector<4x8x1xf32>
    %cst_12 = arith.constant dense<0xFF800000> : vector<4x8xf32>
    %12 = vector.multi_reduction <maximumf>, %10, %cst_12 [2] : vector<4x8x8xf32> to vector<4x8xf32>
    %13 = vector.shape_cast %12 : vector<4x8xf32> to vector<4x8x1xf32>
    %14 = arith.maximumf %11, %13 : vector<4x8x1xf32>
    %15 = arith.subf %11, %14 : vector<4x8x1xf32>
    %16 = math.exp %15 : vector<4x8x1xf32>
    %17 = vector.broadcast %14 : vector<4x8x1xf32> to vector<4x8x8xf32>
    %18 = arith.subf %10, %17 : vector<4x8x8xf32>
    %19 = math.exp %18 : vector<4x8x8xf32>
    %c0_13 = arith.constant 0 : index
    %c0_14 = arith.constant 0 : index
    %c0_15 = arith.constant 0 : index
    %20 = vector.load %arg13[%c0_13, %c0_14, %c0_15] : memref<4x8x1xf32, #tpu.memory_space<vmem>>, vector<4x8x1xf32>
    %21 = arith.mulf %16, %20 : vector<4x8x1xf32>
    %cst_16 = arith.constant dense<0.000000e+00> : vector<4x8xf32>
    %22 = vector.multi_reduction <add>, %19, %cst_16 [2] : vector<4x8x8xf32> to vector<4x8xf32>
    %23 = vector.shape_cast %22 : vector<4x8xf32> to vector<4x8x1xf32>
    %24 = arith.addf %21, %23 : vector<4x8x1xf32>
    %c0_17 = arith.constant 0 : index
    %c0_18 = arith.constant 0 : index
    %c0_19 = arith.constant 0 : index
    %25 = vector.load %arg13[%c0_17, %c0_18, %c0_19] : memref<4x8x1xf32, #tpu.memory_space<vmem>>, vector<4x8x1xf32>
    tpu.vector_store %arg13[%c0_17, %c0_18, %c0_19], %24 {strides = array<i32>} : memref<4x8x1xf32, #tpu.memory_space<vmem>>, vector<4x8x1xf32>,
    %c0_20 = arith.constant 0 : index
    %c0_21 = arith.constant 0 : index
    %c0_22 = arith.constant 0 : index
    %26 = vector.load %arg11[%c0_20, %c0_21, %c0_22] : memref<4x8x8xf32, #tpu.memory_space<vmem>>, vector<4x8x8xf32>
    %27 = vector.broadcast %16 : vector<4x8x1xf32> to vector<4x8x8xf32>
    %28 = arith.mulf %27, %26 : vector<4x8x8xf32>
    "tpu.trace_start"() <{level = 10 : i32, message = "hqk,hkd->hqd"}> : () -> ()
    %cst_23 = arith.constant dense<0.000000e+00> : vector<4x8x8xf32>
    %29 = tpu.matmul %19, %9, %cst_23 {dimension_numbers = #tpu.dot_dimension_numbers<[2], [1], [1], [2], [0, 0, 0, 1, 1, 2], [0], [0]>} : vector<4x8x8xf32>, vector<4x8x8xf32>, vector<4x8x8xf32> -> vector<4x8x8xf32>
    "tpu.trace_stop"() : () -> ()
    %30 = arith.addf %28, %29 : vector<4x8x8xf32>
    %c0_24 = arith.constant 0 : index
    %c0_25 = arith.constant 0 : index
    %c0_26 = arith.constant 0 : index
    %31 = vector.load %arg11[%c0_24, %c0_25, %c0_26] : memref<4x8x8xf32, #tpu.memory_space<vmem>>, vector<4x8x8xf32>
    tpu.vector_store %arg11[%c0_24, %c0_25, %c0_26], %30 {strides = array<i32>} : memref<4x8x8xf32, #tpu.memory_space<vmem>>, vector<4x8x8xf32>,
    %c0_27 = arith.constant 0 : index
    %c0_28 = arith.constant 0 : index
    %c0_29 = arith.constant 0 : index
    %32 = vector.load %arg12[%c0_27, %c0_28, %c0_29] : memref<4x8x1xf32, #tpu.memory_space<vmem>>, vector<4x8x1xf32>
    tpu.vector_store %arg12[%c0_27, %c0_28, %c0_29], %14 {strides = array<i32>} : memref<4x8x1xf32, #tpu.memory_space<vmem>>, vector<4x8x1xf32>,
    %c0_i32_30 = arith.constant 0 : i32
    %33 = arith.cmpi eq, %arg1, %c0_i32_30 : i32
    %34 = arith.extui %33 : i1 to i32
    %c0_i32_31 = arith.constant 0 : i32
    %35 = arith.cmpi ne, %34, %c0_i32_31 : i32
    scf.if %35 {
      %c0_32 = arith.constant 0 : index
      %c0_33 = arith.constant 0 : index
      %c0_34 = arith.constant 0 : index
      %36 = vector.load %arg11[%c0_32, %c0_33, %c0_34] : memref<4x8x8xf32, #tpu.memory_space<vmem>>, vector<4x8x8xf32>
      %c0_35 = arith.constant 0 : index
      %c0_36 = arith.constant 0 : index
      %c0_37 = arith.constant 0 : index
      %37 = vector.load %arg13[%c0_35, %c0_36, %c0_37] : memref<4x8x1xf32, #tpu.memory_space<vmem>>, vector<4x8x1xf32>
      %38 = vector.broadcast %37 : vector<4x8x1xf32> to vector<4x8x8xf32>
      %39 = arith.divf %36, %38 : vector<4x8x8xf32>
      %40 = tpu.transpose %39, [1, 0, 2] : vector<4x8x8xf32> -> vector<8x4x8xf32>
      %41 = vector.shape_cast %40 : vector<8x4x8xf32> to vector<8x32xf32>
      %c0_38 = arith.constant 0 : index
      %c0_39 = arith.constant 0 : index
      %42 = vector.load %arg5[%c0_38, %c0_39] : memref<32x32xf32, #tpu.memory_space<vmem>>, vector<32x32xf32>
      %cst_40 = arith.constant dense<0.000000e+00> : vector<8x32xf32>
      %43 = tpu.matmul %41, %42, %cst_40 {dimension_numbers = #tpu.dot_dimension_numbers<[1], [0], [0], [1], [0, 0, 1, 1], [], []>} : vector<8x32xf32>, vector<32x32xf32>, vector<8x32xf32> -> vector<8x32xf32>
      %c0_41 = arith.constant 0 : index
      %c0_42 = arith.constant 0 : index
      %44 = vector.load %arg6[%c0_41, %c0_42] : memref<1x32xf32, #tpu.memory_space<vmem>>, vector<1x32xf32>
      %45 = vector.broadcast %44 : vector<1x32xf32> to vector<8x32xf32>
      %46 = arith.addf %43, %45 : vector<8x32xf32>
      %c0_43 = arith.constant 0 : index
      %c0_44 = arith.constant 0 : index
      %c0_45 = arith.constant 0 : index
      %47 = vector.load %arg2[%c0_43, %c0_44, %c0_45] : memref<1x8x32xf32, #tpu.memory_space<vmem>>, vector<1x8x32xf32>
      %48 = vector.shape_cast %47 : vector<1x8x32xf32> to vector<8x32xf32>
      %49 = arith.addf %48, %46 : vector<8x32xf32>
      %cst_46 = arith.constant dense<0.000000e+00> : vector<32xf32>
      %50 = vector.multi_reduction <add>, %49, %cst_46 [0] : vector<8x32xf32> to vector<32xf32>
      %51 = vector.shape_cast %50 : vector<32xf32> to vector<1x32xf32>
      %cst_47 = arith.constant 8.000000e+00 : f32
      %52 = vector.broadcast %cst_47 : f32 to vector<1x32xf32>
      %53 = arith.divf %51, %52 : vector<1x32xf32>
      %54 = vector.broadcast %53 : vector<1x32xf32> to vector<8x32xf32>
      %55 = arith.subf %49, %54 : vector<8x32xf32>
      %56 = arith.mulf %55, %55 : vector<8x32xf32>
      %cst_48 = arith.constant dense<0.000000e+00> : vector<32xf32>
      %57 = vector.multi_reduction <add>, %56, %cst_48 [0] : vector<8x32xf32> to vector<32xf32>
      %58 = vector.shape_cast %57 : vector<32xf32> to vector<1x32xf32>
      %cst_49 = arith.constant 8.000000e+00 : f32
      %59 = vector.broadcast %cst_49 : f32 to vector<1x32xf32>
      %60 = arith.divf %58, %59 : vector<1x32xf32>
      %61 = vector.broadcast %53 : vector<1x32xf32> to vector<8x32xf32>
      %62 = arith.subf %49, %61 : vector<8x32xf32>
      %cst_50 = arith.constant 9.99999974E-6 : f32
      %63 = vector.broadcast %cst_50 : f32 to vector<1x32xf32>
      %64 = arith.addf %60, %63 : vector<1x32xf32>
      %65 = math.rsqrt %64 : vector<1x32xf32>
      %66 = vector.broadcast %65 : vector<1x32xf32> to vector<8x32xf32>
      %67 = arith.mulf %62, %66 : vector<8x32xf32>
      %cst_51 = arith.constant 0.000000e+00 : f32
      %68 = vector.broadcast %cst_51 : f32 to vector<8x32xf32>
      %69 = arith.maximumf %67, %68 : vector<8x32xf32>
      %c0_52 = arith.constant 0 : index
      %c0_53 = arith.constant 0 : index
      %c0_54 = arith.constant 0 : index
      %70 = vector.load %arg7[%c0_52, %c0_53, %c0_54] : memref<1x8x32xf32, #tpu.memory_space<vmem>>, vector<1x8x32xf32>
      %71 = vector.shape_cast %70 : vector<1x8x32xf32> to vector<8x32xf32>
      %72 = vector.shape_cast %69 : vector<8x32xf32> to vector<1x8x32xf32>
      tpu.vector_store %arg7[%c0_52, %c0_53, %c0_54], %72 {strides = array<i32>} : memref<1x8x32xf32, #tpu.memory_space<vmem>>, vector<1x8x32xf32>,
    } else {
    }
    return
  }
  func.func @transform_0(%arg0: i32, %arg1: i32) -> (i32, i32, i32) {
    %c0_i32 = arith.constant 0 : i32
    %c0_i32_0 = arith.constant 0 : i32
    %c0_i32_1 = arith.constant 0 : i32
    return %arg0, %c0_i32, %c0_i32_0 : i32, i32, i32
  }
  func.func @transform_1(%arg0: i32, %arg1: i32) -> (i32, i32) {
    %c0_i32 = arith.constant 0 : i32
    %c0_i32_0 = arith.constant 0 : i32
    %c0_i32_1 = arith.constant 0 : i32
    return %c0_i32, %c0_i32_0 : i32, i32
  }
  func.func @transform_2(%arg0: i32, %arg1: i32) -> (i32, i32) {
    %c0_i32 = arith.constant 0 : i32
    %c0_i32_0 = arith.constant 0 : i32
    %c0_i32_1 = arith.constant 0 : i32
    return %c0_i32, %c0_i32_0 : i32, i32
  }
  func.func @transform_3(%arg0: i32, %arg1: i32) -> (i32, i32) {
    %c0_i32 = arith.constant 0 : i32
    %c0_i32_0 = arith.constant 0 : i32
    %c0_i32_1 = arith.constant 0 : i32
    return %c0_i32, %c0_i32_0 : i32, i32
  }
  func.func @transform_4(%arg0: i32, %arg1: i32) -> (i32, i32) {
    %c0_i32 = arith.constant 0 : i32
    %c0_i32_0 = arith.constant 0 : i32
    %c0_i32_1 = arith.constant 0 : i32
    return %c0_i32, %c0_i32_0 : i32, i32
  }
  func.func @transform_5(%arg0: i32, %arg1: i32) -> (i32, i32, i32) {
    %c0_i32 = arith.constant 0 : i32
    %c0_i32_0 = arith.constant 0 : i32
    %c0_i32_1 = arith.constant 0 : i32
    return %arg0, %c0_i32, %c0_i32_0 : i32, i32, i32
  }
}

module attributes {stable_mosaic.version = 11 : i64} {
  func.func @encoder_layer_kernel(%arg0: i32, %arg1: i32, %arg2: memref<1x8x32xf32, #tpu.memory_space<vmem>>, %arg3: memref<32x96xf32, #tpu.memory_space<vmem>>, %arg4: memref<1x96xf32, #tpu.memory_space<vmem>>, %arg5: memref<32x32xf32, #tpu.memory_space<vmem>>, %arg6: memref<1x32xf32, #tpu.memory_space<vmem>>, %arg7: memref<1x8x32xf32, #tpu.memory_space<vmem>>, %arg8: memref<4x8x8xf32, #tpu.memory_space<vmem>>, %arg9: memref<1x4x8x8xf32, #tpu.memory_space<vmem>>, %arg10: memref<1x4x8x8xf32, #tpu.memory_space<vmem>>, %arg11: memref<4x8x8xf32, #tpu.memory_space<vmem>>, %arg12: memref<4x8x1xf32, #tpu.memory_space<vmem>>, %arg13: memref<4x8x1xf32, #tpu.memory_space<vmem>>) attributes {dimension_semantics = [#tpu.dimension_semantics<parallel>, #tpu.dimension_semantics<arbitrary>], iteration_bounds = array<i64: 2, 1>, scalar_prefetch = 0 : i64, scratch_operands = 6 : i64, tpu.core_type = #tpu.core_type<tc>, window_params = [{transform_indices = @transform_0, window_bounds = array<i64: 1, 8, 32>}, {pipeline_mode = #tpu.pipeline_mode<synchronous>, transform_indices = @transform_1, window_bounds = array<i64: 32, 96>}, {pipeline_mode = #tpu.pipeline_mode<synchronous>, transform_indices = @transform_2, window_bounds = array<i64: 1, 96>}, {pipeline_mode = #tpu.pipeline_mode<synchronous>, transform_indices = @transform_3, window_bounds = array<i64: 32, 32>}, {pipeline_mode = #tpu.pipeline_mode<synchronous>, transform_indices = @transform_4, window_bounds = array<i64: 1, 32>}, {transform_indices = @transform_5, window_bounds = array<i64: 1, 8, 32>}]} {
    %c0_i32 = arith.constant 0 : i32
    %0 = arith.cmpi eq, %arg1, %c0_i32 : i32
    %1 = arith.extui %0 : i1 to i32
    %c0_i32_0 = arith.constant 0 : i32
    %2 = arith.cmpi ne, %1, %c0_i32_0 : i32
    scf.if %2 {
      %c0_32 = arith.constant 0 : index
      %c0_33 = arith.constant 0 : index
      %c0_34 = arith.constant 0 : index
      %36 = vector.load %arg2[%c0_32, %c0_33, %c0_34] : memref<1x8x32xf32, #tpu.memory_space<vmem>>, vector<1x8x32xf32>
      %37 = vector.shape_cast %36 : vector<1x8x32xf32> to vector<8x32xf32>
      %c0_35 = arith.constant 0 : index
      %c0_36 = arith.constant 0 : index
      %38 = vector.load %arg3[%c0_35, %c0_36] : memref<32x96xf32, #tpu.memory_space<vmem>>, vector<32x96xf32>
      %cst_37 = arith.constant dense<0.000000e+00> : vector<8x96xf32>
      %39 = tpu.matmul %37, %38, %cst_37 {dimension_numbers = #tpu.dot_dimension_numbers<[1], [0], [0], [1], [0, 0, 1, 1], [], []>} : vector<8x32xf32>, vector<32x96xf32>, vector<8x96xf32> -> vector<8x96xf32>
      %c0_38 = arith.constant 0 : index
      %c0_39 = arith.constant 0 : index
      %40 = vector.load %arg4[%c0_38, %c0_39] : memref<1x96xf32, #tpu.memory_space<vmem>>, vector<1x96xf32>
      %41 = vector.broadcast %40 : vector<1x96xf32> to vector<8x96xf32>
      %42 = arith.addf %39, %41 : vector<8x96xf32>
      %43 = vector.extract_strided_slice %42 {offsets = [0, 0], sizes = [8, 32], strides = [1, 1]} : vector<8x96xf32> to vector<8x32xf32>
      %44 = vector.extract_strided_slice %42 {offsets = [0, 32], sizes = [8, 32], strides = [1, 1]} : vector<8x96xf32> to vector<8x32xf32>
      %45 = vector.extract_strided_slice %42 {offsets = [0, 64], sizes = [8, 32], strides = [1, 1]} : vector<8x96xf32> to vector<8x32xf32>
      %46 = vector.shape_cast %43 : vector<8x32xf32> to vector<8x4x8xf32>
      %47 = tpu.transpose %46, [1, 0, 2] : vector<8x4x8xf32> -> vector<4x8x8xf32>
      %c0_40 = arith.constant 0 : index
      %c0_41 = arith.constant 0 : index
      %c0_42 = arith.constant 0 : index
      %48 = vector.load %arg8[%c0_40, %c0_41, %c0_42] : memref<4x8x8xf32, #tpu.memory_space<vmem>>, vector<4x8x8xf32>
      tpu.vector_store %arg8[%c0_40, %c0_41, %c0_42], %47 {strides = array<i32>} : memref<4x8x8xf32, #tpu.memory_space<vmem>>, vector<4x8x8xf32>,
      %49 = vector.shape_cast %44 : vector<8x32xf32> to vector<1x8x4x8xf32>
      %50 = tpu.transpose %49, [0, 2, 1, 3] : vector<1x8x4x8xf32> -> vector<1x4x8x8xf32>
      %c0_43 = arith.constant 0 : index
      %c0_44 = arith.constant 0 : index
      %c0_45 = arith.constant 0 : index
      %c0_46 = arith.constant 0 : index
      %51 = vector.load %arg9[%c0_43, %c0_44, %c0_45, %c0_46] : memref<1x4x8x8xf32, #tpu.memory_space<vmem>>, vector<1x4x8x8xf32>
      tpu.vector_store %arg9[%c0_43, %c0_44, %c0_45, %c0_46], %50 {strides = array<i32>} : memref<1x4x8x8xf32, #tpu.memory_space<vmem>>, vector<1x4x8x8xf32>,
      %52 = vector.shape_cast %45 : vector<8x32xf32> to vector<1x8x4x8xf32>
      %53 = tpu.transpose %52, [0, 2, 1, 3] : vector<1x8x4x8xf32> -> vector<1x4x8x8xf32>
      %c0_47 = arith.constant 0 : index
      %c0_48 = arith.constant 0 : index
      %c0_49 = arith.constant 0 : index
      %c0_50 = arith.constant 0 : index
      %54 = vector.load %arg10[%c0_47, %c0_48, %c0_49, %c0_50] : memref<1x4x8x8xf32, #tpu.memory_space<vmem>>, vector<1x4x8x8xf32>
      tpu.vector_store %arg10[%c0_47, %c0_48, %c0_49, %c0_50], %53 {strides = array<i32>} : memref<1x4x8x8xf32, #tpu.memory_space<vmem>>, vector<1x4x8x8xf32>,
      %cst_51 = arith.constant 0xFF800000 : f32
      %55 = vector.broadcast %cst_51 : f32 to vector<4x8x1xf32>
      %c0_52 = arith.constant 0 : index
      %c0_53 = arith.constant 0 : index
      %c0_54 = arith.constant 0 : index
      %56 = vector.load %arg12[%c0_52, %c0_53, %c0_54] : memref<4x8x1xf32, #tpu.memory_space<vmem>>, vector<4x8x1xf32>
      tpu.vector_store %arg12[%c0_52, %c0_53, %c0_54], %55 {strides = array<i32>} : memref<4x8x1xf32, #tpu.memory_space<vmem>>, vector<4x8x1xf32>,
      %cst_55 = arith.constant 0.000000e+00 : f32
      %57 = vector.broadcast %cst_55 : f32 to vector<4x8x1xf32>
      %c0_56 = arith.constant 0 : index
      %c0_57 = arith.constant 0 : index
      %c0_58 = arith.constant 0 : index
      %58 = vector.load %arg13[%c0_56, %c0_57, %c0_58] : memref<4x8x1xf32, #tpu.memory_space<vmem>>, vector<4x8x1xf32>
      tpu.vector_store %arg13[%c0_56, %c0_57, %c0_58], %57 {strides = array<i32>} : memref<4x8x1xf32, #tpu.memory_space<vmem>>, vector<4x8x1xf32>,
      %cst_59 = arith.constant 0.000000e+00 : f32
      %59 = vector.broadcast %cst_59 : f32 to vector<4x8x8xf32>
      %c0_60 = arith.constant 0 : index
      %c0_61 = arith.constant 0 : index
      %c0_62 = arith.constant 0 : index
      %60 = vector.load %arg11[%c0_60, %c0_61, %c0_62] : memref<4x8x8xf32, #tpu.memory_space<vmem>>, vector<4x8x8xf32>
      tpu.vector_store %arg11[%c0_60, %c0_61, %c0_62], %59 {strides = array<i32>} : memref<4x8x8xf32, #tpu.memory_space<vmem>>, vector<4x8x8xf32>,
    } else {
    }
    %c0 = arith.constant 0 : index
    %c0_1 = arith.constant 0 : index
    %c0_2 = arith.constant 0 : index
    %3 = vector.load %arg8[%c0, %c0_1, %c0_2] : memref<4x8x8xf32, #tpu.memory_space<vmem>>, vector<4x8x8xf32>
    %4 = arith.index_cast %arg1 : i32 to index
    %c0_3 = arith.constant 0 : index
    %c0_4 = arith.constant 0 : index
    %c0_5 = arith.constant 0 : index
    %5 = vector.load %arg9[%4, %c0_3, %c0_4, %c0_5] : memref<1x4x8x8xf32, #tpu.memory_space<vmem>>, vector<1x4x8x8xf32>
    %6 = vector.shape_cast %5 : vector<1x4x8x8xf32> to vector<4x8x8xf32>
    %7 = arith.index_cast %arg1 : i32 to index
    %c0_6 = arith.constant 0 : index
    %c0_7 = arith.constant 0 : index
    %c0_8 = arith.constant 0 : index
    %8 = vector.load %arg10[%7, %c0_6, %c0_7, %c0_8] : memref<1x4x8x8xf32, #tpu.memory_space<vmem>>, vector<1x4x8x8xf32>
    %9 = vector.shape_cast %8 : vector<1x4x8x8xf32> to vector<4x8x8xf32>
    "tpu.trace_start"() <{level = 10 : i32, message = "hqd,hkd->hqk"}> : () -> ()
    %cst = arith.constant dense<0.000000e+00> : vector<4x8x8xf32>
    %10 = tpu.matmul %3, %6, %cst {dimension_numbers = #tpu.dot_dimension_numbers<[2], [2], [1], [1], [0, 0, 0, 1, 1, 1], [0], [0]>} : vector<4x8x8xf32>, vector<4x8x8xf32>, vector<4x8x8xf32> -> vector<4x8x8xf32>
    "tpu.trace_stop"() : () -> ()
    %c0_9 = arith.constant 0 : index
    %c0_10 = arith.constant 0 : index
    %c0_11 = arith.constant 0 : index
    %11 = vector.load %arg12[%c0_9, %c0_10, %c0_11] : memref<4x8x1xf32, #tpu.memory_space<vmem>>, vector<4x8x1xf32>
    %cst_12 = arith.constant dense<0xFF800000> : vector<4x8xf32>
    %12 = vector.multi_reduction <maximumf>, %10, %cst_12 [2] : vector<4x8x8xf32> to vector<4x8xf32>
    %13 = vector.shape_cast %12 : vector<4x8xf32> to vector<4x8x1xf32>
    %14 = arith.maximumf %11, %13 : vector<4x8x1xf32>
    %15 = arith.subf %11, %14 : vector<4x8x1xf32>
    %16 = math.exp %15 : vector<4x8x1xf32>
    %17 = vector.broadcast %14 : vector<4x8x1xf32> to vector<4x8x8xf32>
    %18 = arith.subf %10, %17 : vector<4x8x8xf32>
    %19 = math.exp %18 : vector<4x8x8xf32>
    %c0_13 = arith.constant 0 : index
    %c0_14 = arith.constant 0 : index
    %c0_15 = arith.constant 0 : index
    %20 = vector.load %arg13[%c0_13, %c0_14, %c0_15] : memref<4x8x1xf32, #tpu.memory_space<vmem>>, vector<4x8x1xf32>
    %21 = arith.mulf %16, %20 : vector<4x8x1xf32>
    %cst_16 = arith.constant dense<0.000000e+00> : vector<4x8xf32>
    %22 = vector.multi_reduction <add>, %19, %cst_16 [2] : vector<4x8x8xf32> to vector<4x8xf32>
    %23 = vector.shape_cast %22 : vector<4x8xf32> to vector<4x8x1xf32>
    %24 = arith.addf %21, %23 : vector<4x8x1xf32>
    %c0_17 = arith.constant 0 : index
    %c0_18 = arith.constant 0 : index
    %c0_19 = arith.constant 0 : index
    %25 = vector.load %arg13[%c0_17, %c0_18, %c0_19] : memref<4x8x1xf32, #tpu.memory_space<vmem>>, vector<4x8x1xf32>
    tpu.vector_store %arg13[%c0_17, %c0_18, %c0_19], %24 {strides = array<i32>} : memref<4x8x1xf32, #tpu.memory_space<vmem>>, vector<4x8x1xf32>,
    %c0_20 = arith.constant 0 : index
    %c0_21 = arith.constant 0 : index
    %c0_22 = arith.constant 0 : index
    %26 = vector.load %arg11[%c0_20, %c0_21, %c0_22] : memref<4x8x8xf32, #tpu.memory_space<vmem>>, vector<4x8x8xf32>
    %27 = vector.broadcast %16 : vector<4x8x1xf32> to vector<4x8x8xf32>
    %28 = arith.mulf %27, %26 : vector<4x8x8xf32>
    "tpu.trace_start"() <{level = 10 : i32, message = "hqk,hkd->hqd"}> : () -> ()
    %cst_23 = arith.constant dense<0.000000e+00> : vector<4x8x8xf32>
    %29 = tpu.matmul %19, %9, %cst_23 {dimension_numbers = #tpu.dot_dimension_numbers<[2], [1], [1], [2], [0, 0, 0, 1, 1, 2], [0], [0]>} : vector<4x8x8xf32>, vector<4x8x8xf32>, vector<4x8x8xf32> -> vector<4x8x8xf32>
    "tpu.trace_stop"() : () -> ()
    %30 = arith.addf %28, %29 : vector<4x8x8xf32>
    %c0_24 = arith.constant 0 : index
    %c0_25 = arith.constant 0 : index
    %c0_26 = arith.constant 0 : index
    %31 = vector.load %arg11[%c0_24, %c0_25, %c0_26] : memref<4x8x8xf32, #tpu.memory_space<vmem>>, vector<4x8x8xf32>
    tpu.vector_store %arg11[%c0_24, %c0_25, %c0_26], %30 {strides = array<i32>} : memref<4x8x8xf32, #tpu.memory_space<vmem>>, vector<4x8x8xf32>,
    %c0_27 = arith.constant 0 : index
    %c0_28 = arith.constant 0 : index
    %c0_29 = arith.constant 0 : index
    %32 = vector.load %arg12[%c0_27, %c0_28, %c0_29] : memref<4x8x1xf32, #tpu.memory_space<vmem>>, vector<4x8x1xf32>
    tpu.vector_store %arg12[%c0_27, %c0_28, %c0_29], %14 {strides = array<i32>} : memref<4x8x1xf32, #tpu.memory_space<vmem>>, vector<4x8x1xf32>,
    %c0_i32_30 = arith.constant 0 : i32
    %33 = arith.cmpi eq, %arg1, %c0_i32_30 : i32
    %34 = arith.extui %33 : i1 to i32
    %c0_i32_31 = arith.constant 0 : i32
    %35 = arith.cmpi ne, %34, %c0_i32_31 : i32
    scf.if %35 {
      %c0_32 = arith.constant 0 : index
      %c0_33 = arith.constant 0 : index
      %c0_34 = arith.constant 0 : index
      %36 = vector.load %arg11[%c0_32, %c0_33, %c0_34] : memref<4x8x8xf32, #tpu.memory_space<vmem>>, vector<4x8x8xf32>
      %c0_35 = arith.constant 0 : index
      %c0_36 = arith.constant 0 : index
      %c0_37 = arith.constant 0 : index
      %37 = vector.load %arg13[%c0_35, %c0_36, %c0_37] : memref<4x8x1xf32, #tpu.memory_space<vmem>>, vector<4x8x1xf32>
      %38 = vector.broadcast %37 : vector<4x8x1xf32> to vector<4x8x8xf32>
      %39 = arith.divf %36, %38 : vector<4x8x8xf32>
      %40 = tpu.transpose %39, [1, 0, 2] : vector<4x8x8xf32> -> vector<8x4x8xf32>
      %41 = vector.shape_cast %40 : vector<8x4x8xf32> to vector<8x32xf32>
      %c0_38 = arith.constant 0 : index
      %c0_39 = arith.constant 0 : index
      %42 = vector.load %arg5[%c0_38, %c0_39] : memref<32x32xf32, #tpu.memory_space<vmem>>, vector<32x32xf32>
      %cst_40 = arith.constant dense<0.000000e+00> : vector<8x32xf32>
      %43 = tpu.matmul %41, %42, %cst_40 {dimension_numbers = #tpu.dot_dimension_numbers<[1], [0], [0], [1], [0, 0, 1, 1], [], []>} : vector<8x32xf32>, vector<32x32xf32>, vector<8x32xf32> -> vector<8x32xf32>
      %c0_41 = arith.constant 0 : index
      %c0_42 = arith.constant 0 : index
      %44 = vector.load %arg6[%c0_41, %c0_42] : memref<1x32xf32, #tpu.memory_space<vmem>>, vector<1x32xf32>
      %45 = vector.broadcast %44 : vector<1x32xf32> to vector<8x32xf32>
      %46 = arith.addf %43, %45 : vector<8x32xf32>
      %c0_43 = arith.constant 0 : index
      %c0_44 = arith.constant 0 : index
      %c0_45 = arith.constant 0 : index
      %47 = vector.load %arg2[%c0_43, %c0_44, %c0_45] : memref<1x8x32xf32, #tpu.memory_space<vmem>>, vector<1x8x32xf32>
      %48 = vector.shape_cast %47 : vector<1x8x32xf32> to vector<8x32xf32>
      %49 = arith.addf %48, %46 : vector<8x32xf32>
      %cst_46 = arith.constant dense<0.000000e+00> : vector<32xf32>
      %50 = vector.multi_reduction <add>, %49, %cst_46 [0] : vector<8x32xf32> to vector<32xf32>
      %51 = vector.shape_cast %50 : vector<32xf32> to vector<1x32xf32>
      %cst_47 = arith.constant 8.000000e+00 : f32
      %52 = vector.broadcast %cst_47 : f32 to vector<1x32xf32>
      %53 = arith.divf %51, %52 : vector<1x32xf32>
      %54 = vector.broadcast %53 : vector<1x32xf32> to vector<8x32xf32>
      %55 = arith.subf %49, %54 : vector<8x32xf32>
      %56 = arith.mulf %55, %55 : vector<8x32xf32>
      %cst_48 = arith.constant dense<0.000000e+00> : vector<32xf32>
      %57 = vector.multi_reduction <add>, %56, %cst_48 [0] : vector<8x32xf32> to vector<32xf32>
      %58 = vector.shape_cast %57 : vector<32xf32> to vector<1x32xf32>
      %cst_49 = arith.constant 8.000000e+00 : f32
      %59 = vector.broadcast %cst_49 : f32 to vector<1x32xf32>
      %60 = arith.divf %58, %59 : vector<1x32xf32>
      %61 = vector.broadcast %53 : vector<1x32xf32> to vector<8x32xf32>
      %62 = arith.subf %49, %61 : vector<8x32xf32>
      %cst_50 = arith.constant 9.99999974E-6 : f32
      %63 = vector.broadcast %cst_50 : f32 to vector<1x32xf32>
      %64 = arith.addf %60, %63 : vector<1x32xf32>
      %65 = math.rsqrt %64 : vector<1x32xf32>
      %66 = vector.broadcast %65 : vector<1x32xf32> to vector<8x32xf32>
      %67 = arith.mulf %62, %66 : vector<8x32xf32>
      %cst_51 = arith.constant 0.000000e+00 : f32
      %68 = vector.broadcast %cst_51 : f32 to vector<8x32xf32>
      %69 = arith.maximumf %67, %68 : vector<8x32xf32>
      %c0_52 = arith.constant 0 : index
      %c0_53 = arith.constant 0 : index
      %c0_54 = arith.constant 0 : index
      %70 = vector.load %arg7[%c0_52, %c0_53, %c0_54] : memref<1x8x32xf32, #tpu.memory_space<vmem>>, vector<1x8x32xf32>
      %71 = vector.shape_cast %70 : vector<1x8x32xf32> to vector<8x32xf32>
      %72 = vector.shape_cast %69 : vector<8x32xf32> to vector<1x8x32xf32>
      tpu.vector_store %arg7[%c0_52, %c0_53, %c0_54], %72 {strides = array<i32>} : memref<1x8x32xf32, #tpu.memory_space<vmem>>, vector<1x8x32xf32>,
    } else {
    }
    return
  }
  func.func @transform_0(%arg0: i32, %arg1: i32) -> (i32, i32, i32) {
    %c0_i32 = arith.constant 0 : i32
    %c0_i32_0 = arith.constant 0 : i32
    %c0_i32_1 = arith.constant 0 : i32
    return %arg0, %c0_i32, %c0_i32_0 : i32, i32, i32
  }
  func.func @transform_1(%arg0: i32, %arg1: i32) -> (i32, i32) {
    %c0_i32 = arith.constant 0 : i32
    %c0_i32_0 = arith.constant 0 : i32
    %c0_i32_1 = arith.constant 0 : i32
    return %c0_i32, %c0_i32_0 : i32, i32
  }
  func.func @transform_2(%arg0: i32, %arg1: i32) -> (i32, i32) {
    %c0_i32 = arith.constant 0 : i32
    %c0_i32_0 = arith.constant 0 : i32
    %c0_i32_1 = arith.constant 0 : i32
    return %c0_i32, %c0_i32_0 : i32, i32
  }
  func.func @transform_3(%arg0: i32, %arg1: i32) -> (i32, i32) {
    %c0_i32 = arith.constant 0 : i32
    %c0_i32_0 = arith.constant 0 : i32
    %c0_i32_1 = arith.constant 0 : i32
    return %c0_i32, %c0_i32_0 : i32, i32
  }
  func.func @transform_4(%arg0: i32, %arg1: i32) -> (i32, i32) {
    %c0_i32 = arith.constant 0 : i32
    %c0_i32_0 = arith.constant 0 : i32
    %c0_i32_1 = arith.constant 0 : i32
    return %c0_i32, %c0_i32_0 : i32, i32
  }
  func.func @transform_5(%arg0: i32, %arg1: i32) -> (i32, i32, i32) {
    %c0_i32 = arith.constant 0 : i32
    %c0_i32_0 = arith.constant 0 : i32
    %c0_i32_1 = arith.constant 0 : i32
    return %arg0, %c0_i32, %c0_i32_0 : i32, i32, i32
  }
}

</mosaic_0001>

<llo_original>
// kernel: tpu_custom_call.1
$region0: #{tpu_custom_call.1}
  #allocation0 [shape = 'u32[]', space=smem, size = 0x4, offset = 0x4, fixed_abs, tag = 'smem constant byte address 0x4 - core index']
  #allocation1 [shape = 'u32[144,128]{1,0:T(1,128)}', space=vmem, size = 0x12000, scoped, tag = 'internal scratch']
  #allocation2 [shape = 'f32[4,8,8]{2,1,0:T(8,128)}', space=vmem, size = 0x4000, scoped, tag = 'scratch operand']
  #allocation3 [shape = 'f32[1,4,8,8]{3,2,1,0:T(8,128)}', space=vmem, size = 0x4000, scoped, tag = 'scratch operand']
  #allocation4 [shape = 'f32[1,4,8,8]{3,2,1,0:T(8,128)}', space=vmem, size = 0x4000, scoped, tag = 'scratch operand']
  #allocation5 [shape = 'f32[4,8,8]{2,1,0:T(8,128)}', space=vmem, size = 0x4000, scoped, tag = 'scratch operand']
  #allocation6 [shape = 'f32[4,8,1]{2,1,0:T(8,128)}', space=vmem, size = 0x4000, scoped, tag = 'scratch operand']
  #allocation7 [shape = 'f32[4,8,1]{2,1,0:T(8,128)}', space=vmem, size = 0x4000, scoped, tag = 'scratch operand']
  %s0 = inlined_call_operand.hbm [shape: f32[2,8,32], index: 0, kind: input, shape index: {}]
  %s1 = inlined_call_operand.hbm [shape: f32[32,96], index: 1, kind: input, shape index: {}]
  %s2 = inlined_call_operand.vmem [shape: f32[1,96], index: 2, kind: input, shape index: {}]
  %s3 = inlined_call_operand.hbm [shape: f32[32,32], index: 3, kind: input, shape index: {}]
  %s4 = inlined_call_operand.vmem [shape: f32[1,32], index: 4, kind: input, shape index: {}]
  %s5 = inlined_call_operand.hbm [shape: f32[2,8,32], index: 5, kind: output, shape index: {}]
  %s6 = sld [smem:[#allocation0]]
  $region73: #{tpu_custom_call.1} parent=0
    _
  %s8 = ssub.s32 1, %s6
  %s9 = scalar_select 0, %s8, %s6
  $region1: #{tpu_custom_call.1} parent=0
    #allocation8 [shape = 'u8[8192]{0}', space=vmem, size = 0x2000, scoped, tag = 'input window, operand 0']
    #allocation9 [shape = 's32[2]{0}', space=sflag, size = 0x8, scoped, tag = 'scoped memory for tpu_custom_call.1']
    #allocation10 [shape = 's32[2]{0}', space=sflag, size = 0x8, scoped, tag = 'scoped memory for tpu_custom_call.1']
    #allocation11 [shape = 'u8[16384]{0}', space=vmem, size = 0x4000, scoped, tag = 'input window, operand 1, single buffered']
    #allocation12 [shape = 's32[1]{0}', space=sflag, size = 0x4, scoped, tag = 'scoped memory for tpu_custom_call.1']
    #allocation13 [shape = 'u8[16384]{0}', space=vmem, size = 0x4000, scoped, tag = 'input window, operand 3, single buffered']
    #allocation14 [shape = 'u8[8192]{0}', space=vmem, size = 0x2000, scoped, tag = 'output window, operand 0']
    %10 = vsyncpa [#allocation9], 0
    %s11 = scalar_lea.sflag [#allocation9], 1
    %12 = vsyncpa %s11, 0
    %13 = vsyncpa [#allocation12], 0
    %14 = vsyncpa [#allocation10], 0
    %s15 = scalar_lea.sflag [#allocation10], 1
    %16 = vsyncpa %s15, 0
    loop: start=0, step=1, limit=4
    $region2: #{tpu_custom_call.1} parent=1 // loop_pre_header
      _
    $region3: #{tpu_custom_call.1} parent=1 // loop_header
      %s18 = sphi 0, %s22
      %p19 = scmp.ge.s32.totalorder %s18, 4
      %s25 = sphi 0, %s37
      %s26 = sphi 0, %s33
      %s27 = sphi 0, %s25
      %s28 = sphi 0, %s26
      %s29 = sphi 0, %s27
      %s30 = sphi 0, %s28
      %s40 = sphi 0, %s42
      %s43 = sphi 0, %s40
      %s44 = sphi 0, %s43
      %s60 = sphi 0, %s44
      %s64 = sphi 0, %s64
      %s66 = sphi 0, %s64
      %s67 = sphi 0, %s66
      %s81 = sphi 0, %s67
      %s85 = sphi 0, %s85
      %s87 = sphi 0, %s85
      %s88 = sphi 0, %s87
      %s102 = sphi 0, %s88
      %s106 = sphi 0, %s106
      %s108 = sphi 0, %s106
      %s109 = sphi 0, %s108
      %s123 = sphi 0, %s109
      %s127 = sphi 0, %s127
      %s129 = sphi 0, %s127
      %s130 = sphi 0, %s129
      %s144 = sphi 0, %s130
      %s150 = sphi 0, %s152
      %s153 = sphi 0, %s150
      %s154 = sphi 0, %s153
      %s170 = sphi 0, %s154
    $region4: #{tpu_custom_call.1} parent=1 // loop_header_branch
      %21 = sbr.rel (%p19) target = $region8
    $region5: #{tpu_custom_call.1} parent=1 // loop_body
      %s23 = ssub.s32 %s18, 1
      %s24 = ssub.s32 %s18, 2
      %s31 = sadd.s32 1, %s26
      %p32 = scmp.ge.s32.totalorder %s31, 1
      %s33 = scalar_select %p32, 0, %s31
      %s34 = sadd.s32 1, %s25
      %s35 = scalar_select %p32, %s34, %s25
      %p36 = scmp.ge.s32.totalorder %s35, 2
      %s37 = scalar_select %p36, 0, %s35
      %s38 = ssub.s32 %s25, %s37
      %p39 = scmp.eq.s32.totalorder %s38, 0
      %s41 = sadd.s32 %s40, 1
      %s42 = scalar_select %p39, %s40, %s41
      %p45 = pneg %p39
      %p46 = scmp.eq.s32.totalorder %s18, 1
      %p47 = por %p45, %p46
      %p48 = scmp.ne.s32.totalorder %s40, %s43
      %p49 = scmp.eq.s32.totalorder %s18, 0
      %p50 = por %p48, %p49
      %p51 = scmp.ne.s32.totalorder %s40, %s43
      %p52 = scmp.eq.s32.totalorder %s23, 1
      %p53 = por %p51, %p52
      %p54 = scmp.ne.s32.totalorder %s43, %s44
      %p55 = scmp.eq.s32.totalorder %s23, 0
      %p56 = por %p54, %p55
      %p57 = scmp.ne.s32.totalorder %s43, %s44
      %p58 = scmp.eq.s32.totalorder %s24, 1
      %p59 = por %p57, %p58
      %p61 = scmp.ne.s32.totalorder %s44, %s60
      %p62 = scmp.eq.s32.totalorder %s24, 0
      %p63 = por %p61, %p62
      %s65 = sadd.s32 %s64, 1
      %p68 = scmp.eq.s32.totalorder %s18, 1
      %p69 = scmp.ne.s32.totalorder %s64, %s66
      %p70 = scmp.eq.s32.totalorder %s18, 0
      %p71 = por %p69, %p70
      %p72 = scmp.ne.s32.totalorder %s64, %s66
      %p73 = scmp.eq.s32.totalorder %s23, 1
      %p74 = por %p72, %p73
      %p75 = scmp.ne.s32.totalorder %s66, %s67
      %p76 = scmp.eq.s32.totalorder %s23, 0
      %p77 = por %p75, %p76
      %p78 = scmp.ne.s32.totalorder %s66, %s67
      %p79 = scmp.eq.s32.totalorder %s24, 1
      %p80 = por %p78, %p79
      %p82 = scmp.ne.s32.totalorder %s67, %s81
      %p83 = scmp.eq.s32.totalorder %s24, 0
      %p84 = por %p82, %p83
      %s86 = sadd.s32 %s85, 1
      %p89 = scmp.eq.s32.totalorder %s18, 1
      %p90 = scmp.ne.s32.totalorder %s85, %s87
      %p91 = scmp.eq.s32.totalorder %s18, 0
      %p92 = por %p90, %p91
      %p93 = scmp.ne.s32.totalorder %s85, %s87
      %p94 = scmp.eq.s32.totalorder %s23, 1
      %p95 = por %p93, %p94
      %p96 = scmp.ne.s32.totalorder %s87, %s88
      %p97 = scmp.eq.s32.totalorder %s23, 0
      %p98 = por %p96, %p97
      %p99 = scmp.ne.s32.totalorder %s87, %s88
      %p100 = scmp.eq.s32.totalorder %s24, 1
      %p101 = por %p99, %p100
      %p103 = scmp.ne.s32.totalorder %s88, %s102
      %p104 = scmp.eq.s32.totalorder %s24, 0
      %p105 = por %p103, %p104
      %s107 = sadd.s32 %s106, 1
      %p110 = scmp.eq.s32.totalorder %s18, 1
      %p111 = scmp.ne.s32.totalorder %s106, %s108
      %p112 = scmp.eq.s32.totalorder %s18, 0
      %p113 = por %p111, %p112
      %p114 = scmp.ne.s32.totalorder %s106, %s108
      %p115 = scmp.eq.s32.totalorder %s23, 1
      %p116 = por %p114, %p115
      %p117 = scmp.ne.s32.totalorder %s108, %s109
      %p118 = scmp.eq.s32.totalorder %s23, 0
      %p119 = por %p117, %p118
      %p120 = scmp.ne.s32.totalorder %s108, %s109
      %p121 = scmp.eq.s32.totalorder %s24, 1
      %p122 = por %p120, %p121
      %p124 = scmp.ne.s32.totalorder %s109, %s123
      %p125 = scmp.eq.s32.totalorder %s24, 0
      %p126 = por %p124, %p125
      %s128 = sadd.s32 %s127, 1
      %p131 = scmp.eq.s32.totalorder %s18, 1
      %p132 = scmp.ne.s32.totalorder %s127, %s129
      %p133 = scmp.eq.s32.totalorder %s18, 0
      %p134 = por %p132, %p133
      %p135 = scmp.ne.s32.totalorder %s127, %s129
      %p136 = scmp.eq.s32.totalorder %s23, 1
      %p137 = por %p135, %p136
      %p138 = scmp.ne.s32.totalorder %s129, %s130
      %p139 = scmp.eq.s32.totalorder %s23, 0
      %p140 = por %p138, %p139
      %p141 = scmp.ne.s32.totalorder %s129, %s130
      %p142 = scmp.eq.s32.totalorder %s24, 1
      %p143 = por %p141, %p142
      %p145 = scmp.ne.s32.totalorder %s130, %s144
      %p146 = scmp.eq.s32.totalorder %s24, 0
      %p147 = por %p145, %p146
      %s148 = ssub.s32 %s25, %s37
      %p149 = scmp.eq.s32.totalorder %s148, 0
      %s151 = sadd.s32 %s150, 1
      %s152 = scalar_select %p149, %s150, %s151
      %p155 = pneg %p149
      %p156 = scmp.eq.s32.totalorder %s18, 1
      %p157 = por %p155, %p156
      %p158 = scmp.ne.s32.totalorder %s150, %s153
      %p159 = scmp.eq.s32.totalorder %s18, 0
      %p160 = por %p158, %p159
      %p161 = scmp.ne.s32.totalorder %s150, %s153
      %p162 = scmp.eq.s32.totalorder %s23, 1
      %p163 = por %p161, %p162
      %p164 = scmp.ne.s32.totalorder %s153, %s154
      %p165 = scmp.eq.s32.totalorder %s23, 0
      %p166 = por %p164, %p165
      %p167 = scmp.ne.s32.totalorder %s153, %s154
      %p168 = scmp.eq.s32.totalorder %s24, 1
      %p169 = por %p167, %p168
      %p171 = scmp.ne.s32.totalorder %s154, %s170
      %p172 = scmp.eq.s32.totalorder %s24, 0
      %p173 = por %p171, %p172
      %p174 = scmp.le.s32.totalorder 1, %s18
      %p175 = scmp.lt.s32.totalorder %s18, 3
      %p176 = pnand %p174, %p175
      %p177 = pneg %p176
      // Predicated region
      $region9: #{tpu_custom_call.1} parent=5 // pred_check
        _
      $region10: #{tpu_custom_call.1} parent=5 // pred_check_branch
        %179 = sbr.rel (%p176) target = $region12
      $region11: #{tpu_custom_call.1} parent=5 // pred_region
        %s180 = ssub.s32 %s18, 1
        // Predicated region
        $region13: #{tpu_custom_call.1} parent=11 // pred_check
          %p181 = pneg %p77
        $region14: #{tpu_custom_call.1} parent=11 // pred_check_branch
          %183 = sbr.rel (%p181) target = $region16
        $region15: #{tpu_custom_call.1} parent=11 // pred_region
          %s185 = ssub.s32 512, 512
          %186 = vsyncadd [#allocation12], %s185
          %s187 = sshll.u32 [#allocation11], 4
          %s188 = int_to_ptr.vmem [resolvable:$true] %s187
          %193 = dma.hbm_to_vmem [thread:$0]  %s1, 512, %s188, [#allocation12], 128, 128, 8
        $region16: #{tpu_custom_call.1} parent=11 // pred_fallthru
          _
        // Predicated region
        $region17: #{tpu_custom_call.1} parent=11 // pred_check
          %p194 = pneg %p98
        $region18: #{tpu_custom_call.1} parent=11 // pred_check_branch
          %196 = sbr.rel (%p194) target = $region20
        $region19: #{tpu_custom_call.1} parent=11 // pred_region
          _
        $region20: #{tpu_custom_call.1} parent=11 // pred_fallthru
          _
        // Predicated region
        $region21: #{tpu_custom_call.1} parent=11 // pred_check
          %p197 = pneg %p119
        $region22: #{tpu_custom_call.1} parent=11 // pred_check_branch
          %199 = sbr.rel (%p197) target = $region24
        $region23: #{tpu_custom_call.1} parent=11 // pred_region
          %s201 = ssub.s32 512, 512
          %202 = vsyncadd [#allocation12], %s201
          %s203 = sshll.u32 [#allocation13], 4
          %s204 = int_to_ptr.vmem [resolvable:$true] %s203
          %209 = dma.hbm_to_vmem [thread:$0]  %s3, 512, %s204, [#allocation12], 128, 128, 8
        $region24: #{tpu_custom_call.1} parent=11 // pred_fallthru
          _
        // Predicated region
        $region25: #{tpu_custom_call.1} parent=11 // pred_check
          %p210 = pneg %p140
        $region26: #{tpu_custom_call.1} parent=11 // pred_check_branch
          %212 = sbr.rel (%p210) target = $region28
        $region27: #{tpu_custom_call.1} parent=11 // pred_region
          _
        $region28: #{tpu_custom_call.1} parent=11 // pred_fallthru
          _
      $region12: #{tpu_custom_call.1} parent=5 // pred_fallthru
        _
      %p213 = scmp.lt.s32.totalorder %s18, 2
      // Predicated region
      $region29: #{tpu_custom_call.1} parent=5 // pred_check
        %p214 = pneg %p213
      $region30: #{tpu_custom_call.1} parent=5 // pred_check_branch
        %216 = sbr.rel (%p214) target = $region32
      $region31: #{tpu_custom_call.1} parent=5 // pred_region
        // Predicated region
        $region33: #{tpu_custom_call.1} parent=31 // pred_check
          %p217 = pneg %p50
        $region34: #{tpu_custom_call.1} parent=31 // pred_check_branch
          %219 = sbr.rel (%p217) target = $region36
        $region35: #{tpu_custom_call.1} parent=31 // pred_region
          %s220 = sand.u32 %s40, 1
          %s221 = scalar_lea.sflag [#allocation9], %s220
          %s222 = sand.u32 %s40, 1
          %s223 = smul.addr %s222, 8
          %s224 = scalar_lea.vmem [#allocation8], %s223
          %s226 = ssub.s32 128, 128
          %227 = vsyncadd %s221, %s226
          %s228 = smul.addr %s25, 128
          %s229 = scalar_lea.hbm %s0, %s228
          %s231 = sshll.u32 %s224, 4
          %s232 = int_to_ptr.vmem [resolvable:$true] %s231
          %234 = dma.hbm_to_vmem [thread:$0]  %s229, 128, %s232, %s221
        $region36: #{tpu_custom_call.1} parent=31 // pred_fallthru
          _
      $region32: #{tpu_custom_call.1} parent=5 // pred_fallthru
        _
      %p235 = scmp.le.s32.totalorder 1, %s18
      %p236 = scmp.lt.s32.totalorder %s18, 3
      %p237 = pnand %p235, %p236
      %p238 = pneg %p237
      // Predicated region
      $region37: #{tpu_custom_call.1} parent=5 // pred_check
        _
      $region38: #{tpu_custom_call.1} parent=5 // pred_check_branch
        %240 = sbr.rel (%p237) target = $region40
      $region39: #{tpu_custom_call.1} parent=5 // pred_region
        %s241 = ssub.s32 %s18, 1
        %s242 = sand.u32 %s43, 1
        %s243 = scalar_lea.sflag [#allocation9], %s242
        %s244 = sand.u32 %s43, 1
        %s245 = smul.addr %s244, 8
        %s246 = scalar_lea.vmem [#allocation8], %s245
        // Predicated region
        $region41: #{tpu_custom_call.1} parent=39 // pred_check
          %p247 = pneg %p56
        $region42: #{tpu_custom_call.1} parent=39 // pred_check_branch
          %249 = sbr.rel (%p247) target = $region44
        $region43: #{tpu_custom_call.1} parent=39 // pred_region
          %250 = dma.done %s243, 128
        $region44: #{tpu_custom_call.1} parent=39 // pred_fallthru
          _
        // Predicated region
        $region45: #{tpu_custom_call.1} parent=39 // pred_check
          %p251 = pneg %p77
        $region46: #{tpu_custom_call.1} parent=39 // pred_check_branch
          %253 = sbr.rel (%p251) target = $region48
        $region47: #{tpu_custom_call.1} parent=39 // pred_region
          %254 = dma.done [#allocation12], 512
        $region48: #{tpu_custom_call.1} parent=39 // pred_fallthru
          _
        // Predicated region
        $region49: #{tpu_custom_call.1} parent=39 // pred_check
          %p255 = pneg %p119
        $region50: #{tpu_custom_call.1} parent=39 // pred_check_branch
          %257 = sbr.rel (%p255) target = $region52
        $region51: #{tpu_custom_call.1} parent=39 // pred_region
          %258 = dma.done [#allocation12], 512
        $region52: #{tpu_custom_call.1} parent=39 // pred_fallthru
          _
        %s259 = sand.u32 %s43, 1
        %s260 = scalar_lea.sflag [#allocation9], %s259
        %s261 = sand.u32 %s43, 1
        %s262 = smul.addr %s261, 8
        %s263 = scalar_lea.vmem [#allocation8], %s262
        %p264 = pneg %p56
        %p265 = pneg %p53
        %p266 = pneg %p77
        %p267 = pneg %p74
        %p268 = pneg %p98
        %p269 = pneg %p95
        %p270 = pneg %p119
        %p271 = pneg %p116
        %p272 = pneg %p140
        %p273 = pneg %p137
        %p274 = pneg %p166
        %p275 = pneg %p163
        %s276 = sand.u32 %s153, 1
        %s277 = scalar_lea.sflag [#allocation10], %s276
        %s278 = sand.u32 %s153, 1
        %s279 = smul.addr %s278, 8
        %s280 = scalar_lea.vmem [#allocation14], %s279
        %p281 = scmp.eq.s32.totalorder %s28, 0
        // Predicated region
        $region53: #{tpu_custom_call.1} parent=39 // pred_check
          %p282 = pneg %p281
        $region54: #{tpu_custom_call.1} parent=39 // pred_check_branch
          %284 = sbr.rel (%p282) target = $region56
        $region55: #{tpu_custom_call.1} parent=39 // pred_region
          %v285 = vld [vmem:[%s246] sm:$0xff]
          %v286 = vld [vmem:[#allocation11] sm:$0xff]
          %v287 = vld [vmem:[#allocation11 + $0x8] sm:$0xff]
          %v288 = vld [vmem:[#allocation11 + $0x10] sm:$0xff]
          %v289 = vld [vmem:[#allocation11 + $0x18] sm:$0xff]
          %v290 = vld [vmem:[%s2] sm:$0x1]
          %v292 = vlaneseq
          %v293 = vshrl.u32 %v292, 7
          %v294 = vsub.s32 0, %v293
          %v295 = vrot.slane %v290, %v294
          %vm297 = vcmask 261120
          %v299 = vsel %vm297, %v285, 0
          %301 = vmatprep.subr.mxu0 0.0
          %302 = vmatpush1.msra.mxu0 %v286
          %303 = vmatprep.subr.mxu0 0.0
          %304 = vmatpush1.msra.mxu0 %v287
          %305 = vmatprep.subr.mxu0 0.0
          %306 = vmatpush1.msra.mxu0 %v288
          %307 = vmatprep.subr.mxu0 0.0
          %308 = vmatpush1.msra.mxu0 %v289
          %309 = vmatprep.subr.mxu0 0.0
          %310 = vmatpush1.msra.mxu0 0.0
          %311 = vmatprep.subr.mxu0 0.0
          %312 = vmatpush1.msra.mxu0 0.0
          %313 = vmatprep.subr.mxu0 0.0
          %314 = vmatpush1.msra.mxu0 0.0
          %315 = vmatprep.subr.mxu0 0.0
          %316 = vmatpush1.msra.mxu0 0.0
          %317 = vmatprep.subr.mxu0 0.0
          %318 = vmatpush1.msra.mxu0 0.0
          %319 = vmatprep.subr.mxu0 0.0
          %320 = vmatpush1.msra.mxu0 0.0
          %321 = vmatprep.subr.mxu0 0.0
          %322 = vmatpush1.msra.mxu0 0.0
          %323 = vmatprep.subr.mxu0 0.0
          %324 = vmatpush1.msra.mxu0 0.0
          %325 = vmatprep.subr.mxu0 0.0
          %326 = vmatpush1.msra.mxu0 0.0
          %327 = vmatprep.subr.mxu0 0.0
          %328 = vmatpush1.msra.mxu0 0.0
          %329 = vmatprep.subr.mxu0 0.0
          %330 = vmatpush1.msra.mxu0 0.0
          %331 = vmatprep.subr.mxu0 0.0
          %332 = vmatpush1.msra.mxu0 0.0
          %333 = vmatprep.subr.mxu0 0.0
          %334 = vmatpush1.msra.mxu0 0.0
          %335 = vmatprep.subr.mxu0 0.0
          %336 = vmatpush1.msra.mxu0 0.0
          %337 = vmatprep.subr.mxu0 0.0
          %338 = vmatpush1.msra.mxu0 0.0
          %339 = vmatprep.subr.mxu0 0.0
          %340 = vmatpush1.msra.mxu0 0.0
          %341 = vmatprep.subr.mxu0 0.0
          %342 = vmatpush1.msra.mxu0 0.0
          %343 = vmatprep.subr.mxu0 0.0
          %344 = vmatpush1.msra.mxu0 0.0
          %345 = vmatprep.subr.mxu0 0.0
          %346 = vmatpush1.msra.mxu0 0.0
          %347 = vmatprep.subr.mxu0 0.0
          %348 = vmatpush1.msra.mxu0 0.0
          %349 = vmatprep.subr.mxu0 0.0
          %350 = vmatpush1.msra.mxu0 0.0
          %351 = vmatprep.subr.mxu0 0.0
          %352 = vmatpush1.msra.mxu0 0.0
          %353 = vmatprep.subr.mxu0 0.0
          %354 = vmatpush1.msra.mxu0 0.0
          %355 = vmatprep.subr.mxu0 0.0
          %356 = vmatpush1.msra.mxu0 0.0
          %357 = vmatprep.subr.mxu0 0.0
          %358 = vmatpush1.msra.mxu0 0.0
          %359 = vmatprep.subr.mxu0 0.0
          %360 = vmatpush1.msra.mxu0 0.0
          %361 = vmatprep.subr.mxu0 0.0
          %362 = vmatpush1.msra.mxu0 0.0
          %363 = vmatprep.subr.mxu0 0.0
          %364 = vmatpush1.msra.mxu0 0.0
          %365 = vmatprep.mubr.f32.mxu0 0.0
          %366 = vmatmul.mubr.f32.gmra.mrb[0].mxu0 %v299
          %v367 = vpop.f32.mrb[0].mxu0
          %v368 = vadd.f32 %v295, %v367
          %v369 = vpop.f32.mrb[0].mxu0
          %370 = vdwg.mxu0
          %372 = vrot.lane.b32.xlu0 %v368, 120
          %v373 = vpop.permute.xlu0 %372
          %375 = vrot.lane.b32.xlu0 %v368, 112
          %v376 = vpop.permute.xlu0 %375
          %378 = vrot.lane.b32.xlu0 %v368, 104
          %v379 = vpop.permute.xlu0 %378
          %v381 = vcombine.low %v368, %v376
          %v382 = vcombine.high %v368, %v376
          %v384 = vunpack.c.l.s4 1983009808
          %v385 = vunpack.c.0.s8 %v384
          %v386 = vlaneseq
          %v387 = vshrl.u32 %v386, 7
          %v388 = vsub.s32 %v385, %v387
          %v389 = vrot.slane %v381, %v388
          %v391 = vunpack.c.l.s4 1983009808
          %v392 = vunpack.c.0.s8 %v391
          %v393 = vlaneseq
          %v394 = vshrl.u32 %v393, 7
          %v395 = vsub.s32 %v392, %v394
          %v396 = vrot.slane %v382, %v395
          %v397 = vcombine.low %v373, %v379
          %v398 = vcombine.high %v373, %v379
          %v400 = vunpack.c.l.s4 1983009808
          %v401 = vunpack.c.0.s8 %v400
          %v402 = vlaneseq
          %v403 = vshrl.u32 %v402, 7
          %v404 = vsub.s32 %v401, %v403
          %v405 = vrot.slane %v397, %v404
          %v407 = vunpack.c.l.s4 1983009808
          %v408 = vunpack.c.0.s8 %v407
          %v409 = vlaneseq
          %v410 = vshrl.u32 %v409, 7
          %v411 = vsub.s32 %v408, %v410
          %v412 = vrot.slane %v398, %v411
          %v413 = vcombine.low %v389, %v405
          %v414 = vcombine.high %v389, %v405
          %v416 = vunpack.c.l.s4 1934713408
          %v417 = vunpack.c.0.s8 %v416
          %v418 = vlaneseq
          %v419 = vshrl.u32 %v418, 7
          %v420 = vsub.s32 %v417, %v419
          %v421 = vrot.slane %v413, %v420
          %v423 = vunpack.c.l.s4 1934713408
          %v424 = vunpack.c.0.s8 %v423
          %v425 = vlaneseq
          %v426 = vshrl.u32 %v425, 7
          %v427 = vsub.s32 %v424, %v426
          %v428 = vrot.slane %v414, %v427
          %v429 = vcombine.low %v396, %v412
          %v430 = vcombine.high %v396, %v412
          %v432 = vunpack.c.l.s4 1934713408
          %v433 = vunpack.c.0.s8 %v432
          %v434 = vlaneseq
          %v435 = vshrl.u32 %v434, 7
          %v436 = vsub.s32 %v433, %v435
          %v437 = vrot.slane %v429, %v436
          %v439 = vunpack.c.l.s4 1934713408
          %v440 = vunpack.c.0.s8 %v439
          %v441 = vlaneseq
          %v442 = vshrl.u32 %v441, 7
          %v443 = vsub.s32 %v440, %v442
          %v444 = vrot.slane %v430, %v443
          %v445 = vcombine.high %v421, 0.0
          %v446 = vcombine.high %v428, 0.0
          %v447 = vcombine.high %v437, 0.0
          %v448 = vcombine.high %v444, 0.0
          %v449 = vcombine.low %v421, %v428
          %v451 = vunpack.c.l.s4 1983009808
          %v452 = vunpack.c.0.s8 %v451
          %v453 = vlaneseq
          %v454 = vshrl.u32 %v453, 7
          %v455 = vsub.s32 %v452, %v454
          %v456 = vrot.slane %v449, %v455
          %v457 = vcombine.low %v445, %v446
          %v459 = vunpack.c.l.s4 1983009808
          %v460 = vunpack.c.0.s8 %v459
          %v461 = vlaneseq
          %v462 = vshrl.u32 %v461, 7
          %v463 = vsub.s32 %v460, %v462
          %v464 = vrot.slane %v457, %v463
          %v465 = vcombine.low %v437, %v444
          %v467 = vunpack.c.l.s4 1983009808
          %v468 = vunpack.c.0.s8 %v467
          %v469 = vlaneseq
          %v470 = vshrl.u32 %v469, 7
          %v471 = vsub.s32 %v468, %v470
          %v472 = vrot.slane %v465, %v471
          %v473 = vcombine.low %v447, %v448
          %v475 = vunpack.c.l.s4 1983009808
          %v476 = vunpack.c.0.s8 %v475
          %v477 = vlaneseq
          %v478 = vshrl.u32 %v477, 7
          %v479 = vsub.s32 %v476, %v478
          %v480 = vrot.slane %v473, %v479
          %v481 = vcombine.low %v456, %v464
          %v482 = vcombine.high %v456, %v464
          %v484 = vunpack.c.l.s4 1934713408
          %v485 = vunpack.c.0.s8 %v484
          %v486 = vlaneseq
          %v487 = vshrl.u32 %v486, 7
          %v488 = vsub.s32 %v485, %v487
          %v489 = vrot.slane %v481, %v488
          %v491 = vunpack.c.l.s4 1934713408
          %v492 = vunpack.c.0.s8 %v491
          %v493 = vlaneseq
          %v494 = vshrl.u32 %v493, 7
          %v495 = vsub.s32 %v492, %v494
          %v496 = vrot.slane %v482, %v495
          %v497 = vcombine.low %v472, %v480
          %v498 = vcombine.high %v472, %v480
          %v500 = vunpack.c.l.s4 1934713408
          %v501 = vunpack.c.0.s8 %v500
          %v502 = vlaneseq
          %v503 = vshrl.u32 %v502, 7
          %v504 = vsub.s32 %v501, %v503
          %v505 = vrot.slane %v497, %v504
          %v507 = vunpack.c.l.s4 1934713408
          %v508 = vunpack.c.0.s8 %v507
          %v509 = vlaneseq
          %v510 = vshrl.u32 %v509, 7
          %v511 = vsub.s32 %v508, %v510
          %v512 = vrot.slane %v498, %v511
          %v513 = vcombine.low %v489, %v505
          %v514 = vcombine.high %v489, %v505
          %v515 = vcombine.low %v496, %v512
          %v516 = vcombine.high %v496, %v512
          %vm517 = vcmask 64512
          %518 = vst.msk [vmem:[#allocation2] sm:$0xff] %vm517, %v513
          %519 = vst.msk [vmem:[#allocation2 + $0x8] sm:$0xff] %vm517, %v514
          %520 = vst.msk [vmem:[#allocation2 + $0x10] sm:$0xff] %vm517, %v515
          %521 = vst.msk [vmem:[#allocation2 + $0x18] sm:$0xff] %vm517, %v516
          %522 = vrot.lane.b32.xlu0 %v368, 96
          %v523 = vpop.permute.xlu0 %522
          %524 = vrot.lane.b32.xlu0 %v373, 96
          %v525 = vpop.permute.xlu0 %524
          %526 = vrot.lane.b32.xlu0 %v376, 96
          %v527 = vpop.permute.xlu0 %526
          %528 = vrot.lane.b32.xlu0 %v379, 96
          %v529 = vpop.permute.xlu0 %528
          %v534 = vcombine.low %v523, %v527
          %v535 = vcombine.high %v523, %v527
          %v537 = vunpack.c.l.s4 1983009808
          %v538 = vunpack.c.0.s8 %v537
          %v539 = vlaneseq
          %v540 = vshrl.u32 %v539, 7
          %v541 = vsub.s32 %v538, %v540
          %v542 = vrot.slane %v534, %v541
          %v544 = vunpack.c.l.s4 1983009808
          %v545 = vunpack.c.0.s8 %v544
          %v546 = vlaneseq
          %v547 = vshrl.u32 %v546, 7
          %v548 = vsub.s32 %v545, %v547
          %v549 = vrot.slane %v535, %v548
          %v550 = vcombine.low %v525, %v529
          %v551 = vcombine.high %v525, %v529
          %v553 = vunpack.c.l.s4 1983009808
          %v554 = vunpack.c.0.s8 %v553
          %v555 = vlaneseq
          %v556 = vshrl.u32 %v555, 7
          %v557 = vsub.s32 %v554, %v556
          %v558 = vrot.slane %v550, %v557
          %v560 = vunpack.c.l.s4 1983009808
          %v561 = vunpack.c.0.s8 %v560
          %v562 = vlaneseq
          %v563 = vshrl.u32 %v562, 7
          %v564 = vsub.s32 %v561, %v563
          %v565 = vrot.slane %v551, %v564
          %v566 = vcombine.low %v542, %v558
          %v567 = vcombine.high %v542, %v558
          %v569 = vunpack.c.l.s4 1934713408
          %v570 = vunpack.c.0.s8 %v569
          %v571 = vlaneseq
          %v572 = vshrl.u32 %v571, 7
          %v573 = vsub.s32 %v570, %v572
          %v574 = vrot.slane %v566, %v573
          %v576 = vunpack.c.l.s4 1934713408
          %v577 = vunpack.c.0.s8 %v576
          %v578 = vlaneseq
          %v579 = vshrl.u32 %v578, 7
          %v580 = vsub.s32 %v577, %v579
          %v581 = vrot.slane %v567, %v580
          %v582 = vcombine.low %v549, %v565
          %v583 = vcombine.high %v549, %v565
          %v585 = vunpack.c.l.s4 1934713408
          %v586 = vunpack.c.0.s8 %v585
          %v587 = vlaneseq
          %v588 = vshrl.u32 %v587, 7
          %v589 = vsub.s32 %v586, %v588
          %v590 = vrot.slane %v582, %v589
          %v592 = vunpack.c.l.s4 1934713408
          %v593 = vunpack.c.0.s8 %v592
          %v594 = vlaneseq
          %v595 = vshrl.u32 %v594, 7
          %v596 = vsub.s32 %v593, %v595
          %v597 = vrot.slane %v583, %v596
          %v598 = vcombine.high %v574, 0.0
          %v599 = vcombine.high %v581, 0.0
          %v600 = vcombine.high %v590, 0.0
          %v601 = vcombine.high %v597, 0.0
          %v602 = vcombine.low %v574, %v581
          %v604 = vunpack.c.l.s4 1983009808
          %v605 = vunpack.c.0.s8 %v604
          %v606 = vlaneseq
          %v607 = vshrl.u32 %v606, 7
          %v608 = vsub.s32 %v605, %v607
          %v609 = vrot.slane %v602, %v608
          %v610 = vcombine.low %v598, %v599
          %v612 = vunpack.c.l.s4 1983009808
          %v613 = vunpack.c.0.s8 %v612
          %v614 = vlaneseq
          %v615 = vshrl.u32 %v614, 7
          %v616 = vsub.s32 %v613, %v615
          %v617 = vrot.slane %v610, %v616
          %v618 = vcombine.low %v590, %v597
          %v620 = vunpack.c.l.s4 1983009808
          %v621 = vunpack.c.0.s8 %v620
          %v622 = vlaneseq
          %v623 = vshrl.u32 %v622, 7
          %v624 = vsub.s32 %v621, %v623
          %v625 = vrot.slane %v618, %v624
          %v626 = vcombine.low %v600, %v601
          %v628 = vunpack.c.l.s4 1983009808
          %v629 = vunpack.c.0.s8 %v628
          %v630 = vlaneseq
          %v631 = vshrl.u32 %v630, 7
          %v632 = vsub.s32 %v629, %v631
          %v633 = vrot.slane %v626, %v632
          %v634 = vcombine.low %v609, %v617
          %v635 = vcombine.high %v609, %v617
          %v637 = vunpack.c.l.s4 1934713408
          %v638 = vunpack.c.0.s8 %v637
          %v639 = vlaneseq
          %v640 = vshrl.u32 %v639, 7
          %v641 = vsub.s32 %v638, %v640
          %v642 = vrot.slane %v634, %v641
          %v644 = vunpack.c.l.s4 1934713408
          %v645 = vunpack.c.0.s8 %v644
          %v646 = vlaneseq
          %v647 = vshrl.u32 %v646, 7
          %v648 = vsub.s32 %v645, %v647
          %v649 = vrot.slane %v635, %v648
          %v650 = vcombine.low %v625, %v633
          %v651 = vcombine.high %v625, %v633
          %v653 = vunpack.c.l.s4 1934713408
          %v654 = vunpack.c.0.s8 %v653
          %v655 = vlaneseq
          %v656 = vshrl.u32 %v655, 7
          %v657 = vsub.s32 %v654, %v656
          %v658 = vrot.slane %v650, %v657
          %v660 = vunpack.c.l.s4 1934713408
          %v661 = vunpack.c.0.s8 %v660
          %v662 = vlaneseq
          %v663 = vshrl.u32 %v662, 7
          %v664 = vsub.s32 %v661, %v663
          %v665 = vrot.slane %v651, %v664
          %v666 = vcombine.low %v642, %v658
          %v667 = vcombine.high %v642, %v658
          %v668 = vcombine.low %v649, %v665
          %v669 = vcombine.high %v649, %v665
          %670 = vst.msk [vmem:[#allocation3] sm:$0xff] %vm517, %v666
          %671 = vst.msk [vmem:[#allocation3 + $0x8] sm:$0xff] %vm517, %v667
          %672 = vst.msk [vmem:[#allocation3 + $0x10] sm:$0xff] %vm517, %v668
          %673 = vst.msk [vmem:[#allocation3 + $0x18] sm:$0xff] %vm517, %v669
          %674 = vrot.lane.b32.xlu0 %v368, 64
          %v675 = vpop.permute.xlu0 %674
          %676 = vrot.lane.b32.xlu0 %v373, 64
          %v677 = vpop.permute.xlu0 %676
          %678 = vrot.lane.b32.xlu0 %v376, 64
          %v679 = vpop.permute.xlu0 %678
          %680 = vrot.lane.b32.xlu0 %v379, 64
          %v681 = vpop.permute.xlu0 %680
          %v686 = vcombine.low %v675, %v679
          %v687 = vcombine.high %v675, %v679
          %v689 = vunpack.c.l.s4 1983009808
          %v690 = vunpack.c.0.s8 %v689
          %v691 = vlaneseq
          %v692 = vshrl.u32 %v691, 7
          %v693 = vsub.s32 %v690, %v692
          %v694 = vrot.slane %v686, %v693
          %v696 = vunpack.c.l.s4 1983009808
          %v697 = vunpack.c.0.s8 %v696
          %v698 = vlaneseq
          %v699 = vshrl.u32 %v698, 7
          %v700 = vsub.s32 %v697, %v699
          %v701 = vrot.slane %v687, %v700
          %v702 = vcombine.low %v677, %v681
          %v703 = vcombine.high %v677, %v681
          %v705 = vunpack.c.l.s4 1983009808
          %v706 = vunpack.c.0.s8 %v705
          %v707 = vlaneseq
          %v708 = vshrl.u32 %v707, 7
          %v709 = vsub.s32 %v706, %v708
          %v710 = vrot.slane %v702, %v709
          %v712 = vunpack.c.l.s4 1983009808
          %v713 = vunpack.c.0.s8 %v712
          %v714 = vlaneseq
          %v715 = vshrl.u32 %v714, 7
          %v716 = vsub.s32 %v713, %v715
          %v717 = vrot.slane %v703, %v716
          %v718 = vcombine.low %v694, %v710
          %v719 = vcombine.high %v694, %v710
          %v721 = vunpack.c.l.s4 1934713408
          %v722 = vunpack.c.0.s8 %v721
          %v723 = vlaneseq
          %v724 = vshrl.u32 %v723, 7
          %v725 = vsub.s32 %v722, %v724
          %v726 = vrot.slane %v718, %v725
          %v728 = vunpack.c.l.s4 1934713408
          %v729 = vunpack.c.0.s8 %v728
          %v730 = vlaneseq
          %v731 = vshrl.u32 %v730, 7
          %v732 = vsub.s32 %v729, %v731
          %v733 = vrot.slane %v719, %v732
          %v734 = vcombine.low %v701, %v717
          %v735 = vcombine.high %v701, %v717
          %v737 = vunpack.c.l.s4 1934713408
          %v738 = vunpack.c.0.s8 %v737
          %v739 = vlaneseq
          %v740 = vshrl.u32 %v739, 7
          %v741 = vsub.s32 %v738, %v740
          %v742 = vrot.slane %v734, %v741
          %v744 = vunpack.c.l.s4 1934713408
          %v745 = vunpack.c.0.s8 %v744
          %v746 = vlaneseq
          %v747 = vshrl.u32 %v746, 7
          %v748 = vsub.s32 %v745, %v747
          %v749 = vrot.slane %v735, %v748
          %v750 = vcombine.high %v726, 0.0
          %v751 = vcombine.high %v733, 0.0
          %v752 = vcombine.high %v742, 0.0
          %v753 = vcombine.high %v749, 0.0
          %v754 = vcombine.low %v726, %v733
          %v756 = vunpack.c.l.s4 1983009808
          %v757 = vunpack.c.0.s8 %v756
          %v758 = vlaneseq
          %v759 = vshrl.u32 %v758, 7
          %v760 = vsub.s32 %v757, %v759
          %v761 = vrot.slane %v754, %v760
          %v762 = vcombine.low %v750, %v751
          %v764 = vunpack.c.l.s4 1983009808
          %v765 = vunpack.c.0.s8 %v764
          %v766 = vlaneseq
          %v767 = vshrl.u32 %v766, 7
          %v768 = vsub.s32 %v765, %v767
          %v769 = vrot.slane %v762, %v768
          %v770 = vcombine.low %v742, %v749
          %v772 = vunpack.c.l.s4 1983009808
          %v773 = vunpack.c.0.s8 %v772
          %v774 = vlaneseq
          %v775 = vshrl.u32 %v774, 7
          %v776 = vsub.s32 %v773, %v775
          %v777 = vrot.slane %v770, %v776
          %v778 = vcombine.low %v752, %v753
          %v780 = vunpack.c.l.s4 1983009808
          %v781 = vunpack.c.0.s8 %v780
          %v782 = vlaneseq
          %v783 = vshrl.u32 %v782, 7
          %v784 = vsub.s32 %v781, %v783
          %v785 = vrot.slane %v778, %v784
          %v786 = vcombine.low %v761, %v769
          %v787 = vcombine.high %v761, %v769
          %v789 = vunpack.c.l.s4 1934713408
          %v790 = vunpack.c.0.s8 %v789
          %v791 = vlaneseq
          %v792 = vshrl.u32 %v791, 7
          %v793 = vsub.s32 %v790, %v792
          %v794 = vrot.slane %v786, %v793
          %v796 = vunpack.c.l.s4 1934713408
          %v797 = vunpack.c.0.s8 %v796
          %v798 = vlaneseq
          %v799 = vshrl.u32 %v798, 7
          %v800 = vsub.s32 %v797, %v799
          %v801 = vrot.slane %v787, %v800
          %v802 = vcombine.low %v777, %v785
          %v803 = vcombine.high %v777, %v785
          %v805 = vunpack.c.l.s4 1934713408
          %v806 = vunpack.c.0.s8 %v805
          %v807 = vlaneseq
          %v808 = vshrl.u32 %v807, 7
          %v809 = vsub.s32 %v806, %v808
          %v810 = vrot.slane %v802, %v809
          %v812 = vunpack.c.l.s4 1934713408
          %v813 = vunpack.c.0.s8 %v812
          %v814 = vlaneseq
          %v815 = vshrl.u32 %v814, 7
          %v816 = vsub.s32 %v813, %v815
          %v817 = vrot.slane %v803, %v816
          %v818 = vcombine.low %v794, %v810
          %v819 = vcombine.high %v794, %v810
          %v820 = vcombine.low %v801, %v817
          %v821 = vcombine.high %v801, %v817
          %822 = vst.msk [vmem:[#allocation4] sm:$0xff] %vm517, %v818
          %823 = vst.msk [vmem:[#allocation4 + $0x8] sm:$0xff] %vm517, %v819
          %824 = vst.msk [vmem:[#allocation4 + $0x10] sm:$0xff] %vm517, %v820
          %825 = vst.msk [vmem:[#allocation4 + $0x18] sm:$0xff] %vm517, %v821
          %vm826 = vcmask 7168
          %827 = vst.msk [vmem:[#allocation6] sm:$0xff] %vm826, -inf
          %828 = vst.msk [vmem:[#allocation6 + $0x8] sm:$0xff] %vm826, -inf
          %829 = vst.msk [vmem:[#allocation6 + $0x10] sm:$0xff] %vm826, -inf
          %830 = vst.msk [vmem:[#allocation6 + $0x18] sm:$0xff] %vm826, -inf
          %831 = vst.msk [vmem:[#allocation7] sm:$0xff] %vm826, 0.0
          %832 = vst.msk [vmem:[#allocation7 + $0x8] sm:$0xff] %vm826, 0.0
          %833 = vst.msk [vmem:[#allocation7 + $0x10] sm:$0xff] %vm826, 0.0
          %834 = vst.msk [vmem:[#allocation7 + $0x18] sm:$0xff] %vm826, 0.0
          %835 = vst.msk [vmem:[#allocation5] sm:$0xff] %vm517, 0.0
          %836 = vst.msk [vmem:[#allocation5 + $0x8] sm:$0xff] %vm517, 0.0
          %837 = vst.msk [vmem:[#allocation5 + $0x10] sm:$0xff] %vm517, 0.0
          %838 = vst.msk [vmem:[#allocation5 + $0x18] sm:$0xff] %vm517, 0.0
        $region56: #{tpu_custom_call.1} parent=39 // pred_fallthru
          _
        %v839 = vld [vmem:[#allocation2] sm:$0xff]
        %v840 = vld [vmem:[#allocation2 + $0x8] sm:$0xff]
        %v841 = vld [vmem:[#allocation2 + $0x10] sm:$0xff]
        %v842 = vld [vmem:[#allocation2 + $0x18] sm:$0xff]
        %s843 = smul.u32 %s28, 32
        %s844 = scalar_lea.vmem [#allocation3], %s843
        %v845 = vld [vmem:[%s844] sm:$0xff]
        %v846 = vld [vmem:[%s844 + $0x8] sm:$0xff]
        %v847 = vld [vmem:[%s844 + $0x10] sm:$0xff]
        %v848 = vld [vmem:[%s844 + $0x18] sm:$0xff]
        %s849 = scalar_lea.vmem [#allocation4], %s843
        %v850 = vld [vmem:[%s849] sm:$0xff]
        %v851 = vld [vmem:[%s849 + $0x8] sm:$0xff]
        %v852 = vld [vmem:[%s849 + $0x10] sm:$0xff]
        %v853 = vld [vmem:[%s849 + $0x18] sm:$0xff]
        %vm854 = vcmask 64512
        %v856 = vsel %vm854, %v839, 0
        %v859 = vsel %vm854, %v845, 0
        %861 = vmatprep.subr.mxu0 0.0
        %862 = vmatpush1.xpose.msra.mxu0 %v859
        %863 = vmatprep.subr.mxu0 0.0
        %864 = vmatpush1.xpose.msra.mxu0 0.0
        %865 = vmatprep.subr.mxu0 0.0
        %866 = vmatpush1.xpose.msra.mxu0 0.0
        %867 = vmatprep.subr.mxu0 0.0
        %868 = vmatpush1.xpose.msra.mxu0 0.0
        %869 = vmatprep.subr.mxu0 0.0
        %870 = vmatpush1.xpose.msra.mxu0 0.0
        %871 = vmatprep.subr.mxu0 0.0
        %872 = vmatpush1.xpose.msra.mxu0 0.0
        %873 = vmatprep.subr.mxu0 0.0
        %874 = vmatpush1.xpose.msra.mxu0 0.0
        %875 = vmatprep.subr.mxu0 0.0
        %876 = vmatpush1.xpose.msra.mxu0 0.0
        %877 = vmatprep.subr.mxu0 0.0
        %878 = vmatpush1.xpose.msra.mxu0 0.0
        %879 = vmatprep.subr.mxu0 0.0
        %880 = vmatpush1.xpose.msra.mxu0 0.0
        %881 = vmatprep.subr.mxu0 0.0
        %882 = vmatpush1.xpose.msra.mxu0 0.0
        %883 = vmatprep.subr.mxu0 0.0
        %884 = vmatpush1.xpose.msra.mxu0 0.0
        %885 = vmatprep.subr.mxu0 0.0
        %886 = vmatpush1.xpose.msra.mxu0 0.0
        %887 = vmatprep.subr.mxu0 0.0
        %888 = vmatpush1.xpose.msra.mxu0 0.0
        %889 = vmatprep.subr.mxu0 0.0
        %890 = vmatpush1.xpose.msra.mxu0 0.0
        %891 = vmatprep.subr.mxu0 0.0
        %892 = vmatpush1.xpose.msra.mxu0 0.0
        %893 = vmatprep.subr.mxu0 0.0
        %894 = vmatpush1.xpose.msra.mxu0 0.0
        %895 = vmatprep.subr.mxu0 0.0
        %896 = vmatpush1.xpose.msra.mxu0 0.0
        %897 = vmatprep.subr.mxu0 0.0
        %898 = vmatpush1.xpose.msra.mxu0 0.0
        %899 = vmatprep.subr.mxu0 0.0
        %900 = vmatpush1.xpose.msra.mxu0 0.0
        %901 = vmatprep.subr.mxu0 0.0
        %902 = vmatpush1.xpose.msra.mxu0 0.0
        %903 = vmatprep.subr.mxu0 0.0
        %904 = vmatpush1.xpose.msra.mxu0 0.0
        %905 = vmatprep.subr.mxu0 0.0
        %906 = vmatpush1.xpose.msra.mxu0 0.0
        %907 = vmatprep.subr.mxu0 0.0
        %908 = vmatpush1.xpose.msra.mxu0 0.0
        %909 = vmatprep.subr.mxu0 0.0
        %910 = vmatpush1.xpose.msra.mxu0 0.0
        %911 = vmatprep.subr.mxu0 0.0
        %912 = vmatpush1.xpose.msra.mxu0 0.0
        %913 = vmatprep.subr.mxu0 0.0
        %914 = vmatpush1.xpose.msra.mxu0 0.0
        %915 = vmatprep.subr.mxu0 0.0
        %916 = vmatpush1.xpose.msra.mxu0 0.0
        %917 = vmatprep.subr.mxu0 0.0
        %918 = vmatpush1.xpose.msra.mxu0 0.0
        %919 = vmatprep.subr.mxu0 0.0
        %920 = vmatpush1.xpose.msra.mxu0 0.0
        %921 = vmatprep.subr.mxu0 0.0
        %922 = vmatpush1.xpose.msra.mxu0 0.0
        %923 = vmatprep.subr.mxu0 0.0
        %924 = vmatpush1.xpose.msra.mxu0 0.0
        %925 = vmatprep.mubr.f32.mxu0 0.0
        %926 = vmatmul.mubr.f32.gmra.mrb[0].mxu0 %v856
        %v927 = vpop.f32.mrb[0].mxu0
        %v928 = vadd.f32 0.0, %v927
        %v929 = vpop.f32.mrb[0].mxu0
        %930 = vdwg.mxu0
        %v932 = vsel %vm854, %v840, 0
        %v935 = vsel %vm854, %v846, 0
        %937 = vmatprep.subr.mxu0 0.0
        %938 = vmatpush1.xpose.msra.mxu0 %v935
        %939 = vmatprep.subr.mxu0 0.0
        %940 = vmatpush1.xpose.msra.mxu0 0.0
        %941 = vmatprep.subr.mxu0 0.0
        %942 = vmatpush1.xpose.msra.mxu0 0.0
        %943 = vmatprep.subr.mxu0 0.0
        %944 = vmatpush1.xpose.msra.mxu0 0.0
        %945 = vmatprep.subr.mxu0 0.0
        %946 = vmatpush1.xpose.msra.mxu0 0.0
        %947 = vmatprep.subr.mxu0 0.0
        %948 = vmatpush1.xpose.msra.mxu0 0.0
        %949 = vmatprep.subr.mxu0 0.0
        %950 = vmatpush1.xpose.msra.mxu0 0.0
        %951 = vmatprep.subr.mxu0 0.0
        %952 = vmatpush1.xpose.msra.mxu0 0.0
        %953 = vmatprep.subr.mxu0 0.0
        %954 = vmatpush1.xpose.msra.mxu0 0.0
        %955 = vmatprep.subr.mxu0 0.0
        %956 = vmatpush1.xpose.msra.mxu0 0.0
        %957 = vmatprep.subr.mxu0 0.0
        %958 = vmatpush1.xpose.msra.mxu0 0.0
        %959 = vmatprep.subr.mxu0 0.0
        %960 = vmatpush1.xpose.msra.mxu0 0.0
        %961 = vmatprep.subr.mxu0 0.0
        %962 = vmatpush1.xpose.msra.mxu0 0.0
        %963 = vmatprep.subr.mxu0 0.0
        %964 = vmatpush1.xpose.msra.mxu0 0.0
        %965 = vmatprep.subr.mxu0 0.0
        %966 = vmatpush1.xpose.msra.mxu0 0.0
        %967 = vmatprep.subr.mxu0 0.0
        %968 = vmatpush1.xpose.msra.mxu0 0.0
        %969 = vmatprep.subr.mxu0 0.0
        %970 = vmatpush1.xpose.msra.mxu0 0.0
        %971 = vmatprep.subr.mxu0 0.0
        %972 = vmatpush1.xpose.msra.mxu0 0.0
        %973 = vmatprep.subr.mxu0 0.0
        %974 = vmatpush1.xpose.msra.mxu0 0.0
        %975 = vmatprep.subr.mxu0 0.0
        %976 = vmatpush1.xpose.msra.mxu0 0.0
        %977 = vmatprep.subr.mxu0 0.0
        %978 = vmatpush1.xpose.msra.mxu0 0.0
        %979 = vmatprep.subr.mxu0 0.0
        %980 = vmatpush1.xpose.msra.mxu0 0.0
        %981 = vmatprep.subr.mxu0 0.0
        %982 = vmatpush1.xpose.msra.mxu0 0.0
        %983 = vmatprep.subr.mxu0 0.0
        %984 = vmatpush1.xpose.msra.mxu0 0.0
        %985 = vmatprep.subr.mxu0 0.0
        %986 = vmatpush1.xpose.msra.mxu0 0.0
        %987 = vmatprep.subr.mxu0 0.0
        %988 = vmatpush1.xpose.msra.mxu0 0.0
        %989 = vmatprep.subr.mxu0 0.0
        %990 = vmatpush1.xpose.msra.mxu0 0.0
        %991 = vmatprep.subr.mxu0 0.0
        %992 = vmatpush1.xpose.msra.mxu0 0.0
        %993 = vmatprep.subr.mxu0 0.0
        %994 = vmatpush1.xpose.msra.mxu0 0.0
        %995 = vmatprep.subr.mxu0 0.0
        %996 = vmatpush1.xpose.msra.mxu0 0.0
        %997 = vmatprep.subr.mxu0 0.0
        %998 = vmatpush1.xpose.msra.mxu0 0.0
        %999 = vmatprep.subr.mxu0 0.0
        %1000 = vmatpush1.xpose.msra.mxu0 0.0
        %1001 = vmatprep.mubr.f32.mxu0 0.0
        %1002 = vmatmul.mubr.f32.gmra.mrb[0].mxu0 %v932
        %v1003 = vpop.f32.mrb[0].mxu0
        %v1004 = vadd.f32 0.0, %v1003
        %v1005 = vpop.f32.mrb[0].mxu0
        %1006 = vdwg.mxu0
        %v1008 = vsel %vm854, %v841, 0
        %v1011 = vsel %vm854, %v847, 0
        %1013 = vmatprep.subr.mxu0 0.0
        %1014 = vmatpush1.xpose.msra.mxu0 %v1011
        %1015 = vmatprep.subr.mxu0 0.0
        %1016 = vmatpush1.xpose.msra.mxu0 0.0
        %1017 = vmatprep.subr.mxu0 0.0
        %1018 = vmatpush1.xpose.msra.mxu0 0.0
        %1019 = vmatprep.subr.mxu0 0.0
        %1020 = vmatpush1.xpose.msra.mxu0 0.0
        %1021 = vmatprep.subr.mxu0 0.0
        %1022 = vmatpush1.xpose.msra.mxu0 0.0
        %1023 = vmatprep.subr.mxu0 0.0
        %1024 = vmatpush1.xpose.msra.mxu0 0.0
        %1025 = vmatprep.subr.mxu0 0.0
        %1026 = vmatpush1.xpose.msra.mxu0 0.0
        %1027 = vmatprep.subr.mxu0 0.0
        %1028 = vmatpush1.xpose.msra.mxu0 0.0
        %1029 = vmatprep.subr.mxu0 0.0
        %1030 = vmatpush1.xpose.msra.mxu0 0.0
        %1031 = vmatprep.subr.mxu0 0.0
        %1032 = vmatpush1.xpose.msra.mxu0 0.0
        %1033 = vmatprep.subr.mxu0 0.0
        %1034 = vmatpush1.xpose.msra.mxu0 0.0
        %1035 = vmatprep.subr.mxu0 0.0
        %1036 = vmatpush1.xpose.msra.mxu0 0.0
        %1037 = vmatprep.subr.mxu0 0.0
        %1038 = vmatpush1.xpose.msra.mxu0 0.0
        %1039 = vmatprep.subr.mxu0 0.0
        %1040 = vmatpush1.xpose.msra.mxu0 0.0
        %1041 = vmatprep.subr.mxu0 0.0
        %1042 = vmatpush1.xpose.msra.mxu0 0.0
        %1043 = vmatprep.subr.mxu0 0.0
        %1044 = vmatpush1.xpose.msra.mxu0 0.0
        %1045 = vmatprep.subr.mxu0 0.0
        %1046 = vmatpush1.xpose.msra.mxu0 0.0
        %1047 = vmatprep.subr.mxu0 0.0
        %1048 = vmatpush1.xpose.msra.mxu0 0.0
        %1049 = vmatprep.subr.mxu0 0.0
        %1050 = vmatpush1.xpose.msra.mxu0 0.0
        %1051 = vmatprep.subr.mxu0 0.0
        %1052 = vmatpush1.xpose.msra.mxu0 0.0
        %1053 = vmatprep.subr.mxu0 0.0
        %1054 = vmatpush1.xpose.msra.mxu0 0.0
        %1055 = vmatprep.subr.mxu0 0.0
        %1056 = vmatpush1.xpose.msra.mxu0 0.0
        %1057 = vmatprep.subr.mxu0 0.0
        %1058 = vmatpush1.xpose.msra.mxu0 0.0
        %1059 = vmatprep.subr.mxu0 0.0
        %1060 = vmatpush1.xpose.msra.mxu0 0.0
        %1061 = vmatprep.subr.mxu0 0.0
        %1062 = vmatpush1.xpose.msra.mxu0 0.0
        %1063 = vmatprep.subr.mxu0 0.0
        %1064 = vmatpush1.xpose.msra.mxu0 0.0
        %1065 = vmatprep.subr.mxu0 0.0
        %1066 = vmatpush1.xpose.msra.mxu0 0.0
        %1067 = vmatprep.subr.mxu0 0.0
        %1068 = vmatpush1.xpose.msra.mxu0 0.0
        %1069 = vmatprep.subr.mxu0 0.0
        %1070 = vmatpush1.xpose.msra.mxu0 0.0
        %1071 = vmatprep.subr.mxu0 0.0
        %1072 = vmatpush1.xpose.msra.mxu0 0.0
        %1073 = vmatprep.subr.mxu0 0.0
        %1074 = vmatpush1.xpose.msra.mxu0 0.0
        %1075 = vmatprep.subr.mxu0 0.0
        %1076 = vmatpush1.xpose.msra.mxu0 0.0
        %1077 = vmatprep.mubr.f32.mxu0 0.0
        %1078 = vmatmul.mubr.f32.gmra.mrb[0].mxu0 %v1008
        %v1079 = vpop.f32.mrb[0].mxu0
        %v1080 = vadd.f32 0.0, %v1079
        %v1081 = vpop.f32.mrb[0].mxu0
        %1082 = vdwg.mxu0
        %v1084 = vsel %vm854, %v842, 0
        %v1087 = vsel %vm854, %v848, 0
        %1089 = vmatprep.subr.mxu0 0.0
        %1090 = vmatpush1.xpose.msra.mxu0 %v1087
        %1091 = vmatprep.subr.mxu0 0.0
        %1092 = vmatpush1.xpose.msra.mxu0 0.0
        %1093 = vmatprep.subr.mxu0 0.0
        %1094 = vmatpush1.xpose.msra.mxu0 0.0
        %1095 = vmatprep.subr.mxu0 0.0
        %1096 = vmatpush1.xpose.msra.mxu0 0.0
        %1097 = vmatprep.subr.mxu0 0.0
        %1098 = vmatpush1.xpose.msra.mxu0 0.0
        %1099 = vmatprep.subr.mxu0 0.0
        %1100 = vmatpush1.xpose.msra.mxu0 0.0
        %1101 = vmatprep.subr.mxu0 0.0
        %1102 = vmatpush1.xpose.msra.mxu0 0.0
        %1103 = vmatprep.subr.mxu0 0.0
        %1104 = vmatpush1.xpose.msra.mxu0 0.0
        %1105 = vmatprep.subr.mxu0 0.0
        %1106 = vmatpush1.xpose.msra.mxu0 0.0
        %1107 = vmatprep.subr.mxu0 0.0
        %1108 = vmatpush1.xpose.msra.mxu0 0.0
        %1109 = vmatprep.subr.mxu0 0.0
        %1110 = vmatpush1.xpose.msra.mxu0 0.0
        %1111 = vmatprep.subr.mxu0 0.0
        %1112 = vmatpush1.xpose.msra.mxu0 0.0
        %1113 = vmatprep.subr.mxu0 0.0
        %1114 = vmatpush1.xpose.msra.mxu0 0.0
        %1115 = vmatprep.subr.mxu0 0.0
        %1116 = vmatpush1.xpose.msra.mxu0 0.0
        %1117 = vmatprep.subr.mxu0 0.0
        %1118 = vmatpush1.xpose.msra.mxu0 0.0
        %1119 = vmatprep.subr.mxu0 0.0
        %1120 = vmatpush1.xpose.msra.mxu0 0.0
        %1121 = vmatprep.subr.mxu0 0.0
        %1122 = vmatpush1.xpose.msra.mxu0 0.0
        %1123 = vmatprep.subr.mxu0 0.0
        %1124 = vmatpush1.xpose.msra.mxu0 0.0
        %1125 = vmatprep.subr.mxu0 0.0
        %1126 = vmatpush1.xpose.msra.mxu0 0.0
        %1127 = vmatprep.subr.mxu0 0.0
        %1128 = vmatpush1.xpose.msra.mxu0 0.0
        %1129 = vmatprep.subr.mxu0 0.0
        %1130 = vmatpush1.xpose.msra.mxu0 0.0
        %1131 = vmatprep.subr.mxu0 0.0
        %1132 = vmatpush1.xpose.msra.mxu0 0.0
        %1133 = vmatprep.subr.mxu0 0.0
        %1134 = vmatpush1.xpose.msra.mxu0 0.0
        %1135 = vmatprep.subr.mxu0 0.0
        %1136 = vmatpush1.xpose.msra.mxu0 0.0
        %1137 = vmatprep.subr.mxu0 0.0
        %1138 = vmatpush1.xpose.msra.mxu0 0.0
        %1139 = vmatprep.subr.mxu0 0.0
        %1140 = vmatpush1.xpose.msra.mxu0 0.0
        %1141 = vmatprep.subr.mxu0 0.0
        %1142 = vmatpush1.xpose.msra.mxu0 0.0
        %1143 = vmatprep.subr.mxu0 0.0
        %1144 = vmatpush1.xpose.msra.mxu0 0.0
        %1145 = vmatprep.subr.mxu0 0.0
        %1146 = vmatpush1.xpose.msra.mxu0 0.0
        %1147 = vmatprep.subr.mxu0 0.0
        %1148 = vmatpush1.xpose.msra.mxu0 0.0
        %1149 = vmatprep.subr.mxu0 0.0
        %1150 = vmatpush1.xpose.msra.mxu0 0.0
        %1151 = vmatprep.subr.mxu0 0.0
        %1152 = vmatpush1.xpose.msra.mxu0 0.0
        %1153 = vmatprep.mubr.f32.mxu0 0.0
        %1154 = vmatmul.mubr.f32.gmra.mrb[0].mxu0 %v1084
        %v1155 = vpop.f32.mrb[0].mxu0
        %v1156 = vadd.f32 0.0, %v1155
        %v1157 = vpop.f32.mrb[0].mxu0
        %1158 = vdwg.mxu0
        %v1159 = vld [vmem:[#allocation6] sm:$0xff]
        %v1160 = vld [vmem:[#allocation6 + $0x8] sm:$0xff]
        %v1161 = vld [vmem:[#allocation6 + $0x10] sm:$0xff]
        %v1162 = vld [vmem:[#allocation6 + $0x18] sm:$0xff]
        %v1163 = vsel %vm854, %v928, -inf
        %1164 = vmax.xlane.f32.xlu0 %v1163
        %v1165 = vpop.xlane.xlu0 %1164
        %v1166 = vsel %vm854, %v1004, -inf
        %1167 = vmax.xlane.f32.xlu0 %v1166
        %v1168 = vpop.xlane.xlu0 %1167
        %v1169 = vsel %vm854, %v1080, -inf
        %1170 = vmax.xlane.f32.xlu0 %v1169
        %v1171 = vpop.xlane.xlu0 %1170
        %v1172 = vsel %vm854, %v1156, -inf
        %1173 = vmax.xlane.f32.xlu0 %v1172
        %v1174 = vpop.xlane.xlu0 %1173
        %v1175 = vmax.f32 %v1159, %v1165
        %v1176 = vmax.f32 %v1160, %v1168
        %v1177 = vmax.f32 %v1161, %v1171
        %v1178 = vmax.f32 %v1162, %v1174
        %v1179 = vsub.f32 %v1159, %v1175
        %v1180 = vsub.f32 %v1160, %v1176
        %v1181 = vsub.f32 %v1161, %v1177
        %v1182 = vsub.f32 %v1162, %v1178
        %v1183 = vmul.f32 %v1179, 1.442695
        %v1184 = vpow.pop %v1183
        %v1185 = vmul.f32 %v1180, 1.442695
        %v1186 = vpow.pop %v1185
        %v1187 = vmul.f32 %v1181, 1.442695
        %v1188 = vpow.pop %v1187
        %v1189 = vmul.f32 %v1182, 1.442695
        %v1190 = vpow.pop %v1189
        %1192 = vset.pattern.permute.xlu0 0
        %1193 = vperm.xlu0 %1192, %v1175
        %v1194 = vpop.permute.xlu0 %1193
        %1197 = vset.pattern.permute.xlu0 0
        %1198 = vperm.xlu0 %1197, %v1176
        %v1199 = vpop.permute.xlu0 %1198
        %1202 = vset.pattern.permute.xlu0 0
        %1203 = vperm.xlu0 %1202, %v1177
        %v1204 = vpop.permute.xlu0 %1203
        %1207 = vset.pattern.permute.xlu0 0
        %1208 = vperm.xlu0 %1207, %v1178
        %v1209 = vpop.permute.xlu0 %1208
        %v1211 = vsub.f32 %v928, %v1194
        %v1212 = vsub.f32 %v1004, %v1199
        %v1213 = vsub.f32 %v1080, %v1204
        %v1214 = vsub.f32 %v1156, %v1209
        %v1215 = vmul.f32 %v1211, 1.442695
        %v1216 = vpow.pop %v1215
        %v1217 = vmul.f32 %v1212, 1.442695
        %v1218 = vpow.pop %v1217
        %v1219 = vmul.f32 %v1213, 1.442695
        %v1220 = vpow.pop %v1219
        %v1221 = vmul.f32 %v1214, 1.442695
        %v1222 = vpow.pop %v1221
        %v1223 = vld [vmem:[#allocation7] sm:$0xff]
        %v1224 = vld [vmem:[#allocation7 + $0x8] sm:$0xff]
        %v1225 = vld [vmem:[#allocation7 + $0x10] sm:$0xff]
        %v1226 = vld [vmem:[#allocation7 + $0x18] sm:$0xff]
        %v1227 = vmul.f32 %v1184, %v1223
        %v1228 = vmul.f32 %v1186, %v1224
        %v1229 = vmul.f32 %v1188, %v1225
        %v1230 = vmul.f32 %v1190, %v1226
        %v1231 = vsel %vm854, %v1216, 0.0
        %1232 = vadd.xlane.f32.xlu0 %v1231
        %v1233 = vpop.xlane.xlu0 %1232
        %v1234 = vsel %vm854, %v1218, 0.0
        %1235 = vadd.xlane.f32.xlu0 %v1234
        %v1236 = vpop.xlane.xlu0 %1235
        %v1237 = vsel %vm854, %v1220, 0.0
        %1238 = vadd.xlane.f32.xlu0 %v1237
        %v1239 = vpop.xlane.xlu0 %1238
        %v1240 = vsel %vm854, %v1222, 0.0
        %1241 = vadd.xlane.f32.xlu0 %v1240
        %v1242 = vpop.xlane.xlu0 %1241
        %v1243 = vadd.f32 %v1227, %v1233
        %v1244 = vadd.f32 %v1228, %v1236
        %v1245 = vadd.f32 %v1229, %v1239
        %v1246 = vadd.f32 %v1230, %v1242
        %vm1247 = vcmask 7168
        %1248 = vst.msk [vmem:[#allocation7] sm:$0xff] %vm1247, %v1243
        %1249 = vst.msk [vmem:[#allocation7 + $0x8] sm:$0xff] %vm1247, %v1244
        %1250 = vst.msk [vmem:[#allocation7 + $0x10] sm:$0xff] %vm1247, %v1245
        %1251 = vst.msk [vmem:[#allocation7 + $0x18] sm:$0xff] %vm1247, %v1246
        %v1252 = vld [vmem:[#allocation5] sm:$0xff]
        %v1253 = vld [vmem:[#allocation5 + $0x8] sm:$0xff]
        %v1254 = vld [vmem:[#allocation5 + $0x10] sm:$0xff]
        %v1255 = vld [vmem:[#allocation5 + $0x18] sm:$0xff]
        %1257 = vset.pattern.permute.xlu0 0
        %1258 = vperm.xlu0 %1257, %v1184
        %v1259 = vpop.permute.xlu0 %1258
        %1262 = vset.pattern.permute.xlu0 0
        %1263 = vperm.xlu0 %1262, %v1186
        %v1264 = vpop.permute.xlu0 %1263
        %1267 = vset.pattern.permute.xlu0 0
        %1268 = vperm.xlu0 %1267, %v1188
        %v1269 = vpop.permute.xlu0 %1268
        %1272 = vset.pattern.permute.xlu0 0
        %1273 = vperm.xlu0 %1272, %v1190
        %v1274 = vpop.permute.xlu0 %1273
        %v1276 = vmul.f32 %v1259, %v1252
        %v1277 = vmul.f32 %v1264, %v1253
        %v1278 = vmul.f32 %v1269, %v1254
        %v1279 = vmul.f32 %v1274, %v1255
        %v1281 = vsel %vm854, %v1216, 0
        %1283 = vmatprep.subr.mxu0 0.0
        %1284 = vmatpush1.msra.mxu0 %v850
        %1285 = vmatprep.subr.mxu0 0.0
        %1286 = vmatpush1.msra.mxu0 0.0
        %1287 = vmatprep.subr.mxu0 0.0
        %1288 = vmatpush1.msra.mxu0 0.0
        %1289 = vmatprep.subr.mxu0 0.0
        %1290 = vmatpush1.msra.mxu0 0.0
        %1291 = vmatprep.subr.mxu0 0.0
        %1292 = vmatpush1.msra.mxu0 0.0
        %1293 = vmatprep.subr.mxu0 0.0
        %1294 = vmatpush1.msra.mxu0 0.0
        %1295 = vmatprep.subr.mxu0 0.0
        %1296 = vmatpush1.msra.mxu0 0.0
        %1297 = vmatprep.subr.mxu0 0.0
        %1298 = vmatpush1.msra.mxu0 0.0
        %1299 = vmatprep.subr.mxu0 0.0
        %1300 = vmatpush1.msra.mxu0 0.0
        %1301 = vmatprep.subr.mxu0 0.0
        %1302 = vmatpush1.msra.mxu0 0.0
        %1303 = vmatprep.subr.mxu0 0.0
        %1304 = vmatpush1.msra.mxu0 0.0
        %1305 = vmatprep.subr.mxu0 0.0
        %1306 = vmatpush1.msra.mxu0 0.0
        %1307 = vmatprep.subr.mxu0 0.0
        %1308 = vmatpush1.msra.mxu0 0.0
        %1309 = vmatprep.subr.mxu0 0.0
        %1310 = vmatpush1.msra.mxu0 0.0
        %1311 = vmatprep.subr.mxu0 0.0
        %1312 = vmatpush1.msra.mxu0 0.0
        %1313 = vmatprep.subr.mxu0 0.0
        %1314 = vmatpush1.msra.mxu0 0.0
        %1315 = vmatprep.subr.mxu0 0.0
        %1316 = vmatpush1.msra.mxu0 0.0
        %1317 = vmatprep.subr.mxu0 0.0
        %1318 = vmatpush1.msra.mxu0 0.0
        %1319 = vmatprep.subr.mxu0 0.0
        %1320 = vmatpush1.msra.mxu0 0.0
        %1321 = vmatprep.subr.mxu0 0.0
        %1322 = vmatpush1.msra.mxu0 0.0
        %1323 = vmatprep.subr.mxu0 0.0
        %1324 = vmatpush1.msra.mxu0 0.0
        %1325 = vmatprep.subr.mxu0 0.0
        %1326 = vmatpush1.msra.mxu0 0.0
        %1327 = vmatprep.subr.mxu0 0.0
        %1328 = vmatpush1.msra.mxu0 0.0
        %1329 = vmatprep.subr.mxu0 0.0
        %1330 = vmatpush1.msra.mxu0 0.0
        %1331 = vmatprep.subr.mxu0 0.0
        %1332 = vmatpush1.msra.mxu0 0.0
        %1333 = vmatprep.subr.mxu0 0.0
        %1334 = vmatpush1.msra.mxu0 0.0
        %1335 = vmatprep.subr.mxu0 0.0
        %1336 = vmatpush1.msra.mxu0 0.0
        %1337 = vmatprep.subr.mxu0 0.0
        %1338 = vmatpush1.msra.mxu0 0.0
        %1339 = vmatprep.subr.mxu0 0.0
        %1340 = vmatpush1.msra.mxu0 0.0
        %1341 = vmatprep.subr.mxu0 0.0
        %1342 = vmatpush1.msra.mxu0 0.0
        %1343 = vmatprep.subr.mxu0 0.0
        %1344 = vmatpush1.msra.mxu0 0.0
        %1345 = vmatprep.subr.mxu0 0.0
        %1346 = vmatpush1.msra.mxu0 0.0
        %1347 = vmatprep.mubr.f32.mxu0 0.0
        %1348 = vmatmul.mubr.f32.gmra.mrb[0].mxu0 %v1281
        %v1349 = vpop.f32.mrb[0].mxu0
        %v1350 = vadd.f32 0.0, %v1349
        %v1351 = vpop.f32.mrb[0].mxu0
        %1352 = vdwg.mxu0
        %v1354 = vsel %vm854, %v1218, 0
        %1356 = vmatprep.subr.mxu0 0.0
        %1357 = vmatpush1.msra.mxu0 %v851
        %1358 = vmatprep.subr.mxu0 0.0
        %1359 = vmatpush1.msra.mxu0 0.0
        %1360 = vmatprep.subr.mxu0 0.0
        %1361 = vmatpush1.msra.mxu0 0.0
        %1362 = vmatprep.subr.mxu0 0.0
        %1363 = vmatpush1.msra.mxu0 0.0
        %1364 = vmatprep.subr.mxu0 0.0
        %1365 = vmatpush1.msra.mxu0 0.0
        %1366 = vmatprep.subr.mxu0 0.0
        %1367 = vmatpush1.msra.mxu0 0.0
        %1368 = vmatprep.subr.mxu0 0.0
        %1369 = vmatpush1.msra.mxu0 0.0
        %1370 = vmatprep.subr.mxu0 0.0
        %1371 = vmatpush1.msra.mxu0 0.0
        %1372 = vmatprep.subr.mxu0 0.0
        %1373 = vmatpush1.msra.mxu0 0.0
        %1374 = vmatprep.subr.mxu0 0.0
        %1375 = vmatpush1.msra.mxu0 0.0
        %1376 = vmatprep.subr.mxu0 0.0
        %1377 = vmatpush1.msra.mxu0 0.0
        %1378 = vmatprep.subr.mxu0 0.0
        %1379 = vmatpush1.msra.mxu0 0.0
        %1380 = vmatprep.subr.mxu0 0.0
        %1381 = vmatpush1.msra.mxu0 0.0
        %1382 = vmatprep.subr.mxu0 0.0
        %1383 = vmatpush1.msra.mxu0 0.0
        %1384 = vmatprep.subr.mxu0 0.0
        %1385 = vmatpush1.msra.mxu0 0.0
        %1386 = vmatprep.subr.mxu0 0.0
        %1387 = vmatpush1.msra.mxu0 0.0
        %1388 = vmatprep.subr.mxu0 0.0
        %1389 = vmatpush1.msra.mxu0 0.0
        %1390 = vmatprep.subr.mxu0 0.0
        %1391 = vmatpush1.msra.mxu0 0.0
        %1392 = vmatprep.subr.mxu0 0.0
        %1393 = vmatpush1.msra.mxu0 0.0
        %1394 = vmatprep.subr.mxu0 0.0
        %1395 = vmatpush1.msra.mxu0 0.0
        %1396 = vmatprep.subr.mxu0 0.0
        %1397 = vmatpush1.msra.mxu0 0.0
        %1398 = vmatprep.subr.mxu0 0.0
        %1399 = vmatpush1.msra.mxu0 0.0
        %1400 = vmatprep.subr.mxu0 0.0
        %1401 = vmatpush1.msra.mxu0 0.0
        %1402 = vmatprep.subr.mxu0 0.0
        %1403 = vmatpush1.msra.mxu0 0.0
        %1404 = vmatprep.subr.mxu0 0.0
        %1405 = vmatpush1.msra.mxu0 0.0
        %1406 = vmatprep.subr.mxu0 0.0
        %1407 = vmatpush1.msra.mxu0 0.0
        %1408 = vmatprep.subr.mxu0 0.0
        %1409 = vmatpush1.msra.mxu0 0.0
        %1410 = vmatprep.subr.mxu0 0.0
        %1411 = vmatpush1.msra.mxu0 0.0
        %1412 = vmatprep.subr.mxu0 0.0
        %1413 = vmatpush1.msra.mxu0 0.0
        %1414 = vmatprep.subr.mxu0 0.0
        %1415 = vmatpush1.msra.mxu0 0.0
        %1416 = vmatprep.subr.mxu0 0.0
        %1417 = vmatpush1.msra.mxu0 0.0
        %1418 = vmatprep.subr.mxu0 0.0
        %1419 = vmatpush1.msra.mxu0 0.0
        %1420 = vmatprep.mubr.f32.mxu0 0.0
        %1421 = vmatmul.mubr.f32.gmra.mrb[0].mxu0 %v1354
        %v1422 = vpop.f32.mrb[0].mxu0
        %v1423 = vadd.f32 0.0, %v1422
        %v1424 = vpop.f32.mrb[0].mxu0
        %1425 = vdwg.mxu0
        %v1427 = vsel %vm854, %v1220, 0
        %1429 = vmatprep.subr.mxu0 0.0
        %1430 = vmatpush1.msra.mxu0 %v852
        %1431 = vmatprep.subr.mxu0 0.0
        %1432 = vmatpush1.msra.mxu0 0.0
        %1433 = vmatprep.subr.mxu0 0.0
        %1434 = vmatpush1.msra.mxu0 0.0
        %1435 = vmatprep.subr.mxu0 0.0
        %1436 = vmatpush1.msra.mxu0 0.0
        %1437 = vmatprep.subr.mxu0 0.0
        %1438 = vmatpush1.msra.mxu0 0.0
        %1439 = vmatprep.subr.mxu0 0.0
        %1440 = vmatpush1.msra.mxu0 0.0
        %1441 = vmatprep.subr.mxu0 0.0
        %1442 = vmatpush1.msra.mxu0 0.0
        %1443 = vmatprep.subr.mxu0 0.0
        %1444 = vmatpush1.msra.mxu0 0.0
        %1445 = vmatprep.subr.mxu0 0.0
        %1446 = vmatpush1.msra.mxu0 0.0
        %1447 = vmatprep.subr.mxu0 0.0
        %1448 = vmatpush1.msra.mxu0 0.0
        %1449 = vmatprep.subr.mxu0 0.0
        %1450 = vmatpush1.msra.mxu0 0.0
        %1451 = vmatprep.subr.mxu0 0.0
        %1452 = vmatpush1.msra.mxu0 0.0
        %1453 = vmatprep.subr.mxu0 0.0
        %1454 = vmatpush1.msra.mxu0 0.0
        %1455 = vmatprep.subr.mxu0 0.0
        %1456 = vmatpush1.msra.mxu0 0.0
        %1457 = vmatprep.subr.mxu0 0.0
        %1458 = vmatpush1.msra.mxu0 0.0
        %1459 = vmatprep.subr.mxu0 0.0
        %1460 = vmatpush1.msra.mxu0 0.0
        %1461 = vmatprep.subr.mxu0 0.0
        %1462 = vmatpush1.msra.mxu0 0.0
        %1463 = vmatprep.subr.mxu0 0.0
        %1464 = vmatpush1.msra.mxu0 0.0
        %1465 = vmatprep.subr.mxu0 0.0
        %1466 = vmatpush1.msra.mxu0 0.0
        %1467 = vmatprep.subr.mxu0 0.0
        %1468 = vmatpush1.msra.mxu0 0.0
        %1469 = vmatprep.subr.mxu0 0.0
        %1470 = vmatpush1.msra.mxu0 0.0
        %1471 = vmatprep.subr.mxu0 0.0
        %1472 = vmatpush1.msra.mxu0 0.0
        %1473 = vmatprep.subr.mxu0 0.0
        %1474 = vmatpush1.msra.mxu0 0.0
        %1475 = vmatprep.subr.mxu0 0.0
        %1476 = vmatpush1.msra.mxu0 0.0
        %1477 = vmatprep.subr.mxu0 0.0
        %1478 = vmatpush1.msra.mxu0 0.0
        %1479 = vmatprep.subr.mxu0 0.0
        %1480 = vmatpush1.msra.mxu0 0.0
        %1481 = vmatprep.subr.mxu0 0.0
        %1482 = vmatpush1.msra.mxu0 0.0
        %1483 = vmatprep.subr.mxu0 0.0
        %1484 = vmatpush1.msra.mxu0 0.0
        %1485 = vmatprep.subr.mxu0 0.0
        %1486 = vmatpush1.msra.mxu0 0.0
        %1487 = vmatprep.subr.mxu0 0.0
        %1488 = vmatpush1.msra.mxu0 0.0
        %1489 = vmatprep.subr.mxu0 0.0
        %1490 = vmatpush1.msra.mxu0 0.0
        %1491 = vmatprep.subr.mxu0 0.0
        %1492 = vmatpush1.msra.mxu0 0.0
        %1493 = vmatprep.mubr.f32.mxu0 0.0
        %1494 = vmatmul.mubr.f32.gmra.mrb[0].mxu0 %v1427
        %v1495 = vpop.f32.mrb[0].mxu0
        %v1496 = vadd.f32 0.0, %v1495
        %v1497 = vpop.f32.mrb[0].mxu0
        %1498 = vdwg.mxu0
        %v1500 = vsel %vm854, %v1222, 0
        %1502 = vmatprep.subr.mxu0 0.0
        %1503 = vmatpush1.msra.mxu0 %v853
        %1504 = vmatprep.subr.mxu0 0.0
        %1505 = vmatpush1.msra.mxu0 0.0
        %1506 = vmatprep.subr.mxu0 0.0
        %1507 = vmatpush1.msra.mxu0 0.0
        %1508 = vmatprep.subr.mxu0 0.0
        %1509 = vmatpush1.msra.mxu0 0.0
        %1510 = vmatprep.subr.mxu0 0.0
        %1511 = vmatpush1.msra.mxu0 0.0
        %1512 = vmatprep.subr.mxu0 0.0
        %1513 = vmatpush1.msra.mxu0 0.0
        %1514 = vmatprep.subr.mxu0 0.0
        %1515 = vmatpush1.msra.mxu0 0.0
        %1516 = vmatprep.subr.mxu0 0.0
        %1517 = vmatpush1.msra.mxu0 0.0
        %1518 = vmatprep.subr.mxu0 0.0
        %1519 = vmatpush1.msra.mxu0 0.0
        %1520 = vmatprep.subr.mxu0 0.0
        %1521 = vmatpush1.msra.mxu0 0.0
        %1522 = vmatprep.subr.mxu0 0.0
        %1523 = vmatpush1.msra.mxu0 0.0
        %1524 = vmatprep.subr.mxu0 0.0
        %1525 = vmatpush1.msra.mxu0 0.0
        %1526 = vmatprep.subr.mxu0 0.0
        %1527 = vmatpush1.msra.mxu0 0.0
        %1528 = vmatprep.subr.mxu0 0.0
        %1529 = vmatpush1.msra.mxu0 0.0
        %1530 = vmatprep.subr.mxu0 0.0
        %1531 = vmatpush1.msra.mxu0 0.0
        %1532 = vmatprep.subr.mxu0 0.0
        %1533 = vmatpush1.msra.mxu0 0.0
        %1534 = vmatprep.subr.mxu0 0.0
        %1535 = vmatpush1.msra.mxu0 0.0
        %1536 = vmatprep.subr.mxu0 0.0
        %1537 = vmatpush1.msra.mxu0 0.0
        %1538 = vmatprep.subr.mxu0 0.0
        %1539 = vmatpush1.msra.mxu0 0.0
        %1540 = vmatprep.subr.mxu0 0.0
        %1541 = vmatpush1.msra.mxu0 0.0
        %1542 = vmatprep.subr.mxu0 0.0
        %1543 = vmatpush1.msra.mxu0 0.0
        %1544 = vmatprep.subr.mxu0 0.0
        %1545 = vmatpush1.msra.mxu0 0.0
        %1546 = vmatprep.subr.mxu0 0.0
        %1547 = vmatpush1.msra.mxu0 0.0
        %1548 = vmatprep.subr.mxu0 0.0
        %1549 = vmatpush1.msra.mxu0 0.0
        %1550 = vmatprep.subr.mxu0 0.0
        %1551 = vmatpush1.msra.mxu0 0.0
        %1552 = vmatprep.subr.mxu0 0.0
        %1553 = vmatpush1.msra.mxu0 0.0
        %1554 = vmatprep.subr.mxu0 0.0
        %1555 = vmatpush1.msra.mxu0 0.0
        %1556 = vmatprep.subr.mxu0 0.0
        %1557 = vmatpush1.msra.mxu0 0.0
        %1558 = vmatprep.subr.mxu0 0.0
        %1559 = vmatpush1.msra.mxu0 0.0
        %1560 = vmatprep.subr.mxu0 0.0
        %1561 = vmatpush1.msra.mxu0 0.0
        %1562 = vmatprep.subr.mxu0 0.0
        %1563 = vmatpush1.msra.mxu0 0.0
        %1564 = vmatprep.subr.mxu0 0.0
        %1565 = vmatpush1.msra.mxu0 0.0
        %1566 = vmatprep.mubr.f32.mxu0 0.0
        %1567 = vmatmul.mubr.f32.gmra.mrb[0].mxu0 %v1500
        %v1568 = vpop.f32.mrb[0].mxu0
        %v1569 = vadd.f32 0.0, %v1568
        %v1570 = vpop.f32.mrb[0].mxu0
        %1571 = vdwg.mxu0
        %v1572 = vadd.f32 %v1276, %v1350
        %v1573 = vadd.f32 %v1277, %v1423
        %v1574 = vadd.f32 %v1278, %v1496
        %v1575 = vadd.f32 %v1279, %v1569
        %1576 = vst.msk [vmem:[#allocation5] sm:$0xff] %vm854, %v1572
        %1577 = vst.msk [vmem:[#allocation5 + $0x8] sm:$0xff] %vm854, %v1573
        %1578 = vst.msk [vmem:[#allocation5 + $0x10] sm:$0xff] %vm854, %v1574
        %1579 = vst.msk [vmem:[#allocation5 + $0x18] sm:$0xff] %vm854, %v1575
        %1580 = vst.msk [vmem:[#allocation6] sm:$0xff] %vm1247, %v1175
        %1581 = vst.msk [vmem:[#allocation6 + $0x8] sm:$0xff] %vm1247, %v1176
        %1582 = vst.msk [vmem:[#allocation6 + $0x10] sm:$0xff] %vm1247, %v1177
        %1583 = vst.msk [vmem:[#allocation6 + $0x18] sm:$0xff] %vm1247, %v1178
        // Predicated region
        $region57: #{tpu_custom_call.1} parent=39 // pred_check
          %p1584 = pneg %p281
        $region58: #{tpu_custom_call.1} parent=39 // pred_check_branch
          %1586 = sbr.rel (%p1584) target = $region60
        $region59: #{tpu_custom_call.1} parent=39 // pred_region
          %v1587 = vld [vmem:[#allocation5] sm:$0xff]
          %v1588 = vld [vmem:[#allocation5 + $0x8] sm:$0xff]
          %v1589 = vld [vmem:[#allocation5 + $0x10] sm:$0xff]
          %v1590 = vld [vmem:[#allocation5 + $0x18] sm:$0xff]
          %v1591 = vld [vmem:[#allocation7] sm:$0xff]
          %v1592 = vld [vmem:[#allocation7 + $0x8] sm:$0xff]
          %v1593 = vld [vmem:[#allocation7 + $0x10] sm:$0xff]
          %v1594 = vld [vmem:[#allocation7 + $0x18] sm:$0xff]
          %1596 = vset.pattern.permute.xlu0 0
          %1597 = vperm.xlu0 %1596, %v1591
          %v1598 = vpop.permute.xlu0 %1597
          %1601 = vset.pattern.permute.xlu0 0
          %1602 = vperm.xlu0 %1601, %v1592
          %v1603 = vpop.permute.xlu0 %1602
          %1606 = vset.pattern.permute.xlu0 0
          %1607 = vperm.xlu0 %1606, %v1593
          %v1608 = vpop.permute.xlu0 %1607
          %1611 = vset.pattern.permute.xlu0 0
          %1612 = vperm.xlu0 %1611, %v1594
          %v1613 = vpop.permute.xlu0 %1612
          %v1615 = vrcp.pop %v1598
          %v1616 = vmul.f32 %v1587, %v1615
          %v1617 = vrcp.pop %v1603
          %v1618 = vmul.f32 %v1588, %v1617
          %v1619 = vrcp.pop %v1608
          %v1620 = vmul.f32 %v1589, %v1619
          %v1621 = vrcp.pop %v1613
          %v1622 = vmul.f32 %v1590, %v1621
          %v1623 = vcombine.low %v1616, %v1620
          %v1624 = vcombine.high %v1616, %v1620
          %v1626 = vunpack.c.l.s4 1983009808
          %v1627 = vunpack.c.0.s8 %v1626
          %v1628 = vlaneseq
          %v1629 = vshrl.u32 %v1628, 7
          %v1630 = vsub.s32 %v1627, %v1629
          %v1631 = vrot.slane %v1623, %v1630
          %v1633 = vunpack.c.l.s4 1983009808
          %v1634 = vunpack.c.0.s8 %v1633
          %v1635 = vlaneseq
          %v1636 = vshrl.u32 %v1635, 7
          %v1637 = vsub.s32 %v1634, %v1636
          %v1638 = vrot.slane %v1624, %v1637
          %v1639 = vcombine.low %v1618, %v1622
          %v1640 = vcombine.high %v1618, %v1622
          %v1642 = vunpack.c.l.s4 1983009808
          %v1643 = vunpack.c.0.s8 %v1642
          %v1644 = vlaneseq
          %v1645 = vshrl.u32 %v1644, 7
          %v1646 = vsub.s32 %v1643, %v1645
          %v1647 = vrot.slane %v1639, %v1646
          %v1649 = vunpack.c.l.s4 1983009808
          %v1650 = vunpack.c.0.s8 %v1649
          %v1651 = vlaneseq
          %v1652 = vshrl.u32 %v1651, 7
          %v1653 = vsub.s32 %v1650, %v1652
          %v1654 = vrot.slane %v1640, %v1653
          %v1655 = vcombine.low %v1631, %v1647
          %v1656 = vcombine.high %v1631, %v1647
          %v1658 = vunpack.c.l.s4 1934713408
          %v1659 = vunpack.c.0.s8 %v1658
          %v1660 = vlaneseq
          %v1661 = vshrl.u32 %v1660, 7
          %v1662 = vsub.s32 %v1659, %v1661
          %v1663 = vrot.slane %v1655, %v1662
          %v1665 = vunpack.c.l.s4 1934713408
          %v1666 = vunpack.c.0.s8 %v1665
          %v1667 = vlaneseq
          %v1668 = vshrl.u32 %v1667, 7
          %v1669 = vsub.s32 %v1666, %v1668
          %v1670 = vrot.slane %v1656, %v1669
          %v1671 = vcombine.low %v1638, %v1654
          %v1672 = vcombine.high %v1638, %v1654
          %v1674 = vunpack.c.l.s4 1934713408
          %v1675 = vunpack.c.0.s8 %v1674
          %v1676 = vlaneseq
          %v1677 = vshrl.u32 %v1676, 7
          %v1678 = vsub.s32 %v1675, %v1677
          %v1679 = vrot.slane %v1671, %v1678
          %v1681 = vunpack.c.l.s4 1934713408
          %v1682 = vunpack.c.0.s8 %v1681
          %v1683 = vlaneseq
          %v1684 = vshrl.u32 %v1683, 7
          %v1685 = vsub.s32 %v1682, %v1684
          %v1686 = vrot.slane %v1672, %v1685
          %v1687 = vcombine.high %v1663, 0.0
          %v1688 = vcombine.high %v1670, 0.0
          %v1689 = vcombine.high %v1679, 0.0
          %v1690 = vcombine.high %v1686, 0.0
          %v1691 = vcombine.low %v1663, %v1670
          %v1693 = vunpack.c.l.s4 1983009808
          %v1694 = vunpack.c.0.s8 %v1693
          %v1695 = vlaneseq
          %v1696 = vshrl.u32 %v1695, 7
          %v1697 = vsub.s32 %v1694, %v1696
          %v1698 = vrot.slane %v1691, %v1697
          %v1699 = vcombine.low %v1687, %v1688
          %v1701 = vunpack.c.l.s4 1983009808
          %v1702 = vunpack.c.0.s8 %v1701
          %v1703 = vlaneseq
          %v1704 = vshrl.u32 %v1703, 7
          %v1705 = vsub.s32 %v1702, %v1704
          %v1706 = vrot.slane %v1699, %v1705
          %v1707 = vcombine.low %v1679, %v1686
          %v1709 = vunpack.c.l.s4 1983009808
          %v1710 = vunpack.c.0.s8 %v1709
          %v1711 = vlaneseq
          %v1712 = vshrl.u32 %v1711, 7
          %v1713 = vsub.s32 %v1710, %v1712
          %v1714 = vrot.slane %v1707, %v1713
          %v1715 = vcombine.low %v1689, %v1690
          %v1717 = vunpack.c.l.s4 1983009808
          %v1718 = vunpack.c.0.s8 %v1717
          %v1719 = vlaneseq
          %v1720 = vshrl.u32 %v1719, 7
          %v1721 = vsub.s32 %v1718, %v1720
          %v1722 = vrot.slane %v1715, %v1721
          %v1723 = vcombine.low %v1698, %v1706
          %v1724 = vcombine.high %v1698, %v1706
          %v1726 = vunpack.c.l.s4 1934713408
          %v1727 = vunpack.c.0.s8 %v1726
          %v1728 = vlaneseq
          %v1729 = vshrl.u32 %v1728, 7
          %v1730 = vsub.s32 %v1727, %v1729
          %v1731 = vrot.slane %v1723, %v1730
          %v1733 = vunpack.c.l.s4 1934713408
          %v1734 = vunpack.c.0.s8 %v1733
          %v1735 = vlaneseq
          %v1736 = vshrl.u32 %v1735, 7
          %v1737 = vsub.s32 %v1734, %v1736
          %v1738 = vrot.slane %v1724, %v1737
          %v1739 = vcombine.low %v1714, %v1722
          %v1740 = vcombine.high %v1714, %v1722
          %v1742 = vunpack.c.l.s4 1934713408
          %v1743 = vunpack.c.0.s8 %v1742
          %v1744 = vlaneseq
          %v1745 = vshrl.u32 %v1744, 7
          %v1746 = vsub.s32 %v1743, %v1745
          %v1747 = vrot.slane %v1739, %v1746
          %v1749 = vunpack.c.l.s4 1934713408
          %v1750 = vunpack.c.0.s8 %v1749
          %v1751 = vlaneseq
          %v1752 = vshrl.u32 %v1751, 7
          %v1753 = vsub.s32 %v1750, %v1752
          %v1754 = vrot.slane %v1740, %v1753
          %v1755 = vcombine.low %v1731, %v1747
          %v1756 = vcombine.high %v1731, %v1747
          %v1757 = vcombine.low %v1738, %v1754
          %v1758 = vcombine.high %v1738, %v1754
          %1760 = vrot.lane.b32.xlu0 %v1756, 8
          %v1761 = vpop.permute.xlu0 %1760
          %1764 = vrot.lane.b32.xlu0 %v1757, 16
          %v1765 = vpop.permute.xlu0 %1764
          %1768 = vrot.lane.b32.xlu0 %v1758, 24
          %v1769 = vpop.permute.xlu0 %1768
          %v1771 = vsel %vm854, %v1755, %v1761
          %vm1772 = vcmask 130048
          %v1773 = vsel %vm1772, %v1771, %v1765
          %vm1774 = vcmask 195584
          %v1775 = vsel %vm1774, %v1773, %v1769
          %v1776 = vld [vmem:[#allocation13] sm:$0xff]
          %v1777 = vld [vmem:[#allocation13 + $0x8] sm:$0xff]
          %v1778 = vld [vmem:[#allocation13 + $0x10] sm:$0xff]
          %v1779 = vld [vmem:[#allocation13 + $0x18] sm:$0xff]
          %v1780 = vld [vmem:[%s4] sm:$0x1]
          %v1782 = vlaneseq
          %v1783 = vshrl.u32 %v1782, 7
          %v1784 = vsub.s32 0, %v1783
          %v1785 = vrot.slane %v1780, %v1784
          %vm1787 = vcmask 261120
          %v1789 = vsel %vm1787, %v1775, 0
          %1791 = vmatprep.subr.mxu0 0.0
          %1792 = vmatpush1.msra.mxu0 %v1776
          %1793 = vmatprep.subr.mxu0 0.0
          %1794 = vmatpush1.msra.mxu0 %v1777
          %1795 = vmatprep.subr.mxu0 0.0
          %1796 = vmatpush1.msra.mxu0 %v1778
          %1797 = vmatprep.subr.mxu0 0.0
          %1798 = vmatpush1.msra.mxu0 %v1779
          %1799 = vmatprep.subr.mxu0 0.0
          %1800 = vmatpush1.msra.mxu0 0.0
          %1801 = vmatprep.subr.mxu0 0.0
          %1802 = vmatpush1.msra.mxu0 0.0
          %1803 = vmatprep.subr.mxu0 0.0
          %1804 = vmatpush1.msra.mxu0 0.0
          %1805 = vmatprep.subr.mxu0 0.0
          %1806 = vmatpush1.msra.mxu0 0.0
          %1807 = vmatprep.subr.mxu0 0.0
          %1808 = vmatpush1.msra.mxu0 0.0
          %1809 = vmatprep.subr.mxu0 0.0
          %1810 = vmatpush1.msra.mxu0 0.0
          %1811 = vmatprep.subr.mxu0 0.0
          %1812 = vmatpush1.msra.mxu0 0.0
          %1813 = vmatprep.subr.mxu0 0.0
          %1814 = vmatpush1.msra.mxu0 0.0
          %1815 = vmatprep.subr.mxu0 0.0
          %1816 = vmatpush1.msra.mxu0 0.0
          %1817 = vmatprep.subr.mxu0 0.0
          %1818 = vmatpush1.msra.mxu0 0.0
          %1819 = vmatprep.subr.mxu0 0.0
          %1820 = vmatpush1.msra.mxu0 0.0
          %1821 = vmatprep.subr.mxu0 0.0
          %1822 = vmatpush1.msra.mxu0 0.0
          %1823 = vmatprep.subr.mxu0 0.0
          %1824 = vmatpush1.msra.mxu0 0.0
          %1825 = vmatprep.subr.mxu0 0.0
          %1826 = vmatpush1.msra.mxu0 0.0
          %1827 = vmatprep.subr.mxu0 0.0
          %1828 = vmatpush1.msra.mxu0 0.0
          %1829 = vmatprep.subr.mxu0 0.0
          %1830 = vmatpush1.msra.mxu0 0.0
          %1831 = vmatprep.subr.mxu0 0.0
          %1832 = vmatpush1.msra.mxu0 0.0
          %1833 = vmatprep.subr.mxu0 0.0
          %1834 = vmatpush1.msra.mxu0 0.0
          %1835 = vmatprep.subr.mxu0 0.0
          %1836 = vmatpush1.msra.mxu0 0.0
          %1837 = vmatprep.subr.mxu0 0.0
          %1838 = vmatpush1.msra.mxu0 0.0
          %1839 = vmatprep.subr.mxu0 0.0
          %1840 = vmatpush1.msra.mxu0 0.0
          %1841 = vmatprep.subr.mxu0 0.0
          %1842 = vmatpush1.msra.mxu0 0.0
          %1843 = vmatprep.subr.mxu0 0.0
          %1844 = vmatpush1.msra.mxu0 0.0
          %1845 = vmatprep.subr.mxu0 0.0
          %1846 = vmatpush1.msra.mxu0 0.0
          %1847 = vmatprep.subr.mxu0 0.0
          %1848 = vmatpush1.msra.mxu0 0.0
          %1849 = vmatprep.subr.mxu0 0.0
          %1850 = vmatpush1.msra.mxu0 0.0
          %1851 = vmatprep.subr.mxu0 0.0
          %1852 = vmatpush1.msra.mxu0 0.0
          %1853 = vmatprep.subr.mxu0 0.0
          %1854 = vmatpush1.msra.mxu0 0.0
          %1855 = vmatprep.mubr.f32.mxu0 0.0
          %1856 = vmatmul.mubr.f32.gmra.mrb[0].mxu0 %v1789
          %v1857 = vpop.f32.mrb[0].mxu0
          %v1858 = vadd.f32 %v1785, %v1857
          %v1859 = vpop.f32.mrb[0].mxu0
          %1860 = vdwg.mxu0
          %v1861 = vld [vmem:[%s246] sm:$0xff]
          %v1862 = vadd.f32 %v1861, %v1858
          %v1863 = vsel %vm1787, %v1862, 0.0
          %v1864 = vrot.slane %v1863, 4
          %v1865 = vadd.f32 %v1863, %v1864
          %v1866 = vrot.slane %v1865, 2
          %v1867 = vadd.f32 %v1865, %v1866
          %v1868 = vrot.slane %v1867, 1
          %v1869 = vadd.f32 %v1867, %v1868
          %v1870 = vrcp.pop 8.0
          %v1871 = vmul.f32 %v1869, %v1870
          %v1872 = vsub.f32 %v1862, %v1871
          %v1873 = vmul.f32 %v1872, %v1872
          %v1874 = vsel %vm1787, %v1873, 0.0
          %v1875 = vrot.slane %v1874, 4
          %v1876 = vadd.f32 %v1874, %v1875
          %v1877 = vrot.slane %v1876, 2
          %v1878 = vadd.f32 %v1876, %v1877
          %v1879 = vrot.slane %v1878, 1
          %v1880 = vadd.f32 %v1878, %v1879
          %v1881 = vmul.f32 %v1880, %v1870
          %v1882 = vadd.f32 %v1881, 1e-05
          %v1883 = vrsqrt.pop %v1882
          %v1884 = vmul.f32 %v1872, %v1883
          %v1885 = vmax.f32 %v1884, 0.0
          %1886 = vst.msk [vmem:[%s280] sm:$0xff] %vm1787, %v1885
        $region60: #{tpu_custom_call.1} parent=39 // pred_fallthru
          _
        %s1887 = sand.u32 %s153, 1
        %s1888 = scalar_lea.sflag [#allocation10], %s1887
        %s1889 = sand.u32 %s153, 1
        %s1890 = smul.addr %s1889, 8
        %s1891 = scalar_lea.vmem [#allocation14], %s1890
        // Predicated region
        $region61: #{tpu_custom_call.1} parent=39 // pred_check
          %p1892 = pneg %p163
        $region62: #{tpu_custom_call.1} parent=39 // pred_check_branch
          %1894 = sbr.rel (%p1892) target = $region64
        $region63: #{tpu_custom_call.1} parent=39 // pred_region
          %s1896 = ssub.s32 128, 128
          %1897 = vsyncadd %s1888, %s1896
          %s1898 = smul.addr %s27, 128
          %s1899 = scalar_lea.hbm %s5, %s1898
          %s1901 = sshll.u32 %s1891, 4
          %s1902 = int_to_ptr.vmem [resolvable:$true] %s1901
          %1904 = dma.vmem_to_hbm [thread:$0]  %s1902, 128, %s1899, %s1888
        $region64: #{tpu_custom_call.1} parent=39 // pred_fallthru
          _
      $region40: #{tpu_custom_call.1} parent=5 // pred_fallthru
        _
      %p1905 = scmp.le.s32.totalorder 2, %s18
      // Predicated region
      $region65: #{tpu_custom_call.1} parent=5 // pred_check
        %p1906 = pneg %p1905
      $region66: #{tpu_custom_call.1} parent=5 // pred_check_branch
        %1908 = sbr.rel (%p1906) target = $region68
      $region67: #{tpu_custom_call.1} parent=5 // pred_region
        %s1909 = ssub.s32 %s18, 2
        // Predicated region
        $region69: #{tpu_custom_call.1} parent=67 // pred_check
          %p1910 = pneg %p169
        $region70: #{tpu_custom_call.1} parent=67 // pred_check_branch
          %1912 = sbr.rel (%p1910) target = $region72
        $region71: #{tpu_custom_call.1} parent=67 // pred_region
          %s1913 = sand.u32 %s154, 1
          %s1914 = scalar_lea.sflag [#allocation10], %s1913
          %s1915 = sand.u32 %s154, 1
          %s1916 = smul.addr %s1915, 8
          %s1917 = scalar_lea.vmem [#allocation14], %s1916
          %1918 = dma.done %s1914, 128
        $region72: #{tpu_custom_call.1} parent=67 // pred_fallthru
          _
      $region68: #{tpu_custom_call.1} parent=5 // pred_fallthru
        _
    $region6: #{tpu_custom_call.1} parent=1 // loop_footer
      %s22 = sadd.s32 1, %s18
    $region7: #{tpu_custom_call.1} parent=1 // loop_footer_branch
      %17 = sbr.rel target = $region3
    $region8: #{tpu_custom_call.1} parent=1 // loop_exit
      _
    %1919 = vsyncpa [#allocation9], 1
    %s1920 = scalar_lea.sflag [#allocation9], 1
    %1921 = vsyncpa %s1920, 1
    %1922 = vsyncpa [#allocation12], 1
    %1923 = vsyncpa [#allocation10], 1
    %s1924 = scalar_lea.sflag [#allocation10], 1
    %1925 = vsyncpa %s1924, 1

// kernel: tpu_custom_call.1
$region0: #{tpu_custom_call.1}
  #allocation0 [shape = 'u32[]', space=smem, size = 0x4, offset = 0x4, fixed_abs, tag = 'smem constant byte address 0x4 - core index']
  #allocation1 [shape = 'u32[144,128]{1,0:T(1,128)}', space=vmem, size = 0x12000, scoped, tag = 'internal scratch']
  #allocation2 [shape = 'f32[4,8,8]{2,1,0:T(8,128)}', space=vmem, size = 0x4000, scoped, tag = 'scratch operand']
  #allocation3 [shape = 'f32[1,4,8,8]{3,2,1,0:T(8,128)}', space=vmem, size = 0x4000, scoped, tag = 'scratch operand']
  #allocation4 [shape = 'f32[1,4,8,8]{3,2,1,0:T(8,128)}', space=vmem, size = 0x4000, scoped, tag = 'scratch operand']
  #allocation5 [shape = 'f32[4,8,8]{2,1,0:T(8,128)}', space=vmem, size = 0x4000, scoped, tag = 'scratch operand']
  #allocation6 [shape = 'f32[4,8,1]{2,1,0:T(8,128)}', space=vmem, size = 0x4000, scoped, tag = 'scratch operand']
  #allocation7 [shape = 'f32[4,8,1]{2,1,0:T(8,128)}', space=vmem, size = 0x4000, scoped, tag = 'scratch operand']
  %s0 = inlined_call_operand.hbm [shape: f32[2,8,32], index: 0, kind: input, shape index: {}]
  %s1 = inlined_call_operand.hbm [shape: f32[32,96], index: 1, kind: input, shape index: {}]
  %s2 = inlined_call_operand.vmem [shape: f32[1,96], index: 2, kind: input, shape index: {}]
  %s3 = inlined_call_operand.hbm [shape: f32[32,32], index: 3, kind: input, shape index: {}]
  %s4 = inlined_call_operand.vmem [shape: f32[1,32], index: 4, kind: input, shape index: {}]
  %s5 = inlined_call_operand.hbm [shape: f32[2,8,32], index: 5, kind: output, shape index: {}]
  %s6 = sld [smem:[#allocation0]]
  $region73: #{tpu_custom_call.1} parent=0
    _
  %s8 = ssub.s32 1, %s6
  %s9 = scalar_select 0, %s8, %s6
  $region1: #{tpu_custom_call.1} parent=0
    #allocation8 [shape = 'u8[8192]{0}', space=vmem, size = 0x2000, scoped, tag = 'input window, operand 0']
    #allocation9 [shape = 's32[2]{0}', space=sflag, size = 0x8, scoped, tag = 'scoped memory for tpu_custom_call.1']
    #allocation10 [shape = 's32[2]{0}', space=sflag, size = 0x8, scoped, tag = 'scoped memory for tpu_custom_call.1']
    #allocation11 [shape = 'u8[16384]{0}', space=vmem, size = 0x4000, scoped, tag = 'input window, operand 1, single buffered']
    #allocation12 [shape = 's32[1]{0}', space=sflag, size = 0x4, scoped, tag = 'scoped memory for tpu_custom_call.1']
    #allocation13 [shape = 'u8[16384]{0}', space=vmem, size = 0x4000, scoped, tag = 'input window, operand 3, single buffered']
    #allocation14 [shape = 'u8[8192]{0}', space=vmem, size = 0x2000, scoped, tag = 'output window, operand 0']
    %10 = vsyncpa [#allocation9], 0
    %s11 = scalar_lea.sflag [#allocation9], 1
    %12 = vsyncpa %s11, 0
    %13 = vsyncpa [#allocation12], 0
    %14 = vsyncpa [#allocation10], 0
    %s15 = scalar_lea.sflag [#allocation10], 1
    %16 = vsyncpa %s15, 0
    loop: start=0, step=1, limit=4
    $region2: #{tpu_custom_call.1} parent=1 // loop_pre_header
      _
    $region3: #{tpu_custom_call.1} parent=1 // loop_header
      %s18 = sphi 0, %s22
      %p19 = scmp.ge.s32.totalorder %s18, 4
      %s25 = sphi 0, %s37
      %s26 = sphi 0, %s33
      %s27 = sphi 0, %s25
      %s28 = sphi 0, %s26
      %s29 = sphi 0, %s27
      %s30 = sphi 0, %s28
      %s40 = sphi 0, %s42
      %s43 = sphi 0, %s40
      %s44 = sphi 0, %s43
      %s60 = sphi 0, %s44
      %s64 = sphi 0, %s64
      %s66 = sphi 0, %s64
      %s67 = sphi 0, %s66
      %s81 = sphi 0, %s67
      %s85 = sphi 0, %s85
      %s87 = sphi 0, %s85
      %s88 = sphi 0, %s87
      %s102 = sphi 0, %s88
      %s106 = sphi 0, %s106
      %s108 = sphi 0, %s106
      %s109 = sphi 0, %s108
      %s123 = sphi 0, %s109
      %s127 = sphi 0, %s127
      %s129 = sphi 0, %s127
      %s130 = sphi 0, %s129
      %s144 = sphi 0, %s130
      %s150 = sphi 0, %s152
      %s153 = sphi 0, %s150
      %s154 = sphi 0, %s153
      %s170 = sphi 0, %s154
    $region4: #{tpu_custom_call.1} parent=1 // loop_header_branch
      %21 = sbr.rel (%p19) target = $region8
    $region5: #{tpu_custom_call.1} parent=1 // loop_body
      %s23 = ssub.s32 %s18, 1
      %s24 = ssub.s32 %s18, 2
      %s31 = sadd.s32 1, %s26
      %p32 = scmp.ge.s32.totalorder %s31, 1
      %s33 = scalar_select %p32, 0, %s31
      %s34 = sadd.s32 1, %s25
      %s35 = scalar_select %p32, %s34, %s25
      %p36 = scmp.ge.s32.totalorder %s35, 2
      %s37 = scalar_select %p36, 0, %s35
      %s38 = ssub.s32 %s25, %s37
      %p39 = scmp.eq.s32.totalorder %s38, 0
      %s41 = sadd.s32 %s40, 1
      %s42 = scalar_select %p39, %s40, %s41
      %p45 = pneg %p39
      %p46 = scmp.eq.s32.totalorder %s18, 1
      %p47 = por %p45, %p46
      %p48 = scmp.ne.s32.totalorder %s40, %s43
      %p49 = scmp.eq.s32.totalorder %s18, 0
      %p50 = por %p48, %p49
      %p51 = scmp.ne.s32.totalorder %s40, %s43
      %p52 = scmp.eq.s32.totalorder %s23, 1
      %p53 = por %p51, %p52
      %p54 = scmp.ne.s32.totalorder %s43, %s44
      %p55 = scmp.eq.s32.totalorder %s23, 0
      %p56 = por %p54, %p55
      %p57 = scmp.ne.s32.totalorder %s43, %s44
      %p58 = scmp.eq.s32.totalorder %s24, 1
      %p59 = por %p57, %p58
      %p61 = scmp.ne.s32.totalorder %s44, %s60
      %p62 = scmp.eq.s32.totalorder %s24, 0
      %p63 = por %p61, %p62
      %s65 = sadd.s32 %s64, 1
      %p68 = scmp.eq.s32.totalorder %s18, 1
      %p69 = scmp.ne.s32.totalorder %s64, %s66
      %p70 = scmp.eq.s32.totalorder %s18, 0
      %p71 = por %p69, %p70
      %p72 = scmp.ne.s32.totalorder %s64, %s66
      %p73 = scmp.eq.s32.totalorder %s23, 1
      %p74 = por %p72, %p73
      %p75 = scmp.ne.s32.totalorder %s66, %s67
      %p76 = scmp.eq.s32.totalorder %s23, 0
      %p77 = por %p75, %p76
      %p78 = scmp.ne.s32.totalorder %s66, %s67
      %p79 = scmp.eq.s32.totalorder %s24, 1
      %p80 = por %p78, %p79
      %p82 = scmp.ne.s32.totalorder %s67, %s81
      %p83 = scmp.eq.s32.totalorder %s24, 0
      %p84 = por %p82, %p83
      %s86 = sadd.s32 %s85, 1
      %p89 = scmp.eq.s32.totalorder %s18, 1
      %p90 = scmp.ne.s32.totalorder %s85, %s87
      %p91 = scmp.eq.s32.totalorder %s18, 0
      %p92 = por %p90, %p91
      %p93 = scmp.ne.s32.totalorder %s85, %s87
      %p94 = scmp.eq.s32.totalorder %s23, 1
      %p95 = por %p93, %p94
      %p96 = scmp.ne.s32.totalorder %s87, %s88
      %p97 = scmp.eq.s32.totalorder %s23, 0
      %p98 = por %p96, %p97
      %p99 = scmp.ne.s32.totalorder %s87, %s88
      %p100 = scmp.eq.s32.totalorder %s24, 1
      %p101 = por %p99, %p100
      %p103 = scmp.ne.s32.totalorder %s88, %s102
      %p104 = scmp.eq.s32.totalorder %s24, 0
      %p105 = por %p103, %p104
      %s107 = sadd.s32 %s106, 1
      %p110 = scmp.eq.s32.totalorder %s18, 1
      %p111 = scmp.ne.s32.totalorder %s106, %s108
      %p112 = scmp.eq.s32.totalorder %s18, 0
      %p113 = por %p111, %p112
      %p114 = scmp.ne.s32.totalorder %s106, %s108
      %p115 = scmp.eq.s32.totalorder %s23, 1
      %p116 = por %p114, %p115
      %p117 = scmp.ne.s32.totalorder %s108, %s109
      %p118 = scmp.eq.s32.totalorder %s23, 0
      %p119 = por %p117, %p118
      %p120 = scmp.ne.s32.totalorder %s108, %s109
      %p121 = scmp.eq.s32.totalorder %s24, 1
      %p122 = por %p120, %p121
      %p124 = scmp.ne.s32.totalorder %s109, %s123
      %p125 = scmp.eq.s32.totalorder %s24, 0
      %p126 = por %p124, %p125
      %s128 = sadd.s32 %s127, 1
      %p131 = scmp.eq.s32.totalorder %s18, 1
      %p132 = scmp.ne.s32.totalorder %s127, %s129
      %p133 = scmp.eq.s32.totalorder %s18, 0
      %p134 = por %p132, %p133
      %p135 = scmp.ne.s32.totalorder %s127, %s129
      %p136 = scmp.eq.s32.totalorder %s23, 1
      %p137 = por %p135, %p136
      %p138 = scmp.ne.s32.totalorder %s129, %s130
      %p139 = scmp.eq.s32.totalorder %s23, 0
      %p140 = por %p138, %p139
      %p141 = scmp.ne.s32.totalorder %s129, %s130
      %p142 = scmp.eq.s32.totalorder %s24, 1
      %p143 = por %p141, %p142
      %p145 = scmp.ne.s32.totalorder %s130, %s144
      %p146 = scmp.eq.s32.totalorder %s24, 0
      %p147 = por %p145, %p146
      %s148 = ssub.s32 %s25, %s37
      %p149 = scmp.eq.s32.totalorder %s148, 0
      %s151 = sadd.s32 %s150, 1
      %s152 = scalar_select %p149, %s150, %s151
      %p155 = pneg %p149
      %p156 = scmp.eq.s32.totalorder %s18, 1
      %p157 = por %p155, %p156
      %p158 = scmp.ne.s32.totalorder %s150, %s153
      %p159 = scmp.eq.s32.totalorder %s18, 0
      %p160 = por %p158, %p159
      %p161 = scmp.ne.s32.totalorder %s150, %s153
      %p162 = scmp.eq.s32.totalorder %s23, 1
      %p163 = por %p161, %p162
      %p164 = scmp.ne.s32.totalorder %s153, %s154
      %p165 = scmp.eq.s32.totalorder %s23, 0
      %p166 = por %p164, %p165
      %p167 = scmp.ne.s32.totalorder %s153, %s154
      %p168 = scmp.eq.s32.totalorder %s24, 1
      %p169 = por %p167, %p168
      %p171 = scmp.ne.s32.totalorder %s154, %s170
      %p172 = scmp.eq.s32.totalorder %s24, 0
      %p173 = por %p171, %p172
      %p174 = scmp.le.s32.totalorder 1, %s18
      %p175 = scmp.lt.s32.totalorder %s18, 3
      %p176 = pnand %p174, %p175
      %p177 = pneg %p176
      // Predicated region
      $region9: #{tpu_custom_call.1} parent=5 // pred_check
        _
      $region10: #{tpu_custom_call.1} parent=5 // pred_check_branch
        %179 = sbr.rel (%p176) target = $region12
      $region11: #{tpu_custom_call.1} parent=5 // pred_region
        %s180 = ssub.s32 %s18, 1
        // Predicated region
        $region13: #{tpu_custom_call.1} parent=11 // pred_check
          %p181 = pneg %p77
        $region14: #{tpu_custom_call.1} parent=11 // pred_check_branch
          %183 = sbr.rel (%p181) target = $region16
        $region15: #{tpu_custom_call.1} parent=11 // pred_region
          %s185 = ssub.s32 512, 512
          %186 = vsyncadd [#allocation12], %s185
          %s187 = sshll.u32 [#allocation11], 4
          %s188 = int_to_ptr.vmem [resolvable:$true] %s187
          %193 = dma.hbm_to_vmem [thread:$0]  %s1, 512, %s188, [#allocation12], 128, 128, 8
        $region16: #{tpu_custom_call.1} parent=11 // pred_fallthru
          _
        // Predicated region
        $region17: #{tpu_custom_call.1} parent=11 // pred_check
          %p194 = pneg %p98
        $region18: #{tpu_custom_call.1} parent=11 // pred_check_branch
          %196 = sbr.rel (%p194) target = $region20
        $region19: #{tpu_custom_call.1} parent=11 // pred_region
          _
        $region20: #{tpu_custom_call.1} parent=11 // pred_fallthru
          _
        // Predicated region
        $region21: #{tpu_custom_call.1} parent=11 // pred_check
          %p197 = pneg %p119
        $region22: #{tpu_custom_call.1} parent=11 // pred_check_branch
          %199 = sbr.rel (%p197) target = $region24
        $region23: #{tpu_custom_call.1} parent=11 // pred_region
          %s201 = ssub.s32 512, 512
          %202 = vsyncadd [#allocation12], %s201
          %s203 = sshll.u32 [#allocation13], 4
          %s204 = int_to_ptr.vmem [resolvable:$true] %s203
          %209 = dma.hbm_to_vmem [thread:$0]  %s3, 512, %s204, [#allocation12], 128, 128, 8
        $region24: #{tpu_custom_call.1} parent=11 // pred_fallthru
          _
        // Predicated region
        $region25: #{tpu_custom_call.1} parent=11 // pred_check
          %p210 = pneg %p140
        $region26: #{tpu_custom_call.1} parent=11 // pred_check_branch
          %212 = sbr.rel (%p210) target = $region28
        $region27: #{tpu_custom_call.1} parent=11 // pred_region
          _
        $region28: #{tpu_custom_call.1} parent=11 // pred_fallthru
          _
      $region12: #{tpu_custom_call.1} parent=5 // pred_fallthru
        _
      %p213 = scmp.lt.s32.totalorder %s18, 2
      // Predicated region
      $region29: #{tpu_custom_call.1} parent=5 // pred_check
        %p214 = pneg %p213
      $region30: #{tpu_custom_call.1} parent=5 // pred_check_branch
        %216 = sbr.rel (%p214) target = $region32
      $region31: #{tpu_custom_call.1} parent=5 // pred_region
        // Predicated region
        $region33: #{tpu_custom_call.1} parent=31 // pred_check
          %p217 = pneg %p50
        $region34: #{tpu_custom_call.1} parent=31 // pred_check_branch
          %219 = sbr.rel (%p217) target = $region36
        $region35: #{tpu_custom_call.1} parent=31 // pred_region
          %s220 = sand.u32 %s40, 1
          %s221 = scalar_lea.sflag [#allocation9], %s220
          %s222 = sand.u32 %s40, 1
          %s223 = smul.addr %s222, 8
          %s224 = scalar_lea.vmem [#allocation8], %s223
          %s226 = ssub.s32 128, 128
          %227 = vsyncadd %s221, %s226
          %s228 = smul.addr %s25, 128
          %s229 = scalar_lea.hbm %s0, %s228
          %s231 = sshll.u32 %s224, 4
          %s232 = int_to_ptr.vmem [resolvable:$true] %s231
          %234 = dma.hbm_to_vmem [thread:$0]  %s229, 128, %s232, %s221
        $region36: #{tpu_custom_call.1} parent=31 // pred_fallthru
          _
      $region32: #{tpu_custom_call.1} parent=5 // pred_fallthru
        _
      %p235 = scmp.le.s32.totalorder 1, %s18
      %p236 = scmp.lt.s32.totalorder %s18, 3
      %p237 = pnand %p235, %p236
      %p238 = pneg %p237
      // Predicated region
      $region37: #{tpu_custom_call.1} parent=5 // pred_check
        _
      $region38: #{tpu_custom_call.1} parent=5 // pred_check_branch
        %240 = sbr.rel (%p237) target = $region40
      $region39: #{tpu_custom_call.1} parent=5 // pred_region
        %s241 = ssub.s32 %s18, 1
        %s242 = sand.u32 %s43, 1
        %s243 = scalar_lea.sflag [#allocation9], %s242
        %s244 = sand.u32 %s43, 1
        %s245 = smul.addr %s244, 8
        %s246 = scalar_lea.vmem [#allocation8], %s245
        // Predicated region
        $region41: #{tpu_custom_call.1} parent=39 // pred_check
          %p247 = pneg %p56
        $region42: #{tpu_custom_call.1} parent=39 // pred_check_branch
          %249 = sbr.rel (%p247) target = $region44
        $region43: #{tpu_custom_call.1} parent=39 // pred_region
          %250 = dma.done %s243, 128
        $region44: #{tpu_custom_call.1} parent=39 // pred_fallthru
          _
        // Predicated region
        $region45: #{tpu_custom_call.1} parent=39 // pred_check
          %p251 = pneg %p77
        $region46: #{tpu_custom_call.1} parent=39 // pred_check_branch
          %253 = sbr.rel (%p251) target = $region48
        $region47: #{tpu_custom_call.1} parent=39 // pred_region
          %254 = dma.done [#allocation12], 512
        $region48: #{tpu_custom_call.1} parent=39 // pred_fallthru
          _
        // Predicated region
        $region49: #{tpu_custom_call.1} parent=39 // pred_check
          %p255 = pneg %p119
        $region50: #{tpu_custom_call.1} parent=39 // pred_check_branch
          %257 = sbr.rel (%p255) target = $region52
        $region51: #{tpu_custom_call.1} parent=39 // pred_region
          %258 = dma.done [#allocation12], 512
        $region52: #{tpu_custom_call.1} parent=39 // pred_fallthru
          _
        %s259 = sand.u32 %s43, 1
        %s260 = scalar_lea.sflag [#allocation9], %s259
        %s261 = sand.u32 %s43, 1
        %s262 = smul.addr %s261, 8
        %s263 = scalar_lea.vmem [#allocation8], %s262
        %p264 = pneg %p56
        %p265 = pneg %p53
        %p266 = pneg %p77
        %p267 = pneg %p74
        %p268 = pneg %p98
        %p269 = pneg %p95
        %p270 = pneg %p119
        %p271 = pneg %p116
        %p272 = pneg %p140
        %p273 = pneg %p137
        %p274 = pneg %p166
        %p275 = pneg %p163
        %s276 = sand.u32 %s153, 1
        %s277 = scalar_lea.sflag [#allocation10], %s276
        %s278 = sand.u32 %s153, 1
        %s279 = smul.addr %s278, 8
        %s280 = scalar_lea.vmem [#allocation14], %s279
        %p281 = scmp.eq.s32.totalorder %s28, 0
        // Predicated region
        $region53: #{tpu_custom_call.1} parent=39 // pred_check
          %p282 = pneg %p281
        $region54: #{tpu_custom_call.1} parent=39 // pred_check_branch
          %284 = sbr.rel (%p282) target = $region56
        $region55: #{tpu_custom_call.1} parent=39 // pred_region
          %v285 = vld [vmem:[%s246] sm:$0xff]
          %v286 = vld [vmem:[#allocation11] sm:$0xff]
          %v287 = vld [vmem:[#allocation11 + $0x8] sm:$0xff]
          %v288 = vld [vmem:[#allocation11 + $0x10] sm:$0xff]
          %v289 = vld [vmem:[#allocation11 + $0x18] sm:$0xff]
          %v290 = vld [vmem:[%s2] sm:$0x1]
          %v292 = vlaneseq
          %v293 = vshrl.u32 %v292, 7
          %v294 = vsub.s32 0, %v293
          %v295 = vrot.slane %v290, %v294
          %vm297 = vcmask 261120
          %v299 = vsel %vm297, %v285, 0
          %301 = vmatprep.subr.mxu0 0.0
          %302 = vmatpush1.msra.mxu0 %v286
          %303 = vmatprep.subr.mxu0 0.0
          %304 = vmatpush1.msra.mxu0 %v287
          %305 = vmatprep.subr.mxu0 0.0
          %306 = vmatpush1.msra.mxu0 %v288
          %307 = vmatprep.subr.mxu0 0.0
          %308 = vmatpush1.msra.mxu0 %v289
          %309 = vmatprep.subr.mxu0 0.0
          %310 = vmatpush1.msra.mxu0 0.0
          %311 = vmatprep.subr.mxu0 0.0
          %312 = vmatpush1.msra.mxu0 0.0
          %313 = vmatprep.subr.mxu0 0.0
          %314 = vmatpush1.msra.mxu0 0.0
          %315 = vmatprep.subr.mxu0 0.0
          %316 = vmatpush1.msra.mxu0 0.0
          %317 = vmatprep.subr.mxu0 0.0
          %318 = vmatpush1.msra.mxu0 0.0
          %319 = vmatprep.subr.mxu0 0.0
          %320 = vmatpush1.msra.mxu0 0.0
          %321 = vmatprep.subr.mxu0 0.0
          %322 = vmatpush1.msra.mxu0 0.0
          %323 = vmatprep.subr.mxu0 0.0
          %324 = vmatpush1.msra.mxu0 0.0
          %325 = vmatprep.subr.mxu0 0.0
          %326 = vmatpush1.msra.mxu0 0.0
          %327 = vmatprep.subr.mxu0 0.0
          %328 = vmatpush1.msra.mxu0 0.0
          %329 = vmatprep.subr.mxu0 0.0
          %330 = vmatpush1.msra.mxu0 0.0
          %331 = vmatprep.subr.mxu0 0.0
          %332 = vmatpush1.msra.mxu0 0.0
          %333 = vmatprep.subr.mxu0 0.0
          %334 = vmatpush1.msra.mxu0 0.0
          %335 = vmatprep.subr.mxu0 0.0
          %336 = vmatpush1.msra.mxu0 0.0
          %337 = vmatprep.subr.mxu0 0.0
          %338 = vmatpush1.msra.mxu0 0.0
          %339 = vmatprep.subr.mxu0 0.0
          %340 = vmatpush1.msra.mxu0 0.0
          %341 = vmatprep.subr.mxu0 0.0
          %342 = vmatpush1.msra.mxu0 0.0
          %343 = vmatprep.subr.mxu0 0.0
          %344 = vmatpush1.msra.mxu0 0.0
          %345 = vmatprep.subr.mxu0 0.0
          %346 = vmatpush1.msra.mxu0 0.0
          %347 = vmatprep.subr.mxu0 0.0
          %348 = vmatpush1.msra.mxu0 0.0
          %349 = vmatprep.subr.mxu0 0.0
          %350 = vmatpush1.msra.mxu0 0.0
          %351 = vmatprep.subr.mxu0 0.0
          %352 = vmatpush1.msra.mxu0 0.0
          %353 = vmatprep.subr.mxu0 0.0
          %354 = vmatpush1.msra.mxu0 0.0
          %355 = vmatprep.subr.mxu0 0.0
          %356 = vmatpush1.msra.mxu0 0.0
          %357 = vmatprep.subr.mxu0 0.0
          %358 = vmatpush1.msra.mxu0 0.0
          %359 = vmatprep.subr.mxu0 0.0
          %360 = vmatpush1.msra.mxu0 0.0
          %361 = vmatprep.subr.mxu0 0.0
          %362 = vmatpush1.msra.mxu0 0.0
          %363 = vmatprep.subr.mxu0 0.0
          %364 = vmatpush1.msra.mxu0 0.0
          %365 = vmatprep.mubr.f32.mxu0 0.0
          %366 = vmatmul.mubr.f32.gmra.mrb[0].mxu0 %v299
          %v367 = vpop.f32.mrb[0].mxu0
          %v368 = vadd.f32 %v295, %v367
          %v369 = vpop.f32.mrb[0].mxu0
          %370 = vdwg.mxu0
          %372 = vrot.lane.b32.xlu0 %v368, 120
          %v373 = vpop.permute.xlu0 %372
          %375 = vrot.lane.b32.xlu0 %v368, 112
          %v376 = vpop.permute.xlu0 %375
          %378 = vrot.lane.b32.xlu0 %v368, 104
          %v379 = vpop.permute.xlu0 %378
          %v381 = vcombine.low %v368, %v376
          %v382 = vcombine.high %v368, %v376
          %v384 = vunpack.c.l.s4 1983009808
          %v385 = vunpack.c.0.s8 %v384
          %v386 = vlaneseq
          %v387 = vshrl.u32 %v386, 7
          %v388 = vsub.s32 %v385, %v387
          %v389 = vrot.slane %v381, %v388
          %v391 = vunpack.c.l.s4 1983009808
          %v392 = vunpack.c.0.s8 %v391
          %v393 = vlaneseq
          %v394 = vshrl.u32 %v393, 7
          %v395 = vsub.s32 %v392, %v394
          %v396 = vrot.slane %v382, %v395
          %v397 = vcombine.low %v373, %v379
          %v398 = vcombine.high %v373, %v379
          %v400 = vunpack.c.l.s4 1983009808
          %v401 = vunpack.c.0.s8 %v400
          %v402 = vlaneseq
          %v403 = vshrl.u32 %v402, 7
          %v404 = vsub.s32 %v401, %v403
          %v405 = vrot.slane %v397, %v404
          %v407 = vunpack.c.l.s4 1983009808
          %v408 = vunpack.c.0.s8 %v407
          %v409 = vlaneseq
          %v410 = vshrl.u32 %v409, 7
          %v411 = vsub.s32 %v408, %v410
          %v412 = vrot.slane %v398, %v411
          %v413 = vcombine.low %v389, %v405
          %v414 = vcombine.high %v389, %v405
          %v416 = vunpack.c.l.s4 1934713408
          %v417 = vunpack.c.0.s8 %v416
          %v418 = vlaneseq
          %v419 = vshrl.u32 %v418, 7
          %v420 = vsub.s32 %v417, %v419
          %v421 = vrot.slane %v413, %v420
          %v423 = vunpack.c.l.s4 1934713408
          %v424 = vunpack.c.0.s8 %v423
          %v425 = vlaneseq
          %v426 = vshrl.u32 %v425, 7
          %v427 = vsub.s32 %v424, %v426
          %v428 = vrot.slane %v414, %v427
          %v429 = vcombine.low %v396, %v412
          %v430 = vcombine.high %v396, %v412
          %v432 = vunpack.c.l.s4 1934713408
          %v433 = vunpack.c.0.s8 %v432
          %v434 = vlaneseq
          %v435 = vshrl.u32 %v434, 7
          %v436 = vsub.s32 %v433, %v435
          %v437 = vrot.slane %v429, %v436
          %v439 = vunpack.c.l.s4 1934713408
          %v440 = vunpack.c.0.s8 %v439
          %v441 = vlaneseq
          %v442 = vshrl.u32 %v441, 7
          %v443 = vsub.s32 %v440, %v442
          %v444 = vrot.slane %v430, %v443
          %v445 = vcombine.high %v421, 0.0
          %v446 = vcombine.high %v428, 0.0
          %v447 = vcombine.high %v437, 0.0
          %v448 = vcombine.high %v444, 0.0
          %v449 = vcombine.low %v421, %v428
          %v451 = vunpack.c.l.s4 1983009808
          %v452 = vunpack.c.0.s8 %v451
          %v453 = vlaneseq
          %v454 = vshrl.u32 %v453, 7
          %v455 = vsub.s32 %v452, %v454
          %v456 = vrot.slane %v449, %v455
          %v457 = vcombine.low %v445, %v446
          %v459 = vunpack.c.l.s4 1983009808
          %v460 = vunpack.c.0.s8 %v459
          %v461 = vlaneseq
          %v462 = vshrl.u32 %v461, 7
          %v463 = vsub.s32 %v460, %v462
          %v464 = vrot.slane %v457, %v463
          %v465 = vcombine.low %v437, %v444
          %v467 = vunpack.c.l.s4 1983009808
          %v468 = vunpack.c.0.s8 %v467
          %v469 = vlaneseq
          %v470 = vshrl.u32 %v469, 7
          %v471 = vsub.s32 %v468, %v470
          %v472 = vrot.slane %v465, %v471
          %v473 = vcombine.low %v447, %v448
          %v475 = vunpack.c.l.s4 1983009808
          %v476 = vunpack.c.0.s8 %v475
          %v477 = vlaneseq
          %v478 = vshrl.u32 %v477, 7
          %v479 = vsub.s32 %v476, %v478
          %v480 = vrot.slane %v473, %v479
          %v481 = vcombine.low %v456, %v464
          %v482 = vcombine.high %v456, %v464
          %v484 = vunpack.c.l.s4 1934713408
          %v485 = vunpack.c.0.s8 %v484
          %v486 = vlaneseq
          %v487 = vshrl.u32 %v486, 7
          %v488 = vsub.s32 %v485, %v487
          %v489 = vrot.slane %v481, %v488
          %v491 = vunpack.c.l.s4 1934713408
          %v492 = vunpack.c.0.s8 %v491
          %v493 = vlaneseq
          %v494 = vshrl.u32 %v493, 7
          %v495 = vsub.s32 %v492, %v494
          %v496 = vrot.slane %v482, %v495
          %v497 = vcombine.low %v472, %v480
          %v498 = vcombine.high %v472, %v480
          %v500 = vunpack.c.l.s4 1934713408
          %v501 = vunpack.c.0.s8 %v500
          %v502 = vlaneseq
          %v503 = vshrl.u32 %v502, 7
          %v504 = vsub.s32 %v501, %v503
          %v505 = vrot.slane %v497, %v504
          %v507 = vunpack.c.l.s4 1934713408
          %v508 = vunpack.c.0.s8 %v507
          %v509 = vlaneseq
          %v510 = vshrl.u32 %v509, 7
          %v511 = vsub.s32 %v508, %v510
          %v512 = vrot.slane %v498, %v511
          %v513 = vcombine.low %v489, %v505
          %v514 = vcombine.high %v489, %v505
          %v515 = vcombine.low %v496, %v512
          %v516 = vcombine.high %v496, %v512
          %vm517 = vcmask 64512
          %518 = vst.msk [vmem:[#allocation2] sm:$0xff] %vm517, %v513
          %519 = vst.msk [vmem:[#allocation2 + $0x8] sm:$0xff] %vm517, %v514
          %520 = vst.msk [vmem:[#allocation2 + $0x10] sm:$0xff] %vm517, %v515
          %521 = vst.msk [vmem:[#allocation2 + $0x18] sm:$0xff] %vm517, %v516
          %522 = vrot.lane.b32.xlu0 %v368, 96
          %v523 = vpop.permute.xlu0 %522
          %524 = vrot.lane.b32.xlu0 %v373, 96
          %v525 = vpop.permute.xlu0 %524
          %526 = vrot.lane.b32.xlu0 %v376, 96
          %v527 = vpop.permute.xlu0 %526
          %528 = vrot.lane.b32.xlu0 %v379, 96
          %v529 = vpop.permute.xlu0 %528
          %v534 = vcombine.low %v523, %v527
          %v535 = vcombine.high %v523, %v527
          %v537 = vunpack.c.l.s4 1983009808
          %v538 = vunpack.c.0.s8 %v537
          %v539 = vlaneseq
          %v540 = vshrl.u32 %v539, 7
          %v541 = vsub.s32 %v538, %v540
          %v542 = vrot.slane %v534, %v541
          %v544 = vunpack.c.l.s4 1983009808
          %v545 = vunpack.c.0.s8 %v544
          %v546 = vlaneseq
          %v547 = vshrl.u32 %v546, 7
          %v548 = vsub.s32 %v545, %v547
          %v549 = vrot.slane %v535, %v548
          %v550 = vcombine.low %v525, %v529
          %v551 = vcombine.high %v525, %v529
          %v553 = vunpack.c.l.s4 1983009808
          %v554 = vunpack.c.0.s8 %v553
          %v555 = vlaneseq
          %v556 = vshrl.u32 %v555, 7
          %v557 = vsub.s32 %v554, %v556
          %v558 = vrot.slane %v550, %v557
          %v560 = vunpack.c.l.s4 1983009808
          %v561 = vunpack.c.0.s8 %v560
          %v562 = vlaneseq
          %v563 = vshrl.u32 %v562, 7
          %v564 = vsub.s32 %v561, %v563
          %v565 = vrot.slane %v551, %v564
          %v566 = vcombine.low %v542, %v558
          %v567 = vcombine.high %v542, %v558
          %v569 = vunpack.c.l.s4 1934713408
          %v570 = vunpack.c.0.s8 %v569
          %v571 = vlaneseq
          %v572 = vshrl.u32 %v571, 7
          %v573 = vsub.s32 %v570, %v572
          %v574 = vrot.slane %v566, %v573
          %v576 = vunpack.c.l.s4 1934713408
          %v577 = vunpack.c.0.s8 %v576
          %v578 = vlaneseq
          %v579 = vshrl.u32 %v578, 7
          %v580 = vsub.s32 %v577, %v579
          %v581 = vrot.slane %v567, %v580
          %v582 = vcombine.low %v549, %v565
          %v583 = vcombine.high %v549, %v565
          %v585 = vunpack.c.l.s4 1934713408
          %v586 = vunpack.c.0.s8 %v585
          %v587 = vlaneseq
          %v588 = vshrl.u32 %v587, 7
          %v589 = vsub.s32 %v586, %v588
          %v590 = vrot.slane %v582, %v589
          %v592 = vunpack.c.l.s4 1934713408
          %v593 = vunpack.c.0.s8 %v592
          %v594 = vlaneseq
          %v595 = vshrl.u32 %v594, 7
          %v596 = vsub.s32 %v593, %v595
          %v597 = vrot.slane %v583, %v596
          %v598 = vcombine.high %v574, 0.0
          %v599 = vcombine.high %v581, 0.0
          %v600 = vcombine.high %v590, 0.0
          %v601 = vcombine.high %v597, 0.0
          %v602 = vcombine.low %v574, %v581
          %v604 = vunpack.c.l.s4 1983009808
          %v605 = vunpack.c.0.s8 %v604
          %v606 = vlaneseq
          %v607 = vshrl.u32 %v606, 7
          %v608 = vsub.s32 %v605, %v607
          %v609 = vrot.slane %v602, %v608
          %v610 = vcombine.low %v598, %v599
          %v612 = vunpack.c.l.s4 1983009808
          %v613 = vunpack.c.0.s8 %v612
          %v614 = vlaneseq
          %v615 = vshrl.u32 %v614, 7
          %v616 = vsub.s32 %v613, %v615
          %v617 = vrot.slane %v610, %v616
          %v618 = vcombine.low %v590, %v597
          %v620 = vunpack.c.l.s4 1983009808
          %v621 = vunpack.c.0.s8 %v620
          %v622 = vlaneseq
          %v623 = vshrl.u32 %v622, 7
          %v624 = vsub.s32 %v621, %v623
          %v625 = vrot.slane %v618, %v624
          %v626 = vcombine.low %v600, %v601
          %v628 = vunpack.c.l.s4 1983009808
          %v629 = vunpack.c.0.s8 %v628
          %v630 = vlaneseq
          %v631 = vshrl.u32 %v630, 7
          %v632 = vsub.s32 %v629, %v631
          %v633 = vrot.slane %v626, %v632
          %v634 = vcombine.low %v609, %v617
          %v635 = vcombine.high %v609, %v617
          %v637 = vunpack.c.l.s4 1934713408
          %v638 = vunpack.c.0.s8 %v637
          %v639 = vlaneseq
          %v640 = vshrl.u32 %v639, 7
          %v641 = vsub.s32 %v638, %v640
          %v642 = vrot.slane %v634, %v641
          %v644 = vunpack.c.l.s4 1934713408
          %v645 = vunpack.c.0.s8 %v644
          %v646 = vlaneseq
          %v647 = vshrl.u32 %v646, 7
          %v648 = vsub.s32 %v645, %v647
          %v649 = vrot.slane %v635, %v648
          %v650 = vcombine.low %v625, %v633
          %v651 = vcombine.high %v625, %v633
          %v653 = vunpack.c.l.s4 1934713408
          %v654 = vunpack.c.0.s8 %v653
          %v655 = vlaneseq
          %v656 = vshrl.u32 %v655, 7
          %v657 = vsub.s32 %v654, %v656
          %v658 = vrot.slane %v650, %v657
          %v660 = vunpack.c.l.s4 1934713408
          %v661 = vunpack.c.0.s8 %v660
          %v662 = vlaneseq
          %v663 = vshrl.u32 %v662, 7
          %v664 = vsub.s32 %v661, %v663
          %v665 = vrot.slane %v651, %v664
          %v666 = vcombine.low %v642, %v658
          %v667 = vcombine.high %v642, %v658
          %v668 = vcombine.low %v649, %v665
          %v669 = vcombine.high %v649, %v665
          %670 = vst.msk [vmem:[#allocation3] sm:$0xff] %vm517, %v666
          %671 = vst.msk [vmem:[#allocation3 + $0x8] sm:$0xff] %vm517, %v667
          %672 = vst.msk [vmem:[#allocation3 + $0x10] sm:$0xff] %vm517, %v668
          %673 = vst.msk [vmem:[#allocation3 + $0x18] sm:$0xff] %vm517, %v669
          %674 = vrot.lane.b32.xlu0 %v368, 64
          %v675 = vpop.permute.xlu0 %674
          %676 = vrot.lane.b32.xlu0 %v373, 64
          %v677 = vpop.permute.xlu0 %676
          %678 = vrot.lane.b32.xlu0 %v376, 64
          %v679 = vpop.permute.xlu0 %678
          %680 = vrot.lane.b32.xlu0 %v379, 64
          %v681 = vpop.permute.xlu0 %680
          %v686 = vcombine.low %v675, %v679
          %v687 = vcombine.high %v675, %v679
          %v689 = vunpack.c.l.s4 1983009808
          %v690 = vunpack.c.0.s8 %v689
          %v691 = vlaneseq
          %v692 = vshrl.u32 %v691, 7
          %v693 = vsub.s32 %v690, %v692
          %v694 = vrot.slane %v686, %v693
          %v696 = vunpack.c.l.s4 1983009808
          %v697 = vunpack.c.0.s8 %v696
          %v698 = vlaneseq
          %v699 = vshrl.u32 %v698, 7
          %v700 = vsub.s32 %v697, %v699
          %v701 = vrot.slane %v687, %v700
          %v702 = vcombine.low %v677, %v681
          %v703 = vcombine.high %v677, %v681
          %v705 = vunpack.c.l.s4 1983009808
          %v706 = vunpack.c.0.s8 %v705
          %v707 = vlaneseq
          %v708 = vshrl.u32 %v707, 7
          %v709 = vsub.s32 %v706, %v708
          %v710 = vrot.slane %v702, %v709
          %v712 = vunpack.c.l.s4 1983009808
          %v713 = vunpack.c.0.s8 %v712
          %v714 = vlaneseq
          %v715 = vshrl.u32 %v714, 7
          %v716 = vsub.s32 %v713, %v715
          %v717 = vrot.slane %v703, %v716
          %v718 = vcombine.low %v694, %v710
          %v719 = vcombine.high %v694, %v710
          %v721 = vunpack.c.l.s4 1934713408
          %v722 = vunpack.c.0.s8 %v721
          %v723 = vlaneseq
          %v724 = vshrl.u32 %v723, 7
          %v725 = vsub.s32 %v722, %v724
          %v726 = vrot.slane %v718, %v725
          %v728 = vunpack.c.l.s4 1934713408
          %v729 = vunpack.c.0.s8 %v728
          %v730 = vlaneseq
          %v731 = vshrl.u32 %v730, 7
          %v732 = vsub.s32 %v729, %v731
          %v733 = vrot.slane %v719, %v732
          %v734 = vcombine.low %v701, %v717
          %v735 = vcombine.high %v701, %v717
          %v737 = vunpack.c.l.s4 1934713408
          %v738 = vunpack.c.0.s8 %v737
          %v739 = vlaneseq
          %v740 = vshrl.u32 %v739, 7
          %v741 = vsub.s32 %v738, %v740
          %v742 = vrot.slane %v734, %v741
          %v744 = vunpack.c.l.s4 1934713408
          %v745 = vunpack.c.0.s8 %v744
          %v746 = vlaneseq
          %v747 = vshrl.u32 %v746, 7
          %v748 = vsub.s32 %v745, %v747
          %v749 = vrot.slane %v735, %v748
          %v750 = vcombine.high %v726, 0.0
          %v751 = vcombine.high %v733, 0.0
          %v752 = vcombine.high %v742, 0.0
          %v753 = vcombine.high %v749, 0.0
          %v754 = vcombine.low %v726, %v733
          %v756 = vunpack.c.l.s4 1983009808
          %v757 = vunpack.c.0.s8 %v756
          %v758 = vlaneseq
          %v759 = vshrl.u32 %v758, 7
          %v760 = vsub.s32 %v757, %v759
          %v761 = vrot.slane %v754, %v760
          %v762 = vcombine.low %v750, %v751
          %v764 = vunpack.c.l.s4 1983009808
          %v765 = vunpack.c.0.s8 %v764
          %v766 = vlaneseq
          %v767 = vshrl.u32 %v766, 7
          %v768 = vsub.s32 %v765, %v767
          %v769 = vrot.slane %v762, %v768
          %v770 = vcombine.low %v742, %v749
          %v772 = vunpack.c.l.s4 1983009808
          %v773 = vunpack.c.0.s8 %v772
          %v774 = vlaneseq
          %v775 = vshrl.u32 %v774, 7
          %v776 = vsub.s32 %v773, %v775
          %v777 = vrot.slane %v770, %v776
          %v778 = vcombine.low %v752, %v753
          %v780 = vunpack.c.l.s4 1983009808
          %v781 = vunpack.c.0.s8 %v780
          %v782 = vlaneseq
          %v783 = vshrl.u32 %v782, 7
          %v784 = vsub.s32 %v781, %v783
          %v785 = vrot.slane %v778, %v784
          %v786 = vcombine.low %v761, %v769
          %v787 = vcombine.high %v761, %v769
          %v789 = vunpack.c.l.s4 1934713408
          %v790 = vunpack.c.0.s8 %v789
          %v791 = vlaneseq
          %v792 = vshrl.u32 %v791, 7
          %v793 = vsub.s32 %v790, %v792
          %v794 = vrot.slane %v786, %v793
          %v796 = vunpack.c.l.s4 1934713408
          %v797 = vunpack.c.0.s8 %v796
          %v798 = vlaneseq
          %v799 = vshrl.u32 %v798, 7
          %v800 = vsub.s32 %v797, %v799
          %v801 = vrot.slane %v787, %v800
          %v802 = vcombine.low %v777, %v785
          %v803 = vcombine.high %v777, %v785
          %v805 = vunpack.c.l.s4 1934713408
          %v806 = vunpack.c.0.s8 %v805
          %v807 = vlaneseq
          %v808 = vshrl.u32 %v807, 7
          %v809 = vsub.s32 %v806, %v808
          %v810 = vrot.slane %v802, %v809
          %v812 = vunpack.c.l.s4 1934713408
          %v813 = vunpack.c.0.s8 %v812
          %v814 = vlaneseq
          %v815 = vshrl.u32 %v814, 7
          %v816 = vsub.s32 %v813, %v815
          %v817 = vrot.slane %v803, %v816
          %v818 = vcombine.low %v794, %v810
          %v819 = vcombine.high %v794, %v810
          %v820 = vcombine.low %v801, %v817
          %v821 = vcombine.high %v801, %v817
          %822 = vst.msk [vmem:[#allocation4] sm:$0xff] %vm517, %v818
          %823 = vst.msk [vmem:[#allocation4 + $0x8] sm:$0xff] %vm517, %v819
          %824 = vst.msk [vmem:[#allocation4 + $0x10] sm:$0xff] %vm517, %v820
          %825 = vst.msk [vmem:[#allocation4 + $0x18] sm:$0xff] %vm517, %v821
          %vm826 = vcmask 7168
          %827 = vst.msk [vmem:[#allocation6] sm:$0xff] %vm826, -inf
          %828 = vst.msk [vmem:[#allocation6 + $0x8] sm:$0xff] %vm826, -inf
          %829 = vst.msk [vmem:[#allocation6 + $0x10] sm:$0xff] %vm826, -inf
          %830 = vst.msk [vmem:[#allocation6 + $0x18] sm:$0xff] %vm826, -inf
          %831 = vst.msk [vmem:[#allocation7] sm:$0xff] %vm826, 0.0
          %832 = vst.msk [vmem:[#allocation7 + $0x8] sm:$0xff] %vm826, 0.0
          %833 = vst.msk [vmem:[#allocation7 + $0x10] sm:$0xff] %vm826, 0.0
          %834 = vst.msk [vmem:[#allocation7 + $0x18] sm:$0xff] %vm826, 0.0
          %835 = vst.msk [vmem:[#allocation5] sm:$0xff] %vm517, 0.0
          %836 = vst.msk [vmem:[#allocation5 + $0x8] sm:$0xff] %vm517, 0.0
          %837 = vst.msk [vmem:[#allocation5 + $0x10] sm:$0xff] %vm517, 0.0
          %838 = vst.msk [vmem:[#allocation5 + $0x18] sm:$0xff] %vm517, 0.0
        $region56: #{tpu_custom_call.1} parent=39 // pred_fallthru
          _
        %v839 = vld [vmem:[#allocation2] sm:$0xff]
        %v840 = vld [vmem:[#allocation2 + $0x8] sm:$0xff]
        %v841 = vld [vmem:[#allocation2 + $0x10] sm:$0xff]
        %v842 = vld [vmem:[#allocation2 + $0x18] sm:$0xff]
        %s843 = smul.u32 %s28, 32
        %s844 = scalar_lea.vmem [#allocation3], %s843
        %v845 = vld [vmem:[%s844] sm:$0xff]
        %v846 = vld [vmem:[%s844 + $0x8] sm:$0xff]
        %v847 = vld [vmem:[%s844 + $0x10] sm:$0xff]
        %v848 = vld [vmem:[%s844 + $0x18] sm:$0xff]
        %s849 = scalar_lea.vmem [#allocation4], %s843
        %v850 = vld [vmem:[%s849] sm:$0xff]
        %v851 = vld [vmem:[%s849 + $0x8] sm:$0xff]
        %v852 = vld [vmem:[%s849 + $0x10] sm:$0xff]
        %v853 = vld [vmem:[%s849 + $0x18] sm:$0xff]
        %vm854 = vcmask 64512
        %v856 = vsel %vm854, %v839, 0
        %v859 = vsel %vm854, %v845, 0
        %861 = vmatprep.subr.mxu0 0.0
        %862 = vmatpush1.xpose.msra.mxu0 %v859
        %863 = vmatprep.subr.mxu0 0.0
        %864 = vmatpush1.xpose.msra.mxu0 0.0
        %865 = vmatprep.subr.mxu0 0.0
        %866 = vmatpush1.xpose.msra.mxu0 0.0
        %867 = vmatprep.subr.mxu0 0.0
        %868 = vmatpush1.xpose.msra.mxu0 0.0
        %869 = vmatprep.subr.mxu0 0.0
        %870 = vmatpush1.xpose.msra.mxu0 0.0
        %871 = vmatprep.subr.mxu0 0.0
        %872 = vmatpush1.xpose.msra.mxu0 0.0
        %873 = vmatprep.subr.mxu0 0.0
        %874 = vmatpush1.xpose.msra.mxu0 0.0
        %875 = vmatprep.subr.mxu0 0.0
        %876 = vmatpush1.xpose.msra.mxu0 0.0
        %877 = vmatprep.subr.mxu0 0.0
        %878 = vmatpush1.xpose.msra.mxu0 0.0
        %879 = vmatprep.subr.mxu0 0.0
        %880 = vmatpush1.xpose.msra.mxu0 0.0
        %881 = vmatprep.subr.mxu0 0.0
        %882 = vmatpush1.xpose.msra.mxu0 0.0
        %883 = vmatprep.subr.mxu0 0.0
        %884 = vmatpush1.xpose.msra.mxu0 0.0
        %885 = vmatprep.subr.mxu0 0.0
        %886 = vmatpush1.xpose.msra.mxu0 0.0
        %887 = vmatprep.subr.mxu0 0.0
        %888 = vmatpush1.xpose.msra.mxu0 0.0
        %889 = vmatprep.subr.mxu0 0.0
        %890 = vmatpush1.xpose.msra.mxu0 0.0
        %891 = vmatprep.subr.mxu0 0.0
        %892 = vmatpush1.xpose.msra.mxu0 0.0
        %893 = vmatprep.subr.mxu0 0.0
        %894 = vmatpush1.xpose.msra.mxu0 0.0
        %895 = vmatprep.subr.mxu0 0.0
        %896 = vmatpush1.xpose.msra.mxu0 0.0
        %897 = vmatprep.subr.mxu0 0.0
        %898 = vmatpush1.xpose.msra.mxu0 0.0
        %899 = vmatprep.subr.mxu0 0.0
        %900 = vmatpush1.xpose.msra.mxu0 0.0
        %901 = vmatprep.subr.mxu0 0.0
        %902 = vmatpush1.xpose.msra.mxu0 0.0
        %903 = vmatprep.subr.mxu0 0.0
        %904 = vmatpush1.xpose.msra.mxu0 0.0
        %905 = vmatprep.subr.mxu0 0.0
        %906 = vmatpush1.xpose.msra.mxu0 0.0
        %907 = vmatprep.subr.mxu0 0.0
        %908 = vmatpush1.xpose.msra.mxu0 0.0
        %909 = vmatprep.subr.mxu0 0.0
        %910 = vmatpush1.xpose.msra.mxu0 0.0
        %911 = vmatprep.subr.mxu0 0.0
        %912 = vmatpush1.xpose.msra.mxu0 0.0
        %913 = vmatprep.subr.mxu0 0.0
        %914 = vmatpush1.xpose.msra.mxu0 0.0
        %915 = vmatprep.subr.mxu0 0.0
        %916 = vmatpush1.xpose.msra.mxu0 0.0
        %917 = vmatprep.subr.mxu0 0.0
        %918 = vmatpush1.xpose.msra.mxu0 0.0
        %919 = vmatprep.subr.mxu0 0.0
        %920 = vmatpush1.xpose.msra.mxu0 0.0
        %921 = vmatprep.subr.mxu0 0.0
        %922 = vmatpush1.xpose.msra.mxu0 0.0
        %923 = vmatprep.subr.mxu0 0.0
        %924 = vmatpush1.xpose.msra.mxu0 0.0
        %925 = vmatprep.mubr.f32.mxu0 0.0
        %926 = vmatmul.mubr.f32.gmra.mrb[0].mxu0 %v856
        %v927 = vpop.f32.mrb[0].mxu0
        %v928 = vadd.f32 0.0, %v927
        %v929 = vpop.f32.mrb[0].mxu0
        %930 = vdwg.mxu0
        %v932 = vsel %vm854, %v840, 0
        %v935 = vsel %vm854, %v846, 0
        %937 = vmatprep.subr.mxu0 0.0
        %938 = vmatpush1.xpose.msra.mxu0 %v935
        %939 = vmatprep.subr.mxu0 0.0
        %940 = vmatpush1.xpose.msra.mxu0 0.0
        %941 = vmatprep.subr.mxu0 0.0
        %942 = vmatpush1.xpose.msra.mxu0 0.0
        %943 = vmatprep.subr.mxu0 0.0
        %944 = vmatpush1.xpose.msra.mxu0 0.0
        %945 = vmatprep.subr.mxu0 0.0
        %946 = vmatpush1.xpose.msra.mxu0 0.0
        %947 = vmatprep.subr.mxu0 0.0
        %948 = vmatpush1.xpose.msra.mxu0 0.0
        %949 = vmatprep.subr.mxu0 0.0
        %950 = vmatpush1.xpose.msra.mxu0 0.0
        %951 = vmatprep.subr.mxu0 0.0
        %952 = vmatpush1.xpose.msra.mxu0 0.0
        %953 = vmatprep.subr.mxu0 0.0
        %954 = vmatpush1.xpose.msra.mxu0 0.0
        %955 = vmatprep.subr.mxu0 0.0
        %956 = vmatpush1.xpose.msra.mxu0 0.0
        %957 = vmatprep.subr.mxu0 0.0
        %958 = vmatpush1.xpose.msra.mxu0 0.0
        %959 = vmatprep.subr.mxu0 0.0
        %960 = vmatpush1.xpose.msra.mxu0 0.0
        %961 = vmatprep.subr.mxu0 0.0
        %962 = vmatpush1.xpose.msra.mxu0 0.0
        %963 = vmatprep.subr.mxu0 0.0
        %964 = vmatpush1.xpose.msra.mxu0 0.0
        %965 = vmatprep.subr.mxu0 0.0
        %966 = vmatpush1.xpose.msra.mxu0 0.0
        %967 = vmatprep.subr.mxu0 0.0
        %968 = vmatpush1.xpose.msra.mxu0 0.0
        %969 = vmatprep.subr.mxu0 0.0
        %970 = vmatpush1.xpose.msra.mxu0 0.0
        %971 = vmatprep.subr.mxu0 0.0
        %972 = vmatpush1.xpose.msra.mxu0 0.0
        %973 = vmatprep.subr.mxu0 0.0
        %974 = vmatpush1.xpose.msra.mxu0 0.0
        %975 = vmatprep.subr.mxu0 0.0
        %976 = vmatpush1.xpose.msra.mxu0 0.0
        %977 = vmatprep.subr.mxu0 0.0
        %978 = vmatpush1.xpose.msra.mxu0 0.0
        %979 = vmatprep.subr.mxu0 0.0
        %980 = vmatpush1.xpose.msra.mxu0 0.0
        %981 = vmatprep.subr.mxu0 0.0
        %982 = vmatpush1.xpose.msra.mxu0 0.0
        %983 = vmatprep.subr.mxu0 0.0
        %984 = vmatpush1.xpose.msra.mxu0 0.0
        %985 = vmatprep.subr.mxu0 0.0
        %986 = vmatpush1.xpose.msra.mxu0 0.0
        %987 = vmatprep.subr.mxu0 0.0
        %988 = vmatpush1.xpose.msra.mxu0 0.0
        %989 = vmatprep.subr.mxu0 0.0
        %990 = vmatpush1.xpose.msra.mxu0 0.0
        %991 = vmatprep.subr.mxu0 0.0
        %992 = vmatpush1.xpose.msra.mxu0 0.0
        %993 = vmatprep.subr.mxu0 0.0
        %994 = vmatpush1.xpose.msra.mxu0 0.0
        %995 = vmatprep.subr.mxu0 0.0
        %996 = vmatpush1.xpose.msra.mxu0 0.0
        %997 = vmatprep.subr.mxu0 0.0
        %998 = vmatpush1.xpose.msra.mxu0 0.0
        %999 = vmatprep.subr.mxu0 0.0
        %1000 = vmatpush1.xpose.msra.mxu0 0.0
        %1001 = vmatprep.mubr.f32.mxu0 0.0
        %1002 = vmatmul.mubr.f32.gmra.mrb[0].mxu0 %v932
        %v1003 = vpop.f32.mrb[0].mxu0
        %v1004 = vadd.f32 0.0, %v1003
        %v1005 = vpop.f32.mrb[0].mxu0
        %1006 = vdwg.mxu0
        %v1008 = vsel %vm854, %v841, 0
        %v1011 = vsel %vm854, %v847, 0
        %1013 = vmatprep.subr.mxu0 0.0
        %1014 = vmatpush1.xpose.msra.mxu0 %v1011
        %1015 = vmatprep.subr.mxu0 0.0
        %1016 = vmatpush1.xpose.msra.mxu0 0.0
        %1017 = vmatprep.subr.mxu0 0.0
        %1018 = vmatpush1.xpose.msra.mxu0 0.0
        %1019 = vmatprep.subr.mxu0 0.0
        %1020 = vmatpush1.xpose.msra.mxu0 0.0
        %1021 = vmatprep.subr.mxu0 0.0
        %1022 = vmatpush1.xpose.msra.mxu0 0.0
        %1023 = vmatprep.subr.mxu0 0.0
        %1024 = vmatpush1.xpose.msra.mxu0 0.0
        %1025 = vmatprep.subr.mxu0 0.0
        %1026 = vmatpush1.xpose.msra.mxu0 0.0
        %1027 = vmatprep.subr.mxu0 0.0
        %1028 = vmatpush1.xpose.msra.mxu0 0.0
        %1029 = vmatprep.subr.mxu0 0.0
        %1030 = vmatpush1.xpose.msra.mxu0 0.0
        %1031 = vmatprep.subr.mxu0 0.0
        %1032 = vmatpush1.xpose.msra.mxu0 0.0
        %1033 = vmatprep.subr.mxu0 0.0
        %1034 = vmatpush1.xpose.msra.mxu0 0.0
        %1035 = vmatprep.subr.mxu0 0.0
        %1036 = vmatpush1.xpose.msra.mxu0 0.0
        %1037 = vmatprep.subr.mxu0 0.0
        %1038 = vmatpush1.xpose.msra.mxu0 0.0
        %1039 = vmatprep.subr.mxu0 0.0
        %1040 = vmatpush1.xpose.msra.mxu0 0.0
        %1041 = vmatprep.subr.mxu0 0.0
        %1042 = vmatpush1.xpose.msra.mxu0 0.0
        %1043 = vmatprep.subr.mxu0 0.0
        %1044 = vmatpush1.xpose.msra.mxu0 0.0
        %1045 = vmatprep.subr.mxu0 0.0
        %1046 = vmatpush1.xpose.msra.mxu0 0.0
        %1047 = vmatprep.subr.mxu0 0.0
        %1048 = vmatpush1.xpose.msra.mxu0 0.0
        %1049 = vmatprep.subr.mxu0 0.0
        %1050 = vmatpush1.xpose.msra.mxu0 0.0
        %1051 = vmatprep.subr.mxu0 0.0
        %1052 = vmatpush1.xpose.msra.mxu0 0.0
        %1053 = vmatprep.subr.mxu0 0.0
        %1054 = vmatpush1.xpose.msra.mxu0 0.0
        %1055 = vmatprep.subr.mxu0 0.0
        %1056 = vmatpush1.xpose.msra.mxu0 0.0
        %1057 = vmatprep.subr.mxu0 0.0
        %1058 = vmatpush1.xpose.msra.mxu0 0.0
        %1059 = vmatprep.subr.mxu0 0.0
        %1060 = vmatpush1.xpose.msra.mxu0 0.0
        %1061 = vmatprep.subr.mxu0 0.0
        %1062 = vmatpush1.xpose.msra.mxu0 0.0
        %1063 = vmatprep.subr.mxu0 0.0
        %1064 = vmatpush1.xpose.msra.mxu0 0.0
        %1065 = vmatprep.subr.mxu0 0.0
        %1066 = vmatpush1.xpose.msra.mxu0 0.0
        %1067 = vmatprep.subr.mxu0 0.0
        %1068 = vmatpush1.xpose.msra.mxu0 0.0
        %1069 = vmatprep.subr.mxu0 0.0
        %1070 = vmatpush1.xpose.msra.mxu0 0.0
        %1071 = vmatprep.subr.mxu0 0.0
        %1072 = vmatpush1.xpose.msra.mxu0 0.0
        %1073 = vmatprep.subr.mxu0 0.0
        %1074 = vmatpush1.xpose.msra.mxu0 0.0
        %1075 = vmatprep.subr.mxu0 0.0
        %1076 = vmatpush1.xpose.msra.mxu0 0.0
        %1077 = vmatprep.mubr.f32.mxu0 0.0
        %1078 = vmatmul.mubr.f32.gmra.mrb[0].mxu0 %v1008
        %v1079 = vpop.f32.mrb[0].mxu0
        %v1080 = vadd.f32 0.0, %v1079
        %v1081 = vpop.f32.mrb[0].mxu0
        %1082 = vdwg.mxu0
        %v1084 = vsel %vm854, %v842, 0
        %v1087 = vsel %vm854, %v848, 0
        %1089 = vmatprep.subr.mxu0 0.0
        %1090 = vmatpush1.xpose.msra.mxu0 %v1087
        %1091 = vmatprep.subr.mxu0 0.0
        %1092 = vmatpush1.xpose.msra.mxu0 0.0
        %1093 = vmatprep.subr.mxu0 0.0
        %1094 = vmatpush1.xpose.msra.mxu0 0.0
        %1095 = vmatprep.subr.mxu0 0.0
        %1096 = vmatpush1.xpose.msra.mxu0 0.0
        %1097 = vmatprep.subr.mxu0 0.0
        %1098 = vmatpush1.xpose.msra.mxu0 0.0
        %1099 = vmatprep.subr.mxu0 0.0
        %1100 = vmatpush1.xpose.msra.mxu0 0.0
        %1101 = vmatprep.subr.mxu0 0.0
        %1102 = vmatpush1.xpose.msra.mxu0 0.0
        %1103 = vmatprep.subr.mxu0 0.0
        %1104 = vmatpush1.xpose.msra.mxu0 0.0
        %1105 = vmatprep.subr.mxu0 0.0
        %1106 = vmatpush1.xpose.msra.mxu0 0.0
        %1107 = vmatprep.subr.mxu0 0.0
        %1108 = vmatpush1.xpose.msra.mxu0 0.0
        %1109 = vmatprep.subr.mxu0 0.0
        %1110 = vmatpush1.xpose.msra.mxu0 0.0
        %1111 = vmatprep.subr.mxu0 0.0
        %1112 = vmatpush1.xpose.msra.mxu0 0.0
        %1113 = vmatprep.subr.mxu0 0.0
        %1114 = vmatpush1.xpose.msra.mxu0 0.0
        %1115 = vmatprep.subr.mxu0 0.0
        %1116 = vmatpush1.xpose.msra.mxu0 0.0
        %1117 = vmatprep.subr.mxu0 0.0
        %1118 = vmatpush1.xpose.msra.mxu0 0.0
        %1119 = vmatprep.subr.mxu0 0.0
        %1120 = vmatpush1.xpose.msra.mxu0 0.0
        %1121 = vmatprep.subr.mxu0 0.0
        %1122 = vmatpush1.xpose.msra.mxu0 0.0
        %1123 = vmatprep.subr.mxu0 0.0
        %1124 = vmatpush1.xpose.msra.mxu0 0.0
        %1125 = vmatprep.subr.mxu0 0.0
        %1126 = vmatpush1.xpose.msra.mxu0 0.0
        %1127 = vmatprep.subr.mxu0 0.0
        %1128 = vmatpush1.xpose.msra.mxu0 0.0
        %1129 = vmatprep.subr.mxu0 0.0
        %1130 = vmatpush1.xpose.msra.mxu0 0.0
        %1131 = vmatprep.subr.mxu0 0.0
        %1132 = vmatpush1.xpose.msra.mxu0 0.0
        %1133 = vmatprep.subr.mxu0 0.0
        %1134 = vmatpush1.xpose.msra.mxu0 0.0
        %1135 = vmatprep.subr.mxu0 0.0
        %1136 = vmatpush1.xpose.msra.mxu0 0.0
        %1137 = vmatprep.subr.mxu0 0.0
        %1138 = vmatpush1.xpose.msra.mxu0 0.0
        %1139 = vmatprep.subr.mxu0 0.0
        %1140 = vmatpush1.xpose.msra.mxu0 0.0
        %1141 = vmatprep.subr.mxu0 0.0
        %1142 = vmatpush1.xpose.msra.mxu0 0.0
        %1143 = vmatprep.subr.mxu0 0.0
        %1144 = vmatpush1.xpose.msra.mxu0 0.0
        %1145 = vmatprep.subr.mxu0 0.0
        %1146 = vmatpush1.xpose.msra.mxu0 0.0
        %1147 = vmatprep.subr.mxu0 0.0
        %1148 = vmatpush1.xpose.msra.mxu0 0.0
        %1149 = vmatprep.subr.mxu0 0.0
        %1150 = vmatpush1.xpose.msra.mxu0 0.0
        %1151 = vmatprep.subr.mxu0 0.0
        %1152 = vmatpush1.xpose.msra.mxu0 0.0
        %1153 = vmatprep.mubr.f32.mxu0 0.0
        %1154 = vmatmul.mubr.f32.gmra.mrb[0].mxu0 %v1084
        %v1155 = vpop.f32.mrb[0].mxu0
        %v1156 = vadd.f32 0.0, %v1155
        %v1157 = vpop.f32.mrb[0].mxu0
        %1158 = vdwg.mxu0
        %v1159 = vld [vmem:[#allocation6] sm:$0xff]
        %v1160 = vld [vmem:[#allocation6 + $0x8] sm:$0xff]
        %v1161 = vld [vmem:[#allocation6 + $0x10] sm:$0xff]
        %v1162 = vld [vmem:[#allocation6 + $0x18] sm:$0xff]
        %v1163 = vsel %vm854, %v928, -inf
        %1164 = vmax.xlane.f32.xlu0 %v1163
        %v1165 = vpop.xlane.xlu0 %1164
        %v1166 = vsel %vm854, %v1004, -inf
        %1167 = vmax.xlane.f32.xlu0 %v1166
        %v1168 = vpop.xlane.xlu0 %1167
        %v1169 = vsel %vm854, %v1080, -inf
        %1170 = vmax.xlane.f32.xlu0 %v1169
        %v1171 = vpop.xlane.xlu0 %1170
        %v1172 = vsel %vm854, %v1156, -inf
        %1173 = vmax.xlane.f32.xlu0 %v1172
        %v1174 = vpop.xlane.xlu0 %1173
        %v1175 = vmax.f32 %v1159, %v1165
        %v1176 = vmax.f32 %v1160, %v1168
        %v1177 = vmax.f32 %v1161, %v1171
        %v1178 = vmax.f32 %v1162, %v1174
        %v1179 = vsub.f32 %v1159, %v1175
        %v1180 = vsub.f32 %v1160, %v1176
        %v1181 = vsub.f32 %v1161, %v1177
        %v1182 = vsub.f32 %v1162, %v1178
        %v1183 = vmul.f32 %v1179, 1.442695
        %v1184 = vpow.pop %v1183
        %v1185 = vmul.f32 %v1180, 1.442695
        %v1186 = vpow.pop %v1185
        %v1187 = vmul.f32 %v1181, 1.442695
        %v1188 = vpow.pop %v1187
        %v1189 = vmul.f32 %v1182, 1.442695
        %v1190 = vpow.pop %v1189
        %1192 = vset.pattern.permute.xlu0 0
        %1193 = vperm.xlu0 %1192, %v1175
        %v1194 = vpop.permute.xlu0 %1193
        %1197 = vset.pattern.permute.xlu0 0
        %1198 = vperm.xlu0 %1197, %v1176
        %v1199 = vpop.permute.xlu0 %1198
        %1202 = vset.pattern.permute.xlu0 0
        %1203 = vperm.xlu0 %1202, %v1177
        %v1204 = vpop.permute.xlu0 %1203
        %1207 = vset.pattern.permute.xlu0 0
        %1208 = vperm.xlu0 %1207, %v1178
        %v1209 = vpop.permute.xlu0 %1208
        %v1211 = vsub.f32 %v928, %v1194
        %v1212 = vsub.f32 %v1004, %v1199
        %v1213 = vsub.f32 %v1080, %v1204
        %v1214 = vsub.f32 %v1156, %v1209
        %v1215 = vmul.f32 %v1211, 1.442695
        %v1216 = vpow.pop %v1215
        %v1217 = vmul.f32 %v1212, 1.442695
        %v1218 = vpow.pop %v1217
        %v1219 = vmul.f32 %v1213, 1.442695
        %v1220 = vpow.pop %v1219
        %v1221 = vmul.f32 %v1214, 1.442695
        %v1222 = vpow.pop %v1221
        %v1223 = vld [vmem:[#allocation7] sm:$0xff]
        %v1224 = vld [vmem:[#allocation7 + $0x8] sm:$0xff]
        %v1225 = vld [vmem:[#allocation7 + $0x10] sm:$0xff]
        %v1226 = vld [vmem:[#allocation7 + $0x18] sm:$0xff]
        %v1227 = vmul.f32 %v1184, %v1223
        %v1228 = vmul.f32 %v1186, %v1224
        %v1229 = vmul.f32 %v1188, %v1225
        %v1230 = vmul.f32 %v1190, %v1226
        %v1231 = vsel %vm854, %v1216, 0.0
        %1232 = vadd.xlane.f32.xlu0 %v1231
        %v1233 = vpop.xlane.xlu0 %1232
        %v1234 = vsel %vm854, %v1218, 0.0
        %1235 = vadd.xlane.f32.xlu0 %v1234
        %v1236 = vpop.xlane.xlu0 %1235
        %v1237 = vsel %vm854, %v1220, 0.0
        %1238 = vadd.xlane.f32.xlu0 %v1237
        %v1239 = vpop.xlane.xlu0 %1238
        %v1240 = vsel %vm854, %v1222, 0.0
        %1241 = vadd.xlane.f32.xlu0 %v1240
        %v1242 = vpop.xlane.xlu0 %1241
        %v1243 = vadd.f32 %v1227, %v1233
        %v1244 = vadd.f32 %v1228, %v1236
        %v1245 = vadd.f32 %v1229, %v1239
        %v1246 = vadd.f32 %v1230, %v1242
        %vm1247 = vcmask 7168
        %1248 = vst.msk [vmem:[#allocation7] sm:$0xff] %vm1247, %v1243
        %1249 = vst.msk [vmem:[#allocation7 + $0x8] sm:$0xff] %vm1247, %v1244
        %1250 = vst.msk [vmem:[#allocation7 + $0x10] sm:$0xff] %vm1247, %v1245
        %1251 = vst.msk [vmem:[#allocation7 + $0x18] sm:$0xff] %vm1247, %v1246
        %v1252 = vld [vmem:[#allocation5] sm:$0xff]
        %v1253 = vld [vmem:[#allocation5 + $0x8] sm:$0xff]
        %v1254 = vld [vmem:[#allocation5 + $0x10] sm:$0xff]
        %v1255 = vld [vmem:[#allocation5 + $0x18] sm:$0xff]
        %1257 = vset.pattern.permute.xlu0 0
        %1258 = vperm.xlu0 %1257, %v1184
        %v1259 = vpop.permute.xlu0 %1258
        %1262 = vset.pattern.permute.xlu0 0
        %1263 = vperm.xlu0 %1262, %v1186
        %v1264 = vpop.permute.xlu0 %1263
        %1267 = vset.pattern.permute.xlu0 0
        %1268 = vperm.xlu0 %1267, %v1188
        %v1269 = vpop.permute.xlu0 %1268
        %1272 = vset.pattern.permute.xlu0 0
        %1273 = vperm.xlu0 %1272, %v1190
        %v1274 = vpop.permute.xlu0 %1273
        %v1276 = vmul.f32 %v1259, %v1252
        %v1277 = vmul.f32 %v1264, %v1253
        %v1278 = vmul.f32 %v1269, %v1254
        %v1279 = vmul.f32 %v1274, %v1255
        %v1281 = vsel %vm854, %v1216, 0
        %1283 = vmatprep.subr.mxu0 0.0
        %1284 = vmatpush1.msra.mxu0 %v850
        %1285 = vmatprep.subr.mxu0 0.0
        %1286 = vmatpush1.msra.mxu0 0.0
        %1287 = vmatprep.subr.mxu0 0.0
        %1288 = vmatpush1.msra.mxu0 0.0
        %1289 = vmatprep.subr.mxu0 0.0
        %1290 = vmatpush1.msra.mxu0 0.0
        %1291 = vmatprep.subr.mxu0 0.0
        %1292 = vmatpush1.msra.mxu0 0.0
        %1293 = vmatprep.subr.mxu0 0.0
        %1294 = vmatpush1.msra.mxu0 0.0
        %1295 = vmatprep.subr.mxu0 0.0
        %1296 = vmatpush1.msra.mxu0 0.0
        %1297 = vmatprep.subr.mxu0 0.0
        %1298 = vmatpush1.msra.mxu0 0.0
        %1299 = vmatprep.subr.mxu0 0.0
        %1300 = vmatpush1.msra.mxu0 0.0
        %1301 = vmatprep.subr.mxu0 0.0
        %1302 = vmatpush1.msra.mxu0 0.0
        %1303 = vmatprep.subr.mxu0 0.0
        %1304 = vmatpush1.msra.mxu0 0.0
        %1305 = vmatprep.subr.mxu0 0.0
        %1306 = vmatpush1.msra.mxu0 0.0
        %1307 = vmatprep.subr.mxu0 0.0
        %1308 = vmatpush1.msra.mxu0 0.0
        %1309 = vmatprep.subr.mxu0 0.0
        %1310 = vmatpush1.msra.mxu0 0.0
        %1311 = vmatprep.subr.mxu0 0.0
        %1312 = vmatpush1.msra.mxu0 0.0
        %1313 = vmatprep.subr.mxu0 0.0
        %1314 = vmatpush1.msra.mxu0 0.0
        %1315 = vmatprep.subr.mxu0 0.0
        %1316 = vmatpush1.msra.mxu0 0.0
        %1317 = vmatprep.subr.mxu0 0.0
        %1318 = vmatpush1.msra.mxu0 0.0
        %1319 = vmatprep.subr.mxu0 0.0
        %1320 = vmatpush1.msra.mxu0 0.0
        %1321 = vmatprep.subr.mxu0 0.0
        %1322 = vmatpush1.msra.mxu0 0.0
        %1323 = vmatprep.subr.mxu0 0.0
        %1324 = vmatpush1.msra.mxu0 0.0
        %1325 = vmatprep.subr.mxu0 0.0
        %1326 = vmatpush1.msra.mxu0 0.0
        %1327 = vmatprep.subr.mxu0 0.0
        %1328 = vmatpush1.msra.mxu0 0.0
        %1329 = vmatprep.subr.mxu0 0.0
        %1330 = vmatpush1.msra.mxu0 0.0
        %1331 = vmatprep.subr.mxu0 0.0
        %1332 = vmatpush1.msra.mxu0 0.0
        %1333 = vmatprep.subr.mxu0 0.0
        %1334 = vmatpush1.msra.mxu0 0.0
        %1335 = vmatprep.subr.mxu0 0.0
        %1336 = vmatpush1.msra.mxu0 0.0
        %1337 = vmatprep.subr.mxu0 0.0
        %1338 = vmatpush1.msra.mxu0 0.0
        %1339 = vmatprep.subr.mxu0 0.0
        %1340 = vmatpush1.msra.mxu0 0.0
        %1341 = vmatprep.subr.mxu0 0.0
        %1342 = vmatpush1.msra.mxu0 0.0
        %1343 = vmatprep.subr.mxu0 0.0
        %1344 = vmatpush1.msra.mxu0 0.0
        %1345 = vmatprep.subr.mxu0 0.0
        %1346 = vmatpush1.msra.mxu0 0.0
        %1347 = vmatprep.mubr.f32.mxu0 0.0
        %1348 = vmatmul.mubr.f32.gmra.mrb[0].mxu0 %v1281
        %v1349 = vpop.f32.mrb[0].mxu0
        %v1350 = vadd.f32 0.0, %v1349
        %v1351 = vpop.f32.mrb[0].mxu0
        %1352 = vdwg.mxu0
        %v1354 = vsel %vm854, %v1218, 0
        %1356 = vmatprep.subr.mxu0 0.0
        %1357 = vmatpush1.msra.mxu0 %v851
        %1358 = vmatprep.subr.mxu0 0.0
        %1359 = vmatpush1.msra.mxu0 0.0
        %1360 = vmatprep.subr.mxu0 0.0
        %1361 = vmatpush1.msra.mxu0 0.0
        %1362 = vmatprep.subr.mxu0 0.0
        %1363 = vmatpush1.msra.mxu0 0.0
        %1364 = vmatprep.subr.mxu0 0.0
        %1365 = vmatpush1.msra.mxu0 0.0
        %1366 = vmatprep.subr.mxu0 0.0
        %1367 = vmatpush1.msra.mxu0 0.0
        %1368 = vmatprep.subr.mxu0 0.0
        %1369 = vmatpush1.msra.mxu0 0.0
        %1370 = vmatprep.subr.mxu0 0.0
        %1371 = vmatpush1.msra.mxu0 0.0
        %1372 = vmatprep.subr.mxu0 0.0
        %1373 = vmatpush1.msra.mxu0 0.0
        %1374 = vmatprep.subr.mxu0 0.0
        %1375 = vmatpush1.msra.mxu0 0.0
        %1376 = vmatprep.subr.mxu0 0.0
        %1377 = vmatpush1.msra.mxu0 0.0
        %1378 = vmatprep.subr.mxu0 0.0
        %1379 = vmatpush1.msra.mxu0 0.0
        %1380 = vmatprep.subr.mxu0 0.0
        %1381 = vmatpush1.msra.mxu0 0.0
        %1382 = vmatprep.subr.mxu0 0.0
        %1383 = vmatpush1.msra.mxu0 0.0
        %1384 = vmatprep.subr.mxu0 0.0
        %1385 = vmatpush1.msra.mxu0 0.0
        %1386 = vmatprep.subr.mxu0 0.0
        %1387 = vmatpush1.msra.mxu0 0.0
        %1388 = vmatprep.subr.mxu0 0.0
        %1389 = vmatpush1.msra.mxu0 0.0
        %1390 = vmatprep.subr.mxu0 0.0
        %1391 = vmatpush1.msra.mxu0 0.0
        %1392 = vmatprep.subr.mxu0 0.0
        %1393 = vmatpush1.msra.mxu0 0.0
        %1394 = vmatprep.subr.mxu0 0.0
        %1395 = vmatpush1.msra.mxu0 0.0
        %1396 = vmatprep.subr.mxu0 0.0
        %1397 = vmatpush1.msra.mxu0 0.0
        %1398 = vmatprep.subr.mxu0 0.0
        %1399 = vmatpush1.msra.mxu0 0.0
        %1400 = vmatprep.subr.mxu0 0.0
        %1401 = vmatpush1.msra.mxu0 0.0
        %1402 = vmatprep.subr.mxu0 0.0
        %1403 = vmatpush1.msra.mxu0 0.0
        %1404 = vmatprep.subr.mxu0 0.0
        %1405 = vmatpush1.msra.mxu0 0.0
        %1406 = vmatprep.subr.mxu0 0.0
        %1407 = vmatpush1.msra.mxu0 0.0
        %1408 = vmatprep.subr.mxu0 0.0
        %1409 = vmatpush1.msra.mxu0 0.0
        %1410 = vmatprep.subr.mxu0 0.0
        %1411 = vmatpush1.msra.mxu0 0.0
        %1412 = vmatprep.subr.mxu0 0.0
        %1413 = vmatpush1.msra.mxu0 0.0
        %1414 = vmatprep.subr.mxu0 0.0
        %1415 = vmatpush1.msra.mxu0 0.0
        %1416 = vmatprep.subr.mxu0 0.0
        %1417 = vmatpush1.msra.mxu0 0.0
        %1418 = vmatprep.subr.mxu0 0.0
        %1419 = vmatpush1.msra.mxu0 0.0
        %1420 = vmatprep.mubr.f32.mxu0 0.0
        %1421 = vmatmul.mubr.f32.gmra.mrb[0].mxu0 %v1354
        %v1422 = vpop.f32.mrb[0].mxu0
        %v1423 = vadd.f32 0.0, %v1422
        %v1424 = vpop.f32.mrb[0].mxu0
        %1425 = vdwg.mxu0
        %v1427 = vsel %vm854, %v1220, 0
        %1429 = vmatprep.subr.mxu0 0.0
        %1430 = vmatpush1.msra.mxu0 %v852
        %1431 = vmatprep.subr.mxu0 0.0
        %1432 = vmatpush1.msra.mxu0 0.0
        %1433 = vmatprep.subr.mxu0 0.0
        %1434 = vmatpush1.msra.mxu0 0.0
        %1435 = vmatprep.subr.mxu0 0.0
        %1436 = vmatpush1.msra.mxu0 0.0
        %1437 = vmatprep.subr.mxu0 0.0
        %1438 = vmatpush1.msra.mxu0 0.0
        %1439 = vmatprep.subr.mxu0 0.0
        %1440 = vmatpush1.msra.mxu0 0.0
        %1441 = vmatprep.subr.mxu0 0.0
        %1442 = vmatpush1.msra.mxu0 0.0
        %1443 = vmatprep.subr.mxu0 0.0
        %1444 = vmatpush1.msra.mxu0 0.0
        %1445 = vmatprep.subr.mxu0 0.0
        %1446 = vmatpush1.msra.mxu0 0.0
        %1447 = vmatprep.subr.mxu0 0.0
        %1448 = vmatpush1.msra.mxu0 0.0
        %1449 = vmatprep.subr.mxu0 0.0
        %1450 = vmatpush1.msra.mxu0 0.0
        %1451 = vmatprep.subr.mxu0 0.0
        %1452 = vmatpush1.msra.mxu0 0.0
        %1453 = vmatprep.subr.mxu0 0.0
        %1454 = vmatpush1.msra.mxu0 0.0
        %1455 = vmatprep.subr.mxu0 0.0
        %1456 = vmatpush1.msra.mxu0 0.0
        %1457 = vmatprep.subr.mxu0 0.0
        %1458 = vmatpush1.msra.mxu0 0.0
        %1459 = vmatprep.subr.mxu0 0.0
        %1460 = vmatpush1.msra.mxu0 0.0
        %1461 = vmatprep.subr.mxu0 0.0
        %1462 = vmatpush1.msra.mxu0 0.0
        %1463 = vmatprep.subr.mxu0 0.0
        %1464 = vmatpush1.msra.mxu0 0.0
        %1465 = vmatprep.subr.mxu0 0.0
        %1466 = vmatpush1.msra.mxu0 0.0
        %1467 = vmatprep.subr.mxu0 0.0
        %1468 = vmatpush1.msra.mxu0 0.0
        %1469 = vmatprep.subr.mxu0 0.0
        %1470 = vmatpush1.msra.mxu0 0.0
        %1471 = vmatprep.subr.mxu0 0.0
        %1472 = vmatpush1.msra.mxu0 0.0
        %1473 = vmatprep.subr.mxu0 0.0
        %1474 = vmatpush1.msra.mxu0 0.0
        %1475 = vmatprep.subr.mxu0 0.0
        %1476 = vmatpush1.msra.mxu0 0.0
        %1477 = vmatprep.subr.mxu0 0.0
        %1478 = vmatpush1.msra.mxu0 0.0
        %1479 = vmatprep.subr.mxu0 0.0
        %1480 = vmatpush1.msra.mxu0 0.0
        %1481 = vmatprep.subr.mxu0 0.0
        %1482 = vmatpush1.msra.mxu0 0.0
        %1483 = vmatprep.subr.mxu0 0.0
        %1484 = vmatpush1.msra.mxu0 0.0
        %1485 = vmatprep.subr.mxu0 0.0
        %1486 = vmatpush1.msra.mxu0 0.0
        %1487 = vmatprep.subr.mxu0 0.0
        %1488 = vmatpush1.msra.mxu0 0.0
        %1489 = vmatprep.subr.mxu0 0.0
        %1490 = vmatpush1.msra.mxu0 0.0
        %1491 = vmatprep.subr.mxu0 0.0
        %1492 = vmatpush1.msra.mxu0 0.0
        %1493 = vmatprep.mubr.f32.mxu0 0.0
        %1494 = vmatmul.mubr.f32.gmra.mrb[0].mxu0 %v1427
        %v1495 = vpop.f32.mrb[0].mxu0
        %v1496 = vadd.f32 0.0, %v1495
        %v1497 = vpop.f32.mrb[0].mxu0
        %1498 = vdwg.mxu0
        %v1500 = vsel %vm854, %v1222, 0
        %1502 = vmatprep.subr.mxu0 0.0
        %1503 = vmatpush1.msra.mxu0 %v853
        %1504 = vmatprep.subr.mxu0 0.0
        %1505 = vmatpush1.msra.mxu0 0.0
        %1506 = vmatprep.subr.mxu0 0.0
        %1507 = vmatpush1.msra.mxu0 0.0
        %1508 = vmatprep.subr.mxu0 0.0
        %1509 = vmatpush1.msra.mxu0 0.0
        %1510 = vmatprep.subr.mxu0 0.0
        %1511 = vmatpush1.msra.mxu0 0.0
        %1512 = vmatprep.subr.mxu0 0.0
        %1513 = vmatpush1.msra.mxu0 0.0
        %1514 = vmatprep.subr.mxu0 0.0
        %1515 = vmatpush1.msra.mxu0 0.0
        %1516 = vmatprep.subr.mxu0 0.0
        %1517 = vmatpush1.msra.mxu0 0.0
        %1518 = vmatprep.subr.mxu0 0.0
        %1519 = vmatpush1.msra.mxu0 0.0
        %1520 = vmatprep.subr.mxu0 0.0
        %1521 = vmatpush1.msra.mxu0 0.0
        %1522 = vmatprep.subr.mxu0 0.0
        %1523 = vmatpush1.msra.mxu0 0.0
        %1524 = vmatprep.subr.mxu0 0.0
        %1525 = vmatpush1.msra.mxu0 0.0
        %1526 = vmatprep.subr.mxu0 0.0
        %1527 = vmatpush1.msra.mxu0 0.0
        %1528 = vmatprep.subr.mxu0 0.0
        %1529 = vmatpush1.msra.mxu0 0.0
        %1530 = vmatprep.subr.mxu0 0.0
        %1531 = vmatpush1.msra.mxu0 0.0
        %1532 = vmatprep.subr.mxu0 0.0
        %1533 = vmatpush1.msra.mxu0 0.0
        %1534 = vmatprep.subr.mxu0 0.0
        %1535 = vmatpush1.msra.mxu0 0.0
        %1536 = vmatprep.subr.mxu0 0.0
        %1537 = vmatpush1.msra.mxu0 0.0
        %1538 = vmatprep.subr.mxu0 0.0
        %1539 = vmatpush1.msra.mxu0 0.0
        %1540 = vmatprep.subr.mxu0 0.0
        %1541 = vmatpush1.msra.mxu0 0.0
        %1542 = vmatprep.subr.mxu0 0.0
        %1543 = vmatpush1.msra.mxu0 0.0
        %1544 = vmatprep.subr.mxu0 0.0
        %1545 = vmatpush1.msra.mxu0 0.0
        %1546 = vmatprep.subr.mxu0 0.0
        %1547 = vmatpush1.msra.mxu0 0.0
        %1548 = vmatprep.subr.mxu0 0.0
        %1549 = vmatpush1.msra.mxu0 0.0
        %1550 = vmatprep.subr.mxu0 0.0
        %1551 = vmatpush1.msra.mxu0 0.0
        %1552 = vmatprep.subr.mxu0 0.0
        %1553 = vmatpush1.msra.mxu0 0.0
        %1554 = vmatprep.subr.mxu0 0.0
        %1555 = vmatpush1.msra.mxu0 0.0
        %1556 = vmatprep.subr.mxu0 0.0
        %1557 = vmatpush1.msra.mxu0 0.0
        %1558 = vmatprep.subr.mxu0 0.0
        %1559 = vmatpush1.msra.mxu0 0.0
        %1560 = vmatprep.subr.mxu0 0.0
        %1561 = vmatpush1.msra.mxu0 0.0
        %1562 = vmatprep.subr.mxu0 0.0
        %1563 = vmatpush1.msra.mxu0 0.0
        %1564 = vmatprep.subr.mxu0 0.0
        %1565 = vmatpush1.msra.mxu0 0.0
        %1566 = vmatprep.mubr.f32.mxu0 0.0
        %1567 = vmatmul.mubr.f32.gmra.mrb[0].mxu0 %v1500
        %v1568 = vpop.f32.mrb[0].mxu0
        %v1569 = vadd.f32 0.0, %v1568
        %v1570 = vpop.f32.mrb[0].mxu0
        %1571 = vdwg.mxu0
        %v1572 = vadd.f32 %v1276, %v1350
        %v1573 = vadd.f32 %v1277, %v1423
        %v1574 = vadd.f32 %v1278, %v1496
        %v1575 = vadd.f32 %v1279, %v1569
        %1576 = vst.msk [vmem:[#allocation5] sm:$0xff] %vm854, %v1572
        %1577 = vst.msk [vmem:[#allocation5 + $0x8] sm:$0xff] %vm854, %v1573
        %1578 = vst.msk [vmem:[#allocation5 + $0x10] sm:$0xff] %vm854, %v1574
        %1579 = vst.msk [vmem:[#allocation5 + $0x18] sm:$0xff] %vm854, %v1575
        %1580 = vst.msk [vmem:[#allocation6] sm:$0xff] %vm1247, %v1175
        %1581 = vst.msk [vmem:[#allocation6 + $0x8] sm:$0xff] %vm1247, %v1176
        %1582 = vst.msk [vmem:[#allocation6 + $0x10] sm:$0xff] %vm1247, %v1177
        %1583 = vst.msk [vmem:[#allocation6 + $0x18] sm:$0xff] %vm1247, %v1178
        // Predicated region
        $region57: #{tpu_custom_call.1} parent=39 // pred_check
          %p1584 = pneg %p281
        $region58: #{tpu_custom_call.1} parent=39 // pred_check_branch
          %1586 = sbr.rel (%p1584) target = $region60
        $region59: #{tpu_custom_call.1} parent=39 // pred_region
          %v1587 = vld [vmem:[#allocation5] sm:$0xff]
          %v1588 = vld [vmem:[#allocation5 + $0x8] sm:$0xff]
          %v1589 = vld [vmem:[#allocation5 + $0x10] sm:$0xff]
          %v1590 = vld [vmem:[#allocation5 + $0x18] sm:$0xff]
          %v1591 = vld [vmem:[#allocation7] sm:$0xff]
          %v1592 = vld [vmem:[#allocation7 + $0x8] sm:$0xff]
          %v1593 = vld [vmem:[#allocation7 + $0x10] sm:$0xff]
          %v1594 = vld [vmem:[#allocation7 + $0x18] sm:$0xff]
          %1596 = vset.pattern.permute.xlu0 0
          %1597 = vperm.xlu0 %1596, %v1591
          %v1598 = vpop.permute.xlu0 %1597
          %1601 = vset.pattern.permute.xlu0 0
          %1602 = vperm.xlu0 %1601, %v1592
          %v1603 = vpop.permute.xlu0 %1602
          %1606 = vset.pattern.permute.xlu0 0
          %1607 = vperm.xlu0 %1606, %v1593
          %v1608 = vpop.permute.xlu0 %1607
          %1611 = vset.pattern.permute.xlu0 0
          %1612 = vperm.xlu0 %1611, %v1594
          %v1613 = vpop.permute.xlu0 %1612
          %v1615 = vrcp.pop %v1598
          %v1616 = vmul.f32 %v1587, %v1615
          %v1617 = vrcp.pop %v1603
          %v1618 = vmul.f32 %v1588, %v1617
          %v1619 = vrcp.pop %v1608
          %v1620 = vmul.f32 %v1589, %v1619
          %v1621 = vrcp.pop %v1613
          %v1622 = vmul.f32 %v1590, %v1621
          %v1623 = vcombine.low %v1616, %v1620
          %v1624 = vcombine.high %v1616, %v1620
          %v1626 = vunpack.c.l.s4 1983009808
          %v1627 = vunpack.c.0.s8 %v1626
          %v1628 = vlaneseq
          %v1629 = vshrl.u32 %v1628, 7
          %v1630 = vsub.s32 %v1627, %v1629
          %v1631 = vrot.slane %v1623, %v1630
          %v1633 = vunpack.c.l.s4 1983009808
          %v1634 = vunpack.c.0.s8 %v1633
          %v1635 = vlaneseq
          %v1636 = vshrl.u32 %v1635, 7
          %v1637 = vsub.s32 %v1634, %v1636
          %v1638 = vrot.slane %v1624, %v1637
          %v1639 = vcombine.low %v1618, %v1622
          %v1640 = vcombine.high %v1618, %v1622
          %v1642 = vunpack.c.l.s4 1983009808
          %v1643 = vunpack.c.0.s8 %v1642
          %v1644 = vlaneseq
          %v1645 = vshrl.u32 %v1644, 7
          %v1646 = vsub.s32 %v1643, %v1645
          %v1647 = vrot.slane %v1639, %v1646
          %v1649 = vunpack.c.l.s4 1983009808
          %v1650 = vunpack.c.0.s8 %v1649
          %v1651 = vlaneseq
          %v1652 = vshrl.u32 %v1651, 7
          %v1653 = vsub.s32 %v1650, %v1652
          %v1654 = vrot.slane %v1640, %v1653
          %v1655 = vcombine.low %v1631, %v1647
          %v1656 = vcombine.high %v1631, %v1647
          %v1658 = vunpack.c.l.s4 1934713408
          %v1659 = vunpack.c.0.s8 %v1658
          %v1660 = vlaneseq
          %v1661 = vshrl.u32 %v1660, 7
          %v1662 = vsub.s32 %v1659, %v1661
          %v1663 = vrot.slane %v1655, %v1662
          %v1665 = vunpack.c.l.s4 1934713408
          %v1666 = vunpack.c.0.s8 %v1665
          %v1667 = vlaneseq
          %v1668 = vshrl.u32 %v1667, 7
          %v1669 = vsub.s32 %v1666, %v1668
          %v1670 = vrot.slane %v1656, %v1669
          %v1671 = vcombine.low %v1638, %v1654
          %v1672 = vcombine.high %v1638, %v1654
          %v1674 = vunpack.c.l.s4 1934713408
          %v1675 = vunpack.c.0.s8 %v1674
          %v1676 = vlaneseq
          %v1677 = vshrl.u32 %v1676, 7
          %v1678 = vsub.s32 %v1675, %v1677
          %v1679 = vrot.slane %v1671, %v1678
          %v1681 = vunpack.c.l.s4 1934713408
          %v1682 = vunpack.c.0.s8 %v1681
          %v1683 = vlaneseq
          %v1684 = vshrl.u32 %v1683, 7
          %v1685 = vsub.s32 %v1682, %v1684
          %v1686 = vrot.slane %v1672, %v1685
          %v1687 = vcombine.high %v1663, 0.0
          %v1688 = vcombine.high %v1670, 0.0
          %v1689 = vcombine.high %v1679, 0.0
          %v1690 = vcombine.high %v1686, 0.0
          %v1691 = vcombine.low %v1663, %v1670
          %v1693 = vunpack.c.l.s4 1983009808
          %v1694 = vunpack.c.0.s8 %v1693
          %v1695 = vlaneseq
          %v1696 = vshrl.u32 %v1695, 7
          %v1697 = vsub.s32 %v1694, %v1696
          %v1698 = vrot.slane %v1691, %v1697
          %v1699 = vcombine.low %v1687, %v1688
          %v1701 = vunpack.c.l.s4 1983009808
          %v1702 = vunpack.c.0.s8 %v1701
          %v1703 = vlaneseq
          %v1704 = vshrl.u32 %v1703, 7
          %v1705 = vsub.s32 %v1702, %v1704
          %v1706 = vrot.slane %v1699, %v1705
          %v1707 = vcombine.low %v1679, %v1686
          %v1709 = vunpack.c.l.s4 1983009808
          %v1710 = vunpack.c.0.s8 %v1709
          %v1711 = vlaneseq
          %v1712 = vshrl.u32 %v1711, 7
          %v1713 = vsub.s32 %v1710, %v1712
          %v1714 = vrot.slane %v1707, %v1713
          %v1715 = vcombine.low %v1689, %v1690
          %v1717 = vunpack.c.l.s4 1983009808
          %v1718 = vunpack.c.0.s8 %v1717
          %v1719 = vlaneseq
          %v1720 = vshrl.u32 %v1719, 7
          %v1721 = vsub.s32 %v1718, %v1720
          %v1722 = vrot.slane %v1715, %v1721
          %v1723 = vcombine.low %v1698, %v1706
          %v1724 = vcombine.high %v1698, %v1706
          %v1726 = vunpack.c.l.s4 1934713408
          %v1727 = vunpack.c.0.s8 %v1726
          %v1728 = vlaneseq
          %v1729 = vshrl.u32 %v1728, 7
          %v1730 = vsub.s32 %v1727, %v1729
          %v1731 = vrot.slane %v1723, %v1730
          %v1733 = vunpack.c.l.s4 1934713408
          %v1734 = vunpack.c.0.s8 %v1733
          %v1735 = vlaneseq
          %v1736 = vshrl.u32 %v1735, 7
          %v1737 = vsub.s32 %v1734, %v1736
          %v1738 = vrot.slane %v1724, %v1737
          %v1739 = vcombine.low %v1714, %v1722
          %v1740 = vcombine.high %v1714, %v1722
          %v1742 = vunpack.c.l.s4 1934713408
          %v1743 = vunpack.c.0.s8 %v1742
          %v1744 = vlaneseq
          %v1745 = vshrl.u32 %v1744, 7
          %v1746 = vsub.s32 %v1743, %v1745
          %v1747 = vrot.slane %v1739, %v1746
          %v1749 = vunpack.c.l.s4 1934713408
          %v1750 = vunpack.c.0.s8 %v1749
          %v1751 = vlaneseq
          %v1752 = vshrl.u32 %v1751, 7
          %v1753 = vsub.s32 %v1750, %v1752
          %v1754 = vrot.slane %v1740, %v1753
          %v1755 = vcombine.low %v1731, %v1747
          %v1756 = vcombine.high %v1731, %v1747
          %v1757 = vcombine.low %v1738, %v1754
          %v1758 = vcombine.high %v1738, %v1754
          %1760 = vrot.lane.b32.xlu0 %v1756, 8
          %v1761 = vpop.permute.xlu0 %1760
          %1764 = vrot.lane.b32.xlu0 %v1757, 16
          %v1765 = vpop.permute.xlu0 %1764
          %1768 = vrot.lane.b32.xlu0 %v1758, 24
          %v1769 = vpop.permute.xlu0 %1768
          %v1771 = vsel %vm854, %v1755, %v1761
          %vm1772 = vcmask 130048
          %v1773 = vsel %vm1772, %v1771, %v1765
          %vm1774 = vcmask 195584
          %v1775 = vsel %vm1774, %v1773, %v1769
          %v1776 = vld [vmem:[#allocation13] sm:$0xff]
          %v1777 = vld [vmem:[#allocation13 + $0x8] sm:$0xff]
          %v1778 = vld [vmem:[#allocation13 + $0x10] sm:$0xff]
          %v1779 = vld [vmem:[#allocation13 + $0x18] sm:$0xff]
          %v1780 = vld [vmem:[%s4] sm:$0x1]
          %v1782 = vlaneseq
          %v1783 = vshrl.u32 %v1782, 7
          %v1784 = vsub.s32 0, %v1783
          %v1785 = vrot.slane %v1780, %v1784
          %vm1787 = vcmask 261120
          %v1789 = vsel %vm1787, %v1775, 0
          %1791 = vmatprep.subr.mxu0 0.0
          %1792 = vmatpush1.msra.mxu0 %v1776
          %1793 = vmatprep.subr.mxu0 0.0
          %1794 = vmatpush1.msra.mxu0 %v1777
          %1795 = vmatprep.subr.mxu0 0.0
          %1796 = vmatpush1.msra.mxu0 %v1778
          %1797 = vmatprep.subr.mxu0 0.0
          %1798 = vmatpush1.msra.mxu0 %v1779
          %1799 = vmatprep.subr.mxu0 0.0
          %1800 = vmatpush1.msra.mxu0 0.0
          %1801 = vmatprep.subr.mxu0 0.0
          %1802 = vmatpush1.msra.mxu0 0.0
          %1803 = vmatprep.subr.mxu0 0.0
          %1804 = vmatpush1.msra.mxu0 0.0
          %1805 = vmatprep.subr.mxu0 0.0
          %1806 = vmatpush1.msra.mxu0 0.0
          %1807 = vmatprep.subr.mxu0 0.0
          %1808 = vmatpush1.msra.mxu0 0.0
          %1809 = vmatprep.subr.mxu0 0.0
          %1810 = vmatpush1.msra.mxu0 0.0
          %1811 = vmatprep.subr.mxu0 0.0
          %1812 = vmatpush1.msra.mxu0 0.0
          %1813 = vmatprep.subr.mxu0 0.0
          %1814 = vmatpush1.msra.mxu0 0.0
          %1815 = vmatprep.subr.mxu0 0.0
          %1816 = vmatpush1.msra.mxu0 0.0
          %1817 = vmatprep.subr.mxu0 0.0
          %1818 = vmatpush1.msra.mxu0 0.0
          %1819 = vmatprep.subr.mxu0 0.0
          %1820 = vmatpush1.msra.mxu0 0.0
          %1821 = vmatprep.subr.mxu0 0.0
          %1822 = vmatpush1.msra.mxu0 0.0
          %1823 = vmatprep.subr.mxu0 0.0
          %1824 = vmatpush1.msra.mxu0 0.0
          %1825 = vmatprep.subr.mxu0 0.0
          %1826 = vmatpush1.msra.mxu0 0.0
          %1827 = vmatprep.subr.mxu0 0.0
          %1828 = vmatpush1.msra.mxu0 0.0
          %1829 = vmatprep.subr.mxu0 0.0
          %1830 = vmatpush1.msra.mxu0 0.0
          %1831 = vmatprep.subr.mxu0 0.0
          %1832 = vmatpush1.msra.mxu0 0.0
          %1833 = vmatprep.subr.mxu0 0.0
          %1834 = vmatpush1.msra.mxu0 0.0
          %1835 = vmatprep.subr.mxu0 0.0
          %1836 = vmatpush1.msra.mxu0 0.0
          %1837 = vmatprep.subr.mxu0 0.0
          %1838 = vmatpush1.msra.mxu0 0.0
          %1839 = vmatprep.subr.mxu0 0.0
          %1840 = vmatpush1.msra.mxu0 0.0
          %1841 = vmatprep.subr.mxu0 0.0
          %1842 = vmatpush1.msra.mxu0 0.0
          %1843 = vmatprep.subr.mxu0 0.0
          %1844 = vmatpush1.msra.mxu0 0.0
          %1845 = vmatprep.subr.mxu0 0.0
          %1846 = vmatpush1.msra.mxu0 0.0
          %1847 = vmatprep.subr.mxu0 0.0
          %1848 = vmatpush1.msra.mxu0 0.0
          %1849 = vmatprep.subr.mxu0 0.0
          %1850 = vmatpush1.msra.mxu0 0.0
          %1851 = vmatprep.subr.mxu0 0.0
          %1852 = vmatpush1.msra.mxu0 0.0
          %1853 = vmatprep.subr.mxu0 0.0
          %1854 = vmatpush1.msra.mxu0 0.0
          %1855 = vmatprep.mubr.f32.mxu0 0.0
          %1856 = vmatmul.mubr.f32.gmra.mrb[0].mxu0 %v1789
          %v1857 = vpop.f32.mrb[0].mxu0
          %v1858 = vadd.f32 %v1785, %v1857
          %v1859 = vpop.f32.mrb[0].mxu0
          %1860 = vdwg.mxu0
          %v1861 = vld [vmem:[%s246] sm:$0xff]
          %v1862 = vadd.f32 %v1861, %v1858
          %v1863 = vsel %vm1787, %v1862, 0.0
          %v1864 = vrot.slane %v1863, 4
          %v1865 = vadd.f32 %v1863, %v1864
          %v1866 = vrot.slane %v1865, 2
          %v1867 = vadd.f32 %v1865, %v1866
          %v1868 = vrot.slane %v1867, 1
          %v1869 = vadd.f32 %v1867, %v1868
          %v1870 = vrcp.pop 8.0
          %v1871 = vmul.f32 %v1869, %v1870
          %v1872 = vsub.f32 %v1862, %v1871
          %v1873 = vmul.f32 %v1872, %v1872
          %v1874 = vsel %vm1787, %v1873, 0.0
          %v1875 = vrot.slane %v1874, 4
          %v1876 = vadd.f32 %v1874, %v1875
          %v1877 = vrot.slane %v1876, 2
          %v1878 = vadd.f32 %v1876, %v1877
          %v1879 = vrot.slane %v1878, 1
          %v1880 = vadd.f32 %v1878, %v1879
          %v1881 = vmul.f32 %v1880, %v1870
          %v1882 = vadd.f32 %v1881, 1e-05
          %v1883 = vrsqrt.pop %v1882
          %v1884 = vmul.f32 %v1872, %v1883
          %v1885 = vmax.f32 %v1884, 0.0
          %1886 = vst.msk [vmem:[%s280] sm:$0xff] %vm1787, %v1885
        $region60: #{tpu_custom_call.1} parent=39 // pred_fallthru
          _
        %s1887 = sand.u32 %s153, 1
        %s1888 = scalar_lea.sflag [#allocation10], %s1887
        %s1889 = sand.u32 %s153, 1
        %s1890 = smul.addr %s1889, 8
        %s1891 = scalar_lea.vmem [#allocation14], %s1890
        // Predicated region
        $region61: #{tpu_custom_call.1} parent=39 // pred_check
          %p1892 = pneg %p163
        $region62: #{tpu_custom_call.1} parent=39 // pred_check_branch
          %1894 = sbr.rel (%p1892) target = $region64
        $region63: #{tpu_custom_call.1} parent=39 // pred_region
          %s1896 = ssub.s32 128, 128
          %1897 = vsyncadd %s1888, %s1896
          %s1898 = smul.addr %s27, 128
          %s1899 = scalar_lea.hbm %s5, %s1898
          %s1901 = sshll.u32 %s1891, 4
          %s1902 = int_to_ptr.vmem [resolvable:$true] %s1901
          %1904 = dma.vmem_to_hbm [thread:$0]  %s1902, 128, %s1899, %s1888
        $region64: #{tpu_custom_call.1} parent=39 // pred_fallthru
          _
      $region40: #{tpu_custom_call.1} parent=5 // pred_fallthru
        _
      %p1905 = scmp.le.s32.totalorder 2, %s18
      // Predicated region
      $region65: #{tpu_custom_call.1} parent=5 // pred_check
        %p1906 = pneg %p1905
      $region66: #{tpu_custom_call.1} parent=5 // pred_check_branch
        %1908 = sbr.rel (%p1906) target = $region68
      $region67: #{tpu_custom_call.1} parent=5 // pred_region
        %s1909 = ssub.s32 %s18, 2
        // Predicated region
        $region69: #{tpu_custom_call.1} parent=67 // pred_check
          %p1910 = pneg %p169
        $region70: #{tpu_custom_call.1} parent=67 // pred_check_branch
          %1912 = sbr.rel (%p1910) target = $region72
        $region71: #{tpu_custom_call.1} parent=67 // pred_region
          %s1913 = sand.u32 %s154, 1
          %s1914 = scalar_lea.sflag [#allocation10], %s1913
          %s1915 = sand.u32 %s154, 1
          %s1916 = smul.addr %s1915, 8
          %s1917 = scalar_lea.vmem [#allocation14], %s1916
          %1918 = dma.done %s1914, 128
        $region72: #{tpu_custom_call.1} parent=67 // pred_fallthru
          _
      $region68: #{tpu_custom_call.1} parent=5 // pred_fallthru
        _
    $region6: #{tpu_custom_call.1} parent=1 // loop_footer
      %s22 = sadd.s32 1, %s18
    $region7: #{tpu_custom_call.1} parent=1 // loop_footer_branch
      %17 = sbr.rel target = $region3
    $region8: #{tpu_custom_call.1} parent=1 // loop_exit
      _
    %1919 = vsyncpa [#allocation9], 1
    %s1920 = scalar_lea.sflag [#allocation9], 1
    %1921 = vsyncpa %s1920, 1
    %1922 = vsyncpa [#allocation12], 1
    %1923 = vsyncpa [#allocation10], 1
    %s1924 = scalar_lea.sflag [#allocation10], 1
    %1925 = vsyncpa %s1924, 1

</llo_original>
